<compile_context>
chip_gen: v5e
topology: v5e:2x2
jax: 0.10.0
libtpu: 0.0.40
codegen_flags: <defaults>
</compile_context>

<pallas_src>
import math
import functools

import numpy as np
import jax
import jax.numpy as jnp
from jax import lax
from jax.experimental import pallas as pl
from jax.experimental.pallas import tpu as pltpu

# ---------------- config (matches the PyTorch module's dummy config) ----------------
D_VOCAB = 64
D_MODEL = 32
N_CTX = 16
N_HEADS = 4
D_HEAD = 8
D_MLP = 64
N_LAYERS = 2
LN_EPS = 1e-5
INIT_RANGE = 0.02
IGNORE = -100000.0

BATCH = 2
SEQ = 8


# ---------------- kernel helpers ----------------
def _layernorm(x, w, b, eps):
    mean = jnp.mean(x, axis=-1, keepdims=True)
    xc = x - mean
    var = jnp.mean(xc * xc, axis=-1, keepdims=True)
    return xc * lax.rsqrt(var + eps) * w + b


# ---------------- single fused forward kernel ----------------
def transformer_kernel(tok_ref, mask_ref, pos_ref, we_ref,
                       wqkv_ref, bqkv_ref, wo_ref, vecd_ref,
                       win_ref, vec64_ref, wout_ref, wu_ref,
                       out_ref,
                       *, batch, seq, n_heads, d_head, n_layers):
    bs = batch * seq
    d_vocab, d_model = we_ref.shape

    # --- embedding via exact one-hot matmul (equivalent to the row gather W_E[tokens]) ---
    tok = tok_ref[...]                                        # (bs, 1) int32
    vocab_iota = lax.broadcasted_iota(jnp.int32, (bs, d_vocab), 1)
    onehot = jnp.where(vocab_iota == tok, 1.0, 0.0)           # (bs, d_vocab) f32
    resid = jnp.dot(onehot, we_ref[...],
                    preferred_element_type=jnp.float32) + pos_ref[...]

    # allowed[i, j] == 1.0  <=>  row i may attend to row j (same batch & causal)
    allowed = mask_ref[...] > 0.5                             # (bs, bs) bool

    for l in range(n_layers):
        # block(resid) = MLP(LN2(Attn(LN1(resid)))); only the outer residual add,
        # exactly as in the PyTorch Transformer.forward.
        x_ln = _layernorm(resid, vecd_ref[l * 6 + 0], vecd_ref[l * 6 + 1], LN_EPS)

        attn = jnp.zeros((bs, d_model), jnp.float32)
        for h in range(n_heads):
            iq = (l * 3 + 0) * n_heads + h
            ik = (l * 3 + 1) * n_heads + h
            iv = (l * 3 + 2) * n_heads + h
            # per-head projections: (bs, d_model) @ (d_model, d_head)
            # (Q weights/bias already carry the 1/sqrt(d_head) factor.)
            qh = jnp.dot(x_ln, wqkv_ref[iq],
                         preferred_element_type=jnp.float32) + bqkv_ref[iq]
            kh = jnp.dot(x_ln, wqkv_ref[ik],
                         preferred_element_type=jnp.float32) + bqkv_ref[ik]
            vh = jnp.dot(x_ln, wqkv_ref[iv],
                         preferred_element_type=jnp.float32) + bqkv_ref[iv]

            s = jnp.dot(qh, kh.T, preferred_element_type=jnp.float32)
            s = jnp.where(allowed, s, IGNORE)                 # set-style mask, like ref
            m = jnp.max(s, axis=-1, keepdims=True)
            e = jnp.exp(s - m)
            p = e / jnp.sum(e, axis=-1, keepdims=True)        # exact softmax
            zh = jnp.dot(p, vh, preferred_element_type=jnp.float32)
            # accumulate straight into the O projection (no head concatenate)
            attn = attn + jnp.dot(zh, wo_ref[l * n_heads + h],
                                  preferred_element_type=jnp.float32)

        o = attn + vecd_ref[l * 6 + 2]                        # + b_O

        o_ln = _layernorm(o, vecd_ref[l * 6 + 3], vecd_ref[l * 6 + 4], LN_EPS)
        pre = jnp.dot(o_ln, win_ref[l],
                      preferred_element_type=jnp.float32) + vec64_ref[l]
        mlp = jnp.dot(jnp.maximum(pre, 0.0), wout_ref[l],
                      preferred_element_type=jnp.float32) + vecd_ref[l * 6 + 5]

        resid = resid + mlp

    # --- unembed ---
    out_ref[...] = jnp.dot(resid, wu_ref[...],
                           preferred_element_type=jnp.float32) + vec64_ref[n_layers]


# ---------------- host-side helpers ----------------
@functools.lru_cache(maxsize=None)
def _allowed_mask(batch, seq):
    """1.0 where flattened row i may attend to row j (same batch element & causal)."""
    bs = batch * seq
    r = np.arange(bs)
    same_batch = (r[:, None] // seq) == (r[None, :] // seq)
    causal = r[None, :] <= r[:, None]
    return jnp.asarray((same_batch & causal).astype(np.float32))


# ---------------- parameter construction (mirrors the PyTorch init) ----------------
def init_params(key):
    def normal(key, shape):
        return INIT_RANGE * jax.random.normal(key, shape, dtype=jnp.float32)

    keys = iter(jax.random.split(key, 64))
    params = {
        "W_E": normal(next(keys), (D_VOCAB, D_MODEL)),
        "W_pos": jnp.zeros((N_CTX, D_MODEL), jnp.float32),   # PyTorch init: zeros
        "W_U": normal(next(keys), (D_MODEL, D_VOCAB)),
        "b_U": jnp.zeros((D_VOCAB,), jnp.float32),
        "blocks": [],
    }
    for _ in range(N_LAYERS):
        blk = {
            "ln1_w": normal(next(keys), (D_MODEL,)),
            "ln1_b": jnp.zeros((D_MODEL,), jnp.float32),
            "W_Q": normal(next(keys), (N_HEADS, D_MODEL, D_HEAD)),
            "b_Q": jnp.zeros((N_HEADS, D_HEAD), jnp.float32),
            "W_K": normal(next(keys), (N_HEADS, D_MODEL, D_HEAD)),
            "b_K": jnp.zeros((N_HEADS, D_HEAD), jnp.float32),
            "W_V": normal(next(keys), (N_HEADS, D_MODEL, D_HEAD)),
            "b_V": jnp.zeros((N_HEADS, D_HEAD), jnp.float32),
            "W_O": normal(next(keys), (N_HEADS, D_HEAD, D_MODEL)),
            "b_O": jnp.zeros((D_MODEL,), jnp.float32),
            "ln2_w": normal(next(keys), (D_MODEL,)),
            "ln2_b": jnp.zeros((D_MODEL,), jnp.float32),
            "W_in": normal(next(keys), (D_MODEL, D_MLP)),
            "b_in": jnp.zeros((D_MLP,), jnp.float32),
            "W_out": normal(next(keys), (D_MLP, D_MODEL)),
            "b_out": jnp.zeros((D_MODEL,), jnp.float32),
        }
        params["blocks"].append(blk)
    return params


def pack_params(params):
    """Host-side packing: fold constants and consolidate the many tiny per-layer
    parameters into a few contiguous arrays (fewer, larger operand DMAs)."""
    blocks = params["blocks"]
    scale = 1.0 / math.sqrt(D_HEAD)
    assert D_MLP == D_VOCAB, "vec64 packing assumes d_mlp == d_vocab"

    wqkv_rows, bqkv_rows, wo_rows, vecd_rows = [], [], [], []
    win_rows, wout_rows, vec64_rows = [], [], []
    for blk in blocks:
        # per-head Q/K/V weights & biases; 1/sqrt(d_head) folded into Q only.
        for wname, bname, s in (("W_Q", "b_Q", scale),
                                ("W_K", "b_K", 1.0),
                                ("W_V", "b_V", 1.0)):
            for h in range(N_HEADS):
                wqkv_rows.append(blk[wname][h] * s)                     # (d_model, d_head)
        for wname, bname, s in (("W_Q", "b_Q", scale),
                                ("W_K", "b_K", 1.0),
                                ("W_V", "b_V", 1.0)):
            for h in range(N_HEADS):
                bqkv_rows.append((blk[bname][h] * s).reshape(1, D_HEAD))
        for h in range(N_HEADS):
            wo_rows.append(blk["W_O"][h])                               # (d_head, d_model)
        for name in ("ln1_w", "ln1_b", "b_O", "ln2_w", "ln2_b", "b_out"):
            vecd_rows.append(blk[name].reshape(1, D_MODEL))
        win_rows.append(blk["W_in"])
        wout_rows.append(blk["W_out"])
        vec64_rows.append(blk["b_in"].reshape(1, D_MLP))
    vec64_rows.append(params["b_U"].reshape(1, D_VOCAB))

    return {
        "W_E": params["W_E"],              # (d_vocab, d_model)
        "W_pos": params["W_pos"],          # (n_ctx, d_model) — tiled host-side per call
        "wqkv": jnp.stack(wqkv_rows),      # (L*3*H, d_model, d_head)
        "bqkv": jnp.stack(bqkv_rows),      # (L*3*H, 1, d_head)
        "wo": jnp.stack(wo_rows),          # (L*H, d_head, d_model)
        "vecd": jnp.stack(vecd_rows),      # (L*6, 1, d_model)
        "win": jnp.stack(win_rows),        # (L, d_model, d_mlp)
        "wout": jnp.stack(wout_rows),      # (L, d_mlp, d_model)
        "vec64": jnp.stack(vec64_rows),    # (L+1, 1, d_mlp)  [b_in per layer; last = b_U]
        "W_U": params["W_U"],              # (d_model, d_vocab)
    }


# ---------------- full forward: one fused, grid-free pallas_call ----------------
def transformer_forward(tokens, fused):
    B, S = tokens.shape
    n_layers = fused["win"].shape[0]
    tok_flat = tokens.reshape(B * S, 1).astype(jnp.int32)
    mask = _allowed_mask(B, S)
    # batch-tiled positional embedding computed outside the kernel (tiny XLA op).
    pos_flat = jnp.tile(fused["W_pos"][:S, :], (B, 1))        # (B*S, d_model)

    kernel = functools.partial(
        transformer_kernel, batch=B, seq=S,
        n_heads=N_HEADS, d_head=D_HEAD, n_layers=n_layers)

    vmem = pl.BlockSpec(memory_space=pltpu.MemorySpace.VMEM)
    # No grid: every operand (< ~1 MiB total incl. tile padding) lives whole in VMEM.
    logits_flat = pl.pallas_call(
        kernel,
        out_shape=jax.ShapeDtypeStruct((B * S, D_VOCAB), jnp.float32),
        in_specs=[vmem] * 12,
        out_specs=vmem,
    )(tok_flat, mask, pos_flat, fused["W_E"],
      fused["wqkv"], fused["bqkv"], fused["wo"], fused["vecd"],
      fused["win"], fused["vec64"], fused["wout"], fused["W_U"])
    return logits_flat.reshape(B, S, D_VOCAB)


# ---------------- pure-JAX reference (mirrors the PyTorch spec) ----------------
def reference_forward(tokens, params):
    def ln(x, w, b):
        m = jnp.mean(x, -1, keepdims=True)
        xc = x - m
        v = jnp.mean(xc * xc, -1, keepdims=True)
        return xc / jnp.sqrt(v + LN_EPS) * w + b

    resid = params["W_E"][tokens] + params["W_pos"][: tokens.shape[1]][None]
    for blk in params["blocks"]:
        x_ln = ln(resid, blk["ln1_w"], blk["ln1_b"])
        q = jnp.einsum("bpd,hde->bphe", x_ln, blk["W_Q"]) + blk["b_Q"]
        k = jnp.einsum("bpd,hde->bphe", x_ln, blk["W_K"]) + blk["b_K"]
        v = jnp.einsum("bpd,hde->bphe", x_ln, blk["W_V"]) + blk["b_V"]
        scores = jnp.einsum("bqhe,bkhe->bhqk", q, k) / math.sqrt(D_HEAD)
        S = scores.shape[-1]
        causal = jnp.triu(jnp.ones((S, S), bool), 1)
        scores = jnp.where(causal, IGNORE, scores)
        pattern = jax.nn.softmax(scores, -1)
        z = jnp.einsum("bhqk,bkhe->bqhe", pattern, v)
        o = jnp.einsum("bqhe,hed->bqd", z, blk["W_O"]) + blk["b_O"]
        o_ln = ln(o, blk["ln2_w"], blk["ln2_b"])
        mlp = jnp.maximum(o_ln @ blk["W_in"] + blk["b_in"], 0.0) @ blk["W_out"] + blk["b_out"]
        resid = resid + mlp          # only the outer residual add, per the PyTorch module
    return resid @ params["W_U"] + params["b_U"]


if __name__ == "__main__":
    key = jax.random.PRNGKey(0)
    pkey, tkey = jax.random.split(key)
    params = init_params(pkey)
    fused = pack_params(params)
    tokens = jax.random.randint(tkey, (BATCH, SEQ), 0, D_VOCAB, dtype=jnp.int32)

    fwd = jax.jit(transformer_forward)
    logits = jax.block_until_ready(fwd(tokens, fused))

    assert logits.shape == (BATCH, SEQ, D_VOCAB)
    assert not bool(jnp.isnan(logits).any())

    ref = reference_forward(tokens, params)
    assert bool(jnp.allclose(logits, ref, atol=1e-3, rtol=1e-3)), \
        float(jnp.max(jnp.abs(logits - ref)))

    print("KERNEL_OK")
</pallas_src>

<mosaic_0001>
module attributes {stable_mosaic.version = 11 : i64} {
  func.func @transformer_kernel(%arg0: memref<16x1xi32, #tpu.memory_space<vmem>>, %arg1: memref<16x16xf32, #tpu.memory_space<vmem>>, %arg2: memref<16x32xf32, #tpu.memory_space<vmem>>, %arg3: memref<64x32xf32, #tpu.memory_space<vmem>>, %arg4: memref<24x32x8xf32, #tpu.memory_space<vmem>>, %arg5: memref<24x1x8xf32, #tpu.memory_space<vmem>>, %arg6: memref<8x8x32xf32, #tpu.memory_space<vmem>>, %arg7: memref<12x1x32xf32, #tpu.memory_space<vmem>>, %arg8: memref<2x32x64xf32, #tpu.memory_space<vmem>>, %arg9: memref<3x1x64xf32, #tpu.memory_space<vmem>>, %arg10: memref<2x64x32xf32, #tpu.memory_space<vmem>>, %arg11: memref<32x64xf32, #tpu.memory_space<vmem>>, %arg12: memref<16x64xf32, #tpu.memory_space<vmem>>) attributes {dimension_semantics = [], scalar_prefetch = 0 : i64, scratch_operands = 0 : i64, tpu.core_type = #tpu.core_type<tc>} {
    %c0 = arith.constant 0 : index
    %c0_0 = arith.constant 0 : index
    %0 = vector.load %arg0[%c0, %c0_0] : memref<16x1xi32, #tpu.memory_space<vmem>>, vector<16x1xi32>
    %1 = tpu.iota {dimensions = array<i32: 1>} : vector<16x64xi32>
    %2 = vector.broadcast %0 : vector<16x1xi32> to vector<16x64xi32>
    %3 = arith.cmpi eq, %1, %2 : vector<16x64xi32>
    %cst = arith.constant 1.000000e+00 : f32
    %cst_1 = arith.constant 0.000000e+00 : f32
    %4 = vector.broadcast %cst : f32 to vector<16x64xf32>
    %5 = vector.broadcast %cst_1 : f32 to vector<16x64xf32>
    %6 = arith.select %3, %4, %5 : vector<16x64xi1>, vector<16x64xf32>
    %c0_2 = arith.constant 0 : index
    %c0_3 = arith.constant 0 : index
    %7 = vector.load %arg3[%c0_2, %c0_3] : memref<64x32xf32, #tpu.memory_space<vmem>>, vector<64x32xf32>
    %cst_4 = arith.constant dense<0.000000e+00> : vector<16x32xf32>
    %8 = tpu.matmul %6, %7, %cst_4 {dimension_numbers = #tpu.dot_dimension_numbers<[1], [0], [0], [1], [0, 0, 1, 1], [], []>} : vector<16x64xf32>, vector<64x32xf32>, vector<16x32xf32> -> vector<16x32xf32>
    %c0_5 = arith.constant 0 : index
    %c0_6 = arith.constant 0 : index
    %9 = vector.load %arg2[%c0_5, %c0_6] : memref<16x32xf32, #tpu.memory_space<vmem>>, vector<16x32xf32>
    %10 = arith.addf %8, %9 : vector<16x32xf32>
    %c0_7 = arith.constant 0 : index
    %c0_8 = arith.constant 0 : index
    %11 = vector.load %arg1[%c0_7, %c0_8] : memref<16x16xf32, #tpu.memory_space<vmem>>, vector<16x16xf32>
    %cst_9 = arith.constant 5.000000e-01 : f32
    %12 = vector.broadcast %cst_9 : f32 to vector<16x16xf32>
    %13 = arith.cmpf ogt, %11, %12 : vector<16x16xf32>
    %c0_10 = arith.constant 0 : index
    %c0_11 = arith.constant 0 : index
    %c0_12 = arith.constant 0 : index
    %14 = vector.load %arg7[%c0_10, %c0_11, %c0_12] : memref<12x1x32xf32, #tpu.memory_space<vmem>>, vector<1x1x32xf32>
    %15 = vector.shape_cast %14 : vector<1x1x32xf32> to vector<1x32xf32>
    %c1 = arith.constant 1 : index
    %c0_13 = arith.constant 0 : index
    %c0_14 = arith.constant 0 : index
    %16 = vector.load %arg7[%c1, %c0_13, %c0_14] : memref<12x1x32xf32, #tpu.memory_space<vmem>>, vector<1x1x32xf32>
    %17 = vector.shape_cast %16 : vector<1x1x32xf32> to vector<1x32xf32>
    %cst_15 = arith.constant dense<0.000000e+00> : vector<16xf32>
    %18 = vector.multi_reduction <add>, %10, %cst_15 [1] : vector<16x32xf32> to vector<16xf32>
    %19 = vector.shape_cast %18 : vector<16xf32> to vector<16x1xf32>
    %cst_16 = arith.constant 3.200000e+01 : f32
    %20 = vector.broadcast %cst_16 : f32 to vector<16x1xf32>
    %21 = arith.divf %19, %20 : vector<16x1xf32>
    %22 = vector.broadcast %21 : vector<16x1xf32> to vector<16x32xf32>
    %23 = arith.subf %10, %22 : vector<16x32xf32>
    %24 = arith.mulf %23, %23 : vector<16x32xf32>
    %cst_17 = arith.constant dense<0.000000e+00> : vector<16xf32>
    %25 = vector.multi_reduction <add>, %24, %cst_17 [1] : vector<16x32xf32> to vector<16xf32>
    %26 = vector.shape_cast %25 : vector<16xf32> to vector<16x1xf32>
    %cst_18 = arith.constant 3.200000e+01 : f32
    %27 = vector.broadcast %cst_18 : f32 to vector<16x1xf32>
    %28 = arith.divf %26, %27 : vector<16x1xf32>
    %cst_19 = arith.constant 9.99999974E-6 : f32
    %29 = vector.broadcast %cst_19 : f32 to vector<16x1xf32>
    %30 = arith.addf %28, %29 : vector<16x1xf32>
    %31 = math.rsqrt %30 : vector<16x1xf32>
    %32 = vector.broadcast %31 : vector<16x1xf32> to vector<16x32xf32>
    %33 = arith.mulf %23, %32 : vector<16x32xf32>
    %34 = vector.broadcast %15 : vector<1x32xf32> to vector<16x32xf32>
    %35 = arith.mulf %33, %34 : vector<16x32xf32>
    %36 = vector.broadcast %17 : vector<1x32xf32> to vector<16x32xf32>
    %37 = arith.addf %35, %36 : vector<16x32xf32>
    %cst_20 = arith.constant 0.000000e+00 : f32
    %38 = vector.broadcast %cst_20 : f32 to vector<16x32xf32>
    %c0_21 = arith.constant 0 : index
    %c0_22 = arith.constant 0 : index
    %c0_23 = arith.constant 0 : index
    %39 = vector.load %arg4[%c0_21, %c0_22, %c0_23] : memref<24x32x8xf32, #tpu.memory_space<vmem>>, vector<1x32x8xf32>
    %40 = vector.shape_cast %39 : vector<1x32x8xf32> to vector<32x8xf32>
    %cst_24 = arith.constant dense<0.000000e+00> : vector<16x8xf32>
    %41 = tpu.matmul %37, %40, %cst_24 {dimension_numbers = #tpu.dot_dimension_numbers<[1], [0], [0], [1], [0, 0, 1, 1], [], []>} : vector<16x32xf32>, vector<32x8xf32>, vector<16x8xf32> -> vector<16x8xf32>
    %c0_25 = arith.constant 0 : index
    %c0_26 = arith.constant 0 : index
    %c0_27 = arith.constant 0 : index
    %42 = vector.load %arg5[%c0_25, %c0_26, %c0_27] : memref<24x1x8xf32, #tpu.memory_space<vmem>>, vector<1x1x8xf32>
    %43 = vector.shape_cast %42 : vector<1x1x8xf32> to vector<1x8xf32>
    %44 = vector.broadcast %43 : vector<1x8xf32> to vector<16x8xf32>
    %45 = arith.addf %41, %44 : vector<16x8xf32>
    %c4 = arith.constant 4 : index
    %c0_28 = arith.constant 0 : index
    %c0_29 = arith.constant 0 : index
    %46 = vector.load %arg4[%c4, %c0_28, %c0_29] : memref<24x32x8xf32, #tpu.memory_space<vmem>>, vector<1x32x8xf32>
    %47 = vector.shape_cast %46 : vector<1x32x8xf32> to vector<32x8xf32>
    %cst_30 = arith.constant dense<0.000000e+00> : vector<16x8xf32>
    %48 = tpu.matmul %37, %47, %cst_30 {dimension_numbers = #tpu.dot_dimension_numbers<[1], [0], [0], [1], [0, 0, 1, 1], [], []>} : vector<16x32xf32>, vector<32x8xf32>, vector<16x8xf32> -> vector<16x8xf32>
    %c4_31 = arith.constant 4 : index
    %c0_32 = arith.constant 0 : index
    %c0_33 = arith.constant 0 : index
    %49 = vector.load %arg5[%c4_31, %c0_32, %c0_33] : memref<24x1x8xf32, #tpu.memory_space<vmem>>, vector<1x1x8xf32>
    %50 = vector.shape_cast %49 : vector<1x1x8xf32> to vector<1x8xf32>
    %51 = vector.broadcast %50 : vector<1x8xf32> to vector<16x8xf32>
    %52 = arith.addf %48, %51 : vector<16x8xf32>
    %c8 = arith.constant 8 : index
    %c0_34 = arith.constant 0 : index
    %c0_35 = arith.constant 0 : index
    %53 = vector.load %arg4[%c8, %c0_34, %c0_35] : memref<24x32x8xf32, #tpu.memory_space<vmem>>, vector<1x32x8xf32>
    %54 = vector.shape_cast %53 : vector<1x32x8xf32> to vector<32x8xf32>
    %cst_36 = arith.constant dense<0.000000e+00> : vector<16x8xf32>
    %55 = tpu.matmul %37, %54, %cst_36 {dimension_numbers = #tpu.dot_dimension_numbers<[1], [0], [0], [1], [0, 0, 1, 1], [], []>} : vector<16x32xf32>, vector<32x8xf32>, vector<16x8xf32> -> vector<16x8xf32>
    %c8_37 = arith.constant 8 : index
    %c0_38 = arith.constant 0 : index
    %c0_39 = arith.constant 0 : index
    %56 = vector.load %arg5[%c8_37, %c0_38, %c0_39] : memref<24x1x8xf32, #tpu.memory_space<vmem>>, vector<1x1x8xf32>
    %57 = vector.shape_cast %56 : vector<1x1x8xf32> to vector<1x8xf32>
    %58 = vector.broadcast %57 : vector<1x8xf32> to vector<16x8xf32>
    %59 = arith.addf %55, %58 : vector<16x8xf32>
    %60 = tpu.transpose %52, [1, 0] : vector<16x8xf32> -> vector<8x16xf32>
    %cst_40 = arith.constant dense<0.000000e+00> : vector<16x16xf32>
    %61 = tpu.matmul %45, %60, %cst_40 {dimension_numbers = #tpu.dot_dimension_numbers<[1], [0], [0], [1], [0, 0, 1, 1], [], []>} : vector<16x8xf32>, vector<8x16xf32>, vector<16x16xf32> -> vector<16x16xf32>
    %cst_41 = arith.constant -1.000000e+05 : f32
    %62 = vector.broadcast %cst_41 : f32 to vector<16x16xf32>
    %63 = arith.select %13, %61, %62 : vector<16x16xi1>, vector<16x16xf32>
    %cst_42 = arith.constant dense<0xFF800000> : vector<16xf32>
    %64 = vector.multi_reduction <maximumf>, %63, %cst_42 [1] : vector<16x16xf32> to vector<16xf32>
    %65 = vector.shape_cast %64 : vector<16xf32> to vector<16x1xf32>
    %66 = vector.broadcast %65 : vector<16x1xf32> to vector<16x16xf32>
    %67 = arith.subf %63, %66 : vector<16x16xf32>
    %68 = math.exp %67 : vector<16x16xf32>
    %cst_43 = arith.constant dense<0.000000e+00> : vector<16xf32>
    %69 = vector.multi_reduction <add>, %68, %cst_43 [1] : vector<16x16xf32> to vector<16xf32>
    %70 = vector.shape_cast %69 : vector<16xf32> to vector<16x1xf32>
    %71 = vector.broadcast %70 : vector<16x1xf32> to vector<16x16xf32>
    %72 = arith.divf %68, %71 : vector<16x16xf32>
    %cst_44 = arith.constant dense<0.000000e+00> : vector<16x8xf32>
    %73 = tpu.matmul %72, %59, %cst_44 {dimension_numbers = #tpu.dot_dimension_numbers<[1], [0], [0], [1], [0, 0, 1, 1], [], []>} : vector<16x16xf32>, vector<16x8xf32>, vector<16x8xf32> -> vector<16x8xf32>
    %c0_45 = arith.constant 0 : index
    %c0_46 = arith.constant 0 : index
    %c0_47 = arith.constant 0 : index
    %74 = vector.load %arg6[%c0_45, %c0_46, %c0_47] : memref<8x8x32xf32, #tpu.memory_space<vmem>>, vector<1x8x32xf32>
    %75 = vector.shape_cast %74 : vector<1x8x32xf32> to vector<8x32xf32>
    %cst_48 = arith.constant dense<0.000000e+00> : vector<16x32xf32>
    %76 = tpu.matmul %73, %75, %cst_48 {dimension_numbers = #tpu.dot_dimension_numbers<[1], [0], [0], [1], [0, 0, 1, 1], [], []>} : vector<16x8xf32>, vector<8x32xf32>, vector<16x32xf32> -> vector<16x32xf32>
    %77 = arith.addf %38, %76 : vector<16x32xf32>
    %c1_49 = arith.constant 1 : index
    %c0_50 = arith.constant 0 : index
    %c0_51 = arith.constant 0 : index
    %78 = vector.load %arg4[%c1_49, %c0_50, %c0_51] : memref<24x32x8xf32, #tpu.memory_space<vmem>>, vector<1x32x8xf32>
    %79 = vector.shape_cast %78 : vector<1x32x8xf32> to vector<32x8xf32>
    %cst_52 = arith.constant dense<0.000000e+00> : vector<16x8xf32>
    %80 = tpu.matmul %37, %79, %cst_52 {dimension_numbers = #tpu.dot_dimension_numbers<[1], [0], [0], [1], [0, 0, 1, 1], [], []>} : vector<16x32xf32>, vector<32x8xf32>, vector<16x8xf32> -> vector<16x8xf32>
    %c1_53 = arith.constant 1 : index
    %c0_54 = arith.constant 0 : index
    %c0_55 = arith.constant 0 : index
    %81 = vector.load %arg5[%c1_53, %c0_54, %c0_55] : memref<24x1x8xf32, #tpu.memory_space<vmem>>, vector<1x1x8xf32>
    %82 = vector.shape_cast %81 : vector<1x1x8xf32> to vector<1x8xf32>
    %83 = vector.broadcast %82 : vector<1x8xf32> to vector<16x8xf32>
    %84 = arith.addf %80, %83 : vector<16x8xf32>
    %c5 = arith.constant 5 : index
    %c0_56 = arith.constant 0 : index
    %c0_57 = arith.constant 0 : index
    %85 = vector.load %arg4[%c5, %c0_56, %c0_57] : memref<24x32x8xf32, #tpu.memory_space<vmem>>, vector<1x32x8xf32>
    %86 = vector.shape_cast %85 : vector<1x32x8xf32> to vector<32x8xf32>
    %cst_58 = arith.constant dense<0.000000e+00> : vector<16x8xf32>
    %87 = tpu.matmul %37, %86, %cst_58 {dimension_numbers = #tpu.dot_dimension_numbers<[1], [0], [0], [1], [0, 0, 1, 1], [], []>} : vector<16x32xf32>, vector<32x8xf32>, vector<16x8xf32> -> vector<16x8xf32>
    %c5_59 = arith.constant 5 : index
    %c0_60 = arith.constant 0 : index
    %c0_61 = arith.constant 0 : index
    %88 = vector.load %arg5[%c5_59, %c0_60, %c0_61] : memref<24x1x8xf32, #tpu.memory_space<vmem>>, vector<1x1x8xf32>
    %89 = vector.shape_cast %88 : vector<1x1x8xf32> to vector<1x8xf32>
    %90 = vector.broadcast %89 : vector<1x8xf32> to vector<16x8xf32>
    %91 = arith.addf %87, %90 : vector<16x8xf32>
    %c9 = arith.constant 9 : index
    %c0_62 = arith.constant 0 : index
    %c0_63 = arith.constant 0 : index
    %92 = vector.load %arg4[%c9, %c0_62, %c0_63] : memref<24x32x8xf32, #tpu.memory_space<vmem>>, vector<1x32x8xf32>
    %93 = vector.shape_cast %92 : vector<1x32x8xf32> to vector<32x8xf32>
    %cst_64 = arith.constant dense<0.000000e+00> : vector<16x8xf32>
    %94 = tpu.matmul %37, %93, %cst_64 {dimension_numbers = #tpu.dot_dimension_numbers<[1], [0], [0], [1], [0, 0, 1, 1], [], []>} : vector<16x32xf32>, vector<32x8xf32>, vector<16x8xf32> -> vector<16x8xf32>
    %c9_65 = arith.constant 9 : index
    %c0_66 = arith.constant 0 : index
    %c0_67 = arith.constant 0 : index
    %95 = vector.load %arg5[%c9_65, %c0_66, %c0_67] : memref<24x1x8xf32, #tpu.memory_space<vmem>>, vector<1x1x8xf32>
    %96 = vector.shape_cast %95 : vector<1x1x8xf32> to vector<1x8xf32>
    %97 = vector.broadcast %96 : vector<1x8xf32> to vector<16x8xf32>
    %98 = arith.addf %94, %97 : vector<16x8xf32>
    %99 = tpu.transpose %91, [1, 0] : vector<16x8xf32> -> vector<8x16xf32>
    %cst_68 = arith.constant dense<0.000000e+00> : vector<16x16xf32>
    %100 = tpu.matmul %84, %99, %cst_68 {dimension_numbers = #tpu.dot_dimension_numbers<[1], [0], [0], [1], [0, 0, 1, 1], [], []>} : vector<16x8xf32>, vector<8x16xf32>, vector<16x16xf32> -> vector<16x16xf32>
    %cst_69 = arith.constant -1.000000e+05 : f32
    %101 = vector.broadcast %cst_69 : f32 to vector<16x16xf32>
    %102 = arith.select %13, %100, %101 : vector<16x16xi1>, vector<16x16xf32>
    %cst_70 = arith.constant dense<0xFF800000> : vector<16xf32>
    %103 = vector.multi_reduction <maximumf>, %102, %cst_70 [1] : vector<16x16xf32> to vector<16xf32>
    %104 = vector.shape_cast %103 : vector<16xf32> to vector<16x1xf32>
    %105 = vector.broadcast %104 : vector<16x1xf32> to vector<16x16xf32>
    %106 = arith.subf %102, %105 : vector<16x16xf32>
    %107 = math.exp %106 : vector<16x16xf32>
    %cst_71 = arith.constant dense<0.000000e+00> : vector<16xf32>
    %108 = vector.multi_reduction <add>, %107, %cst_71 [1] : vector<16x16xf32> to vector<16xf32>
    %109 = vector.shape_cast %108 : vector<16xf32> to vector<16x1xf32>
    %110 = vector.broadcast %109 : vector<16x1xf32> to vector<16x16xf32>
    %111 = arith.divf %107, %110 : vector<16x16xf32>
    %cst_72 = arith.constant dense<0.000000e+00> : vector<16x8xf32>
    %112 = tpu.matmul %111, %98, %cst_72 {dimension_numbers = #tpu.dot_dimension_numbers<[1], [0], [0], [1], [0, 0, 1, 1], [], []>} : vector<16x16xf32>, vector<16x8xf32>, vector<16x8xf32> -> vector<16x8xf32>
    %c1_73 = arith.constant 1 : index
    %c0_74 = arith.constant 0 : index
    %c0_75 = arith.constant 0 : index
    %113 = vector.load %arg6[%c1_73, %c0_74, %c0_75] : memref<8x8x32xf32, #tpu.memory_space<vmem>>, vector<1x8x32xf32>
    %114 = vector.shape_cast %113 : vector<1x8x32xf32> to vector<8x32xf32>
    %cst_76 = arith.constant dense<0.000000e+00> : vector<16x32xf32>
    %115 = tpu.matmul %112, %114, %cst_76 {dimension_numbers = #tpu.dot_dimension_numbers<[1], [0], [0], [1], [0, 0, 1, 1], [], []>} : vector<16x8xf32>, vector<8x32xf32>, vector<16x32xf32> -> vector<16x32xf32>
    %116 = arith.addf %77, %115 : vector<16x32xf32>
    %c2 = arith.constant 2 : index
    %c0_77 = arith.constant 0 : index
    %c0_78 = arith.constant 0 : index
    %117 = vector.load %arg4[%c2, %c0_77, %c0_78] : memref<24x32x8xf32, #tpu.memory_space<vmem>>, vector<1x32x8xf32>
    %118 = vector.shape_cast %117 : vector<1x32x8xf32> to vector<32x8xf32>
    %cst_79 = arith.constant dense<0.000000e+00> : vector<16x8xf32>
    %119 = tpu.matmul %37, %118, %cst_79 {dimension_numbers = #tpu.dot_dimension_numbers<[1], [0], [0], [1], [0, 0, 1, 1], [], []>} : vector<16x32xf32>, vector<32x8xf32>, vector<16x8xf32> -> vector<16x8xf32>
    %c2_80 = arith.constant 2 : index
    %c0_81 = arith.constant 0 : index
    %c0_82 = arith.constant 0 : index
    %120 = vector.load %arg5[%c2_80, %c0_81, %c0_82] : memref<24x1x8xf32, #tpu.memory_space<vmem>>, vector<1x1x8xf32>
    %121 = vector.shape_cast %120 : vector<1x1x8xf32> to vector<1x8xf32>
    %122 = vector.broadcast %121 : vector<1x8xf32> to vector<16x8xf32>
    %123 = arith.addf %119, %122 : vector<16x8xf32>
    %c6 = arith.constant 6 : index
    %c0_83 = arith.constant 0 : index
    %c0_84 = arith.constant 0 : index
    %124 = vector.load %arg4[%c6, %c0_83, %c0_84] : memref<24x32x8xf32, #tpu.memory_space<vmem>>, vector<1x32x8xf32>
    %125 = vector.shape_cast %124 : vector<1x32x8xf32> to vector<32x8xf32>
    %cst_85 = arith.constant dense<0.000000e+00> : vector<16x8xf32>
    %126 = tpu.matmul %37, %125, %cst_85 {dimension_numbers = #tpu.dot_dimension_numbers<[1], [0], [0], [1], [0, 0, 1, 1], [], []>} : vector<16x32xf32>, vector<32x8xf32>, vector<16x8xf32> -> vector<16x8xf32>
    %c6_86 = arith.constant 6 : index
    %c0_87 = arith.constant 0 : index
    %c0_88 = arith.constant 0 : index
    %127 = vector.load %arg5[%c6_86, %c0_87, %c0_88] : memref<24x1x8xf32, #tpu.memory_space<vmem>>, vector<1x1x8xf32>
    %128 = vector.shape_cast %127 : vector<1x1x8xf32> to vector<1x8xf32>
    %129 = vector.broadcast %128 : vector<1x8xf32> to vector<16x8xf32>
    %130 = arith.addf %126, %129 : vector<16x8xf32>
    %c10 = arith.constant 10 : index
    %c0_89 = arith.constant 0 : index
    %c0_90 = arith.constant 0 : index
    %131 = vector.load %arg4[%c10, %c0_89, %c0_90] : memref<24x32x8xf32, #tpu.memory_space<vmem>>, vector<1x32x8xf32>
    %132 = vector.shape_cast %131 : vector<1x32x8xf32> to vector<32x8xf32>
    %cst_91 = arith.constant dense<0.000000e+00> : vector<16x8xf32>
    %133 = tpu.matmul %37, %132, %cst_91 {dimension_numbers = #tpu.dot_dimension_numbers<[1], [0], [0], [1], [0, 0, 1, 1], [], []>} : vector<16x32xf32>, vector<32x8xf32>, vector<16x8xf32> -> vector<16x8xf32>
    %c10_92 = arith.constant 10 : index
    %c0_93 = arith.constant 0 : index
    %c0_94 = arith.constant 0 : index
    %134 = vector.load %arg5[%c10_92, %c0_93, %c0_94] : memref<24x1x8xf32, #tpu.memory_space<vmem>>, vector<1x1x8xf32>
    %135 = vector.shape_cast %134 : vector<1x1x8xf32> to vector<1x8xf32>
    %136 = vector.broadcast %135 : vector<1x8xf32> to vector<16x8xf32>
    %137 = arith.addf %133, %136 : vector<16x8xf32>
    %138 = tpu.transpose %130, [1, 0] : vector<16x8xf32> -> vector<8x16xf32>
    %cst_95 = arith.constant dense<0.000000e+00> : vector<16x16xf32>
    %139 = tpu.matmul %123, %138, %cst_95 {dimension_numbers = #tpu.dot_dimension_numbers<[1], [0], [0], [1], [0, 0, 1, 1], [], []>} : vector<16x8xf32>, vector<8x16xf32>, vector<16x16xf32> -> vector<16x16xf32>
    %cst_96 = arith.constant -1.000000e+05 : f32
    %140 = vector.broadcast %cst_96 : f32 to vector<16x16xf32>
    %141 = arith.select %13, %139, %140 : vector<16x16xi1>, vector<16x16xf32>
    %cst_97 = arith.constant dense<0xFF800000> : vector<16xf32>
    %142 = vector.multi_reduction <maximumf>, %141, %cst_97 [1] : vector<16x16xf32> to vector<16xf32>
    %143 = vector.shape_cast %142 : vector<16xf32> to vector<16x1xf32>
    %144 = vector.broadcast %143 : vector<16x1xf32> to vector<16x16xf32>
    %145 = arith.subf %141, %144 : vector<16x16xf32>
    %146 = math.exp %145 : vector<16x16xf32>
    %cst_98 = arith.constant dense<0.000000e+00> : vector<16xf32>
    %147 = vector.multi_reduction <add>, %146, %cst_98 [1] : vector<16x16xf32> to vector<16xf32>
    %148 = vector.shape_cast %147 : vector<16xf32> to vector<16x1xf32>
    %149 = vector.broadcast %148 : vector<16x1xf32> to vector<16x16xf32>
    %150 = arith.divf %146, %149 : vector<16x16xf32>
    %cst_99 = arith.constant dense<0.000000e+00> : vector<16x8xf32>
    %151 = tpu.matmul %150, %137, %cst_99 {dimension_numbers = #tpu.dot_dimension_numbers<[1], [0], [0], [1], [0, 0, 1, 1], [], []>} : vector<16x16xf32>, vector<16x8xf32>, vector<16x8xf32> -> vector<16x8xf32>
    %c2_100 = arith.constant 2 : index
    %c0_101 = arith.constant 0 : index
    %c0_102 = arith.constant 0 : index
    %152 = vector.load %arg6[%c2_100, %c0_101, %c0_102] : memref<8x8x32xf32, #tpu.memory_space<vmem>>, vector<1x8x32xf32>
    %153 = vector.shape_cast %152 : vector<1x8x32xf32> to vector<8x32xf32>
    %cst_103 = arith.constant dense<0.000000e+00> : vector<16x32xf32>
    %154 = tpu.matmul %151, %153, %cst_103 {dimension_numbers = #tpu.dot_dimension_numbers<[1], [0], [0], [1], [0, 0, 1, 1], [], []>} : vector<16x8xf32>, vector<8x32xf32>, vector<16x32xf32> -> vector<16x32xf32>
    %155 = arith.addf %116, %154 : vector<16x32xf32>
    %c3 = arith.constant 3 : index
    %c0_104 = arith.constant 0 : index
    %c0_105 = arith.constant 0 : index
    %156 = vector.load %arg4[%c3, %c0_104, %c0_105] : memref<24x32x8xf32, #tpu.memory_space<vmem>>, vector<1x32x8xf32>
    %157 = vector.shape_cast %156 : vector<1x32x8xf32> to vector<32x8xf32>
    %cst_106 = arith.constant dense<0.000000e+00> : vector<16x8xf32>
    %158 = tpu.matmul %37, %157, %cst_106 {dimension_numbers = #tpu.dot_dimension_numbers<[1], [0], [0], [1], [0, 0, 1, 1], [], []>} : vector<16x32xf32>, vector<32x8xf32>, vector<16x8xf32> -> vector<16x8xf32>
    %c3_107 = arith.constant 3 : index
    %c0_108 = arith.constant 0 : index
    %c0_109 = arith.constant 0 : index
    %159 = vector.load %arg5[%c3_107, %c0_108, %c0_109] : memref<24x1x8xf32, #tpu.memory_space<vmem>>, vector<1x1x8xf32>
    %160 = vector.shape_cast %159 : vector<1x1x8xf32> to vector<1x8xf32>
    %161 = vector.broadcast %160 : vector<1x8xf32> to vector<16x8xf32>
    %162 = arith.addf %158, %161 : vector<16x8xf32>
    %c7 = arith.constant 7 : index
    %c0_110 = arith.constant 0 : index
    %c0_111 = arith.constant 0 : index
    %163 = vector.load %arg4[%c7, %c0_110, %c0_111] : memref<24x32x8xf32, #tpu.memory_space<vmem>>, vector<1x32x8xf32>
    %164 = vector.shape_cast %163 : vector<1x32x8xf32> to vector<32x8xf32>
    %cst_112 = arith.constant dense<0.000000e+00> : vector<16x8xf32>
    %165 = tpu.matmul %37, %164, %cst_112 {dimension_numbers = #tpu.dot_dimension_numbers<[1], [0], [0], [1], [0, 0, 1, 1], [], []>} : vector<16x32xf32>, vector<32x8xf32>, vector<16x8xf32> -> vector<16x8xf32>
    %c7_113 = arith.constant 7 : index
    %c0_114 = arith.constant 0 : index
    %c0_115 = arith.constant 0 : index
    %166 = vector.load %arg5[%c7_113, %c0_114, %c0_115] : memref<24x1x8xf32, #tpu.memory_space<vmem>>, vector<1x1x8xf32>
    %167 = vector.shape_cast %166 : vector<1x1x8xf32> to vector<1x8xf32>
    %168 = vector.broadcast %167 : vector<1x8xf32> to vector<16x8xf32>
    %169 = arith.addf %165, %168 : vector<16x8xf32>
    %c11 = arith.constant 11 : index
    %c0_116 = arith.constant 0 : index
    %c0_117 = arith.constant 0 : index
    %170 = vector.load %arg4[%c11, %c0_116, %c0_117] : memref<24x32x8xf32, #tpu.memory_space<vmem>>, vector<1x32x8xf32>
    %171 = vector.shape_cast %170 : vector<1x32x8xf32> to vector<32x8xf32>
    %cst_118 = arith.constant dense<0.000000e+00> : vector<16x8xf32>
    %172 = tpu.matmul %37, %171, %cst_118 {dimension_numbers = #tpu.dot_dimension_numbers<[1], [0], [0], [1], [0, 0, 1, 1], [], []>} : vector<16x32xf32>, vector<32x8xf32>, vector<16x8xf32> -> vector<16x8xf32>
    %c11_119 = arith.constant 11 : index
    %c0_120 = arith.constant 0 : index
    %c0_121 = arith.constant 0 : index
    %173 = vector.load %arg5[%c11_119, %c0_120, %c0_121] : memref<24x1x8xf32, #tpu.memory_space<vmem>>, vector<1x1x8xf32>
    %174 = vector.shape_cast %173 : vector<1x1x8xf32> to vector<1x8xf32>
    %175 = vector.broadcast %174 : vector<1x8xf32> to vector<16x8xf32>
    %176 = arith.addf %172, %175 : vector<16x8xf32>
    %177 = tpu.transpose %169, [1, 0] : vector<16x8xf32> -> vector<8x16xf32>
    %cst_122 = arith.constant dense<0.000000e+00> : vector<16x16xf32>
    %178 = tpu.matmul %162, %177, %cst_122 {dimension_numbers = #tpu.dot_dimension_numbers<[1], [0], [0], [1], [0, 0, 1, 1], [], []>} : vector<16x8xf32>, vector<8x16xf32>, vector<16x16xf32> -> vector<16x16xf32>
    %cst_123 = arith.constant -1.000000e+05 : f32
    %179 = vector.broadcast %cst_123 : f32 to vector<16x16xf32>
    %180 = arith.select %13, %178, %179 : vector<16x16xi1>, vector<16x16xf32>
    %cst_124 = arith.constant dense<0xFF800000> : vector<16xf32>
    %181 = vector.multi_reduction <maximumf>, %180, %cst_124 [1] : vector<16x16xf32> to vector<16xf32>
    %182 = vector.shape_cast %181 : vector<16xf32> to vector<16x1xf32>
    %183 = vector.broadcast %182 : vector<16x1xf32> to vector<16x16xf32>
    %184 = arith.subf %180, %183 : vector<16x16xf32>
    %185 = math.exp %184 : vector<16x16xf32>
    %cst_125 = arith.constant dense<0.000000e+00> : vector<16xf32>
    %186 = vector.multi_reduction <add>, %185, %cst_125 [1] : vector<16x16xf32> to vector<16xf32>
    %187 = vector.shape_cast %186 : vector<16xf32> to vector<16x1xf32>
    %188 = vector.broadcast %187 : vector<16x1xf32> to vector<16x16xf32>
    %189 = arith.divf %185, %188 : vector<16x16xf32>
    %cst_126 = arith.constant dense<0.000000e+00> : vector<16x8xf32>
    %190 = tpu.matmul %189, %176, %cst_126 {dimension_numbers = #tpu.dot_dimension_numbers<[1], [0], [0], [1], [0, 0, 1, 1], [], []>} : vector<16x16xf32>, vector<16x8xf32>, vector<16x8xf32> -> vector<16x8xf32>
    %c3_127 = arith.constant 3 : index
    %c0_128 = arith.constant 0 : index
    %c0_129 = arith.constant 0 : index
    %191 = vector.load %arg6[%c3_127, %c0_128, %c0_129] : memref<8x8x32xf32, #tpu.memory_space<vmem>>, vector<1x8x32xf32>
    %192 = vector.shape_cast %191 : vector<1x8x32xf32> to vector<8x32xf32>
    %cst_130 = arith.constant dense<0.000000e+00> : vector<16x32xf32>
    %193 = tpu.matmul %190, %192, %cst_130 {dimension_numbers = #tpu.dot_dimension_numbers<[1], [0], [0], [1], [0, 0, 1, 1], [], []>} : vector<16x8xf32>, vector<8x32xf32>, vector<16x32xf32> -> vector<16x32xf32>
    %194 = arith.addf %155, %193 : vector<16x32xf32>
    %c2_131 = arith.constant 2 : index
    %c0_132 = arith.constant 0 : index
    %c0_133 = arith.constant 0 : index
    %195 = vector.load %arg7[%c2_131, %c0_132, %c0_133] : memref<12x1x32xf32, #tpu.memory_space<vmem>>, vector<1x1x32xf32>
    %196 = vector.shape_cast %195 : vector<1x1x32xf32> to vector<1x32xf32>
    %197 = vector.broadcast %196 : vector<1x32xf32> to vector<16x32xf32>
    %198 = arith.addf %194, %197 : vector<16x32xf32>
    %c3_134 = arith.constant 3 : index
    %c0_135 = arith.constant 0 : index
    %c0_136 = arith.constant 0 : index
    %199 = vector.load %arg7[%c3_134, %c0_135, %c0_136] : memref<12x1x32xf32, #tpu.memory_space<vmem>>, vector<1x1x32xf32>
    %200 = vector.shape_cast %199 : vector<1x1x32xf32> to vector<1x32xf32>
    %c4_137 = arith.constant 4 : index
    %c0_138 = arith.constant 0 : index
    %c0_139 = arith.constant 0 : index
    %201 = vector.load %arg7[%c4_137, %c0_138, %c0_139] : memref<12x1x32xf32, #tpu.memory_space<vmem>>, vector<1x1x32xf32>
    %202 = vector.shape_cast %201 : vector<1x1x32xf32> to vector<1x32xf32>
    %cst_140 = arith.constant dense<0.000000e+00> : vector<16xf32>
    %203 = vector.multi_reduction <add>, %198, %cst_140 [1] : vector<16x32xf32> to vector<16xf32>
    %204 = vector.shape_cast %203 : vector<16xf32> to vector<16x1xf32>
    %cst_141 = arith.constant 3.200000e+01 : f32
    %205 = vector.broadcast %cst_141 : f32 to vector<16x1xf32>
    %206 = arith.divf %204, %205 : vector<16x1xf32>
    %207 = vector.broadcast %206 : vector<16x1xf32> to vector<16x32xf32>
    %208 = arith.subf %198, %207 : vector<16x32xf32>
    %209 = arith.mulf %208, %208 : vector<16x32xf32>
    %cst_142 = arith.constant dense<0.000000e+00> : vector<16xf32>
    %210 = vector.multi_reduction <add>, %209, %cst_142 [1] : vector<16x32xf32> to vector<16xf32>
    %211 = vector.shape_cast %210 : vector<16xf32> to vector<16x1xf32>
    %cst_143 = arith.constant 3.200000e+01 : f32
    %212 = vector.broadcast %cst_143 : f32 to vector<16x1xf32>
    %213 = arith.divf %211, %212 : vector<16x1xf32>
    %cst_144 = arith.constant 9.99999974E-6 : f32
    %214 = vector.broadcast %cst_144 : f32 to vector<16x1xf32>
    %215 = arith.addf %213, %214 : vector<16x1xf32>
    %216 = math.rsqrt %215 : vector<16x1xf32>
    %217 = vector.broadcast %216 : vector<16x1xf32> to vector<16x32xf32>
    %218 = arith.mulf %208, %217 : vector<16x32xf32>
    %219 = vector.broadcast %200 : vector<1x32xf32> to vector<16x32xf32>
    %220 = arith.mulf %218, %219 : vector<16x32xf32>
    %221 = vector.broadcast %202 : vector<1x32xf32> to vector<16x32xf32>
    %222 = arith.addf %220, %221 : vector<16x32xf32>
    %c0_145 = arith.constant 0 : index
    %c0_146 = arith.constant 0 : index
    %c0_147 = arith.constant 0 : index
    %223 = vector.load %arg8[%c0_145, %c0_146, %c0_147] : memref<2x32x64xf32, #tpu.memory_space<vmem>>, vector<1x32x64xf32>
    %224 = vector.shape_cast %223 : vector<1x32x64xf32> to vector<32x64xf32>
    %cst_148 = arith.constant dense<0.000000e+00> : vector<16x64xf32>
    %225 = tpu.matmul %222, %224, %cst_148 {dimension_numbers = #tpu.dot_dimension_numbers<[1], [0], [0], [1], [0, 0, 1, 1], [], []>} : vector<16x32xf32>, vector<32x64xf32>, vector<16x64xf32> -> vector<16x64xf32>
    %c0_149 = arith.constant 0 : index
    %c0_150 = arith.constant 0 : index
    %c0_151 = arith.constant 0 : index
    %226 = vector.load %arg9[%c0_149, %c0_150, %c0_151] : memref<3x1x64xf32, #tpu.memory_space<vmem>>, vector<1x1x64xf32>
    %227 = vector.shape_cast %226 : vector<1x1x64xf32> to vector<1x64xf32>
    %228 = vector.broadcast %227 : vector<1x64xf32> to vector<16x64xf32>
    %229 = arith.addf %225, %228 : vector<16x64xf32>
    %cst_152 = arith.constant 0.000000e+00 : f32
    %230 = vector.broadcast %cst_152 : f32 to vector<16x64xf32>
    %231 = arith.maximumf %229, %230 : vector<16x64xf32>
    %c0_153 = arith.constant 0 : index
    %c0_154 = arith.constant 0 : index
    %c0_155 = arith.constant 0 : index
    %232 = vector.load %arg10[%c0_153, %c0_154, %c0_155] : memref<2x64x32xf32, #tpu.memory_space<vmem>>, vector<1x64x32xf32>
    %233 = vector.shape_cast %232 : vector<1x64x32xf32> to vector<64x32xf32>
    %cst_156 = arith.constant dense<0.000000e+00> : vector<16x32xf32>
    %234 = tpu.matmul %231, %233, %cst_156 {dimension_numbers = #tpu.dot_dimension_numbers<[1], [0], [0], [1], [0, 0, 1, 1], [], []>} : vector<16x64xf32>, vector<64x32xf32>, vector<16x32xf32> -> vector<16x32xf32>
    %c5_157 = arith.constant 5 : index
    %c0_158 = arith.constant 0 : index
    %c0_159 = arith.constant 0 : index
    %235 = vector.load %arg7[%c5_157, %c0_158, %c0_159] : memref<12x1x32xf32, #tpu.memory_space<vmem>>, vector<1x1x32xf32>
    %236 = vector.shape_cast %235 : vector<1x1x32xf32> to vector<1x32xf32>
    %237 = vector.broadcast %236 : vector<1x32xf32> to vector<16x32xf32>
    %238 = arith.addf %234, %237 : vector<16x32xf32>
    %239 = arith.addf %10, %238 : vector<16x32xf32>
    %c6_160 = arith.constant 6 : index
    %c0_161 = arith.constant 0 : index
    %c0_162 = arith.constant 0 : index
    %240 = vector.load %arg7[%c6_160, %c0_161, %c0_162] : memref<12x1x32xf32, #tpu.memory_space<vmem>>, vector<1x1x32xf32>
    %241 = vector.shape_cast %240 : vector<1x1x32xf32> to vector<1x32xf32>
    %c7_163 = arith.constant 7 : index
    %c0_164 = arith.constant 0 : index
    %c0_165 = arith.constant 0 : index
    %242 = vector.load %arg7[%c7_163, %c0_164, %c0_165] : memref<12x1x32xf32, #tpu.memory_space<vmem>>, vector<1x1x32xf32>
    %243 = vector.shape_cast %242 : vector<1x1x32xf32> to vector<1x32xf32>
    %cst_166 = arith.constant dense<0.000000e+00> : vector<16xf32>
    %244 = vector.multi_reduction <add>, %239, %cst_166 [1] : vector<16x32xf32> to vector<16xf32>
    %245 = vector.shape_cast %244 : vector<16xf32> to vector<16x1xf32>
    %cst_167 = arith.constant 3.200000e+01 : f32
    %246 = vector.broadcast %cst_167 : f32 to vector<16x1xf32>
    %247 = arith.divf %245, %246 : vector<16x1xf32>
    %248 = vector.broadcast %247 : vector<16x1xf32> to vector<16x32xf32>
    %249 = arith.subf %239, %248 : vector<16x32xf32>
    %250 = arith.mulf %249, %249 : vector<16x32xf32>
    %cst_168 = arith.constant dense<0.000000e+00> : vector<16xf32>
    %251 = vector.multi_reduction <add>, %250, %cst_168 [1] : vector<16x32xf32> to vector<16xf32>
    %252 = vector.shape_cast %251 : vector<16xf32> to vector<16x1xf32>
    %cst_169 = arith.constant 3.200000e+01 : f32
    %253 = vector.broadcast %cst_169 : f32 to vector<16x1xf32>
    %254 = arith.divf %252, %253 : vector<16x1xf32>
    %cst_170 = arith.constant 9.99999974E-6 : f32
    %255 = vector.broadcast %cst_170 : f32 to vector<16x1xf32>
    %256 = arith.addf %254, %255 : vector<16x1xf32>
    %257 = math.rsqrt %256 : vector<16x1xf32>
    %258 = vector.broadcast %257 : vector<16x1xf32> to vector<16x32xf32>
    %259 = arith.mulf %249, %258 : vector<16x32xf32>
    %260 = vector.broadcast %241 : vector<1x32xf32> to vector<16x32xf32>
    %261 = arith.mulf %259, %260 : vector<16x32xf32>
    %262 = vector.broadcast %243 : vector<1x32xf32> to vector<16x32xf32>
    %263 = arith.addf %261, %262 : vector<16x32xf32>
    %cst_171 = arith.constant 0.000000e+00 : f32
    %264 = vector.broadcast %cst_171 : f32 to vector<16x32xf32>
    %c12 = arith.constant 12 : index
    %c0_172 = arith.constant 0 : index
    %c0_173 = arith.constant 0 : index
    %265 = vector.load %arg4[%c12, %c0_172, %c0_173] : memref<24x32x8xf32, #tpu.memory_space<vmem>>, vector<1x32x8xf32>
    %266 = vector.shape_cast %265 : vector<1x32x8xf32> to vector<32x8xf32>
    %cst_174 = arith.constant dense<0.000000e+00> : vector<16x8xf32>
    %267 = tpu.matmul %263, %266, %cst_174 {dimension_numbers = #tpu.dot_dimension_numbers<[1], [0], [0], [1], [0, 0, 1, 1], [], []>} : vector<16x32xf32>, vector<32x8xf32>, vector<16x8xf32> -> vector<16x8xf32>
    %c12_175 = arith.constant 12 : index
    %c0_176 = arith.constant 0 : index
    %c0_177 = arith.constant 0 : index
    %268 = vector.load %arg5[%c12_175, %c0_176, %c0_177] : memref<24x1x8xf32, #tpu.memory_space<vmem>>, vector<1x1x8xf32>
    %269 = vector.shape_cast %268 : vector<1x1x8xf32> to vector<1x8xf32>
    %270 = vector.broadcast %269 : vector<1x8xf32> to vector<16x8xf32>
    %271 = arith.addf %267, %270 : vector<16x8xf32>
    %c16 = arith.constant 16 : index
    %c0_178 = arith.constant 0 : index
    %c0_179 = arith.constant 0 : index
    %272 = vector.load %arg4[%c16, %c0_178, %c0_179] : memref<24x32x8xf32, #tpu.memory_space<vmem>>, vector<1x32x8xf32>
    %273 = vector.shape_cast %272 : vector<1x32x8xf32> to vector<32x8xf32>
    %cst_180 = arith.constant dense<0.000000e+00> : vector<16x8xf32>
    %274 = tpu.matmul %263, %273, %cst_180 {dimension_numbers = #tpu.dot_dimension_numbers<[1], [0], [0], [1], [0, 0, 1, 1], [], []>} : vector<16x32xf32>, vector<32x8xf32>, vector<16x8xf32> -> vector<16x8xf32>
    %c16_181 = arith.constant 16 : index
    %c0_182 = arith.constant 0 : index
    %c0_183 = arith.constant 0 : index
    %275 = vector.load %arg5[%c16_181, %c0_182, %c0_183] : memref<24x1x8xf32, #tpu.memory_space<vmem>>, vector<1x1x8xf32>
    %276 = vector.shape_cast %275 : vector<1x1x8xf32> to vector<1x8xf32>
    %277 = vector.broadcast %276 : vector<1x8xf32> to vector<16x8xf32>
    %278 = arith.addf %274, %277 : vector<16x8xf32>
    %c20 = arith.constant 20 : index
    %c0_184 = arith.constant 0 : index
    %c0_185 = arith.constant 0 : index
    %279 = vector.load %arg4[%c20, %c0_184, %c0_185] : memref<24x32x8xf32, #tpu.memory_space<vmem>>, vector<1x32x8xf32>
    %280 = vector.shape_cast %279 : vector<1x32x8xf32> to vector<32x8xf32>
    %cst_186 = arith.constant dense<0.000000e+00> : vector<16x8xf32>
    %281 = tpu.matmul %263, %280, %cst_186 {dimension_numbers = #tpu.dot_dimension_numbers<[1], [0], [0], [1], [0, 0, 1, 1], [], []>} : vector<16x32xf32>, vector<32x8xf32>, vector<16x8xf32> -> vector<16x8xf32>
    %c20_187 = arith.constant 20 : index
    %c0_188 = arith.constant 0 : index
    %c0_189 = arith.constant 0 : index
    %282 = vector.load %arg5[%c20_187, %c0_188, %c0_189] : memref<24x1x8xf32, #tpu.memory_space<vmem>>, vector<1x1x8xf32>
    %283 = vector.shape_cast %282 : vector<1x1x8xf32> to vector<1x8xf32>
    %284 = vector.broadcast %283 : vector<1x8xf32> to vector<16x8xf32>
    %285 = arith.addf %281, %284 : vector<16x8xf32>
    %286 = tpu.transpose %278, [1, 0] : vector<16x8xf32> -> vector<8x16xf32>
    %cst_190 = arith.constant dense<0.000000e+00> : vector<16x16xf32>
    %287 = tpu.matmul %271, %286, %cst_190 {dimension_numbers = #tpu.dot_dimension_numbers<[1], [0], [0], [1], [0, 0, 1, 1], [], []>} : vector<16x8xf32>, vector<8x16xf32>, vector<16x16xf32> -> vector<16x16xf32>
    %cst_191 = arith.constant -1.000000e+05 : f32
    %288 = vector.broadcast %cst_191 : f32 to vector<16x16xf32>
    %289 = arith.select %13, %287, %288 : vector<16x16xi1>, vector<16x16xf32>
    %cst_192 = arith.constant dense<0xFF800000> : vector<16xf32>
    %290 = vector.multi_reduction <maximumf>, %289, %cst_192 [1] : vector<16x16xf32> to vector<16xf32>
    %291 = vector.shape_cast %290 : vector<16xf32> to vector<16x1xf32>
    %292 = vector.broadcast %291 : vector<16x1xf32> to vector<16x16xf32>
    %293 = arith.subf %289, %292 : vector<16x16xf32>
    %294 = math.exp %293 : vector<16x16xf32>
    %cst_193 = arith.constant dense<0.000000e+00> : vector<16xf32>
    %295 = vector.multi_reduction <add>, %294, %cst_193 [1] : vector<16x16xf32> to vector<16xf32>
    %296 = vector.shape_cast %295 : vector<16xf32> to vector<16x1xf32>
    %297 = vector.broadcast %296 : vector<16x1xf32> to vector<16x16xf32>
    %298 = arith.divf %294, %297 : vector<16x16xf32>
    %cst_194 = arith.constant dense<0.000000e+00> : vector<16x8xf32>
    %299 = tpu.matmul %298, %285, %cst_194 {dimension_numbers = #tpu.dot_dimension_numbers<[1], [0], [0], [1], [0, 0, 1, 1], [], []>} : vector<16x16xf32>, vector<16x8xf32>, vector<16x8xf32> -> vector<16x8xf32>
    %c4_195 = arith.constant 4 : index
    %c0_196 = arith.constant 0 : index
    %c0_197 = arith.constant 0 : index
    %300 = vector.load %arg6[%c4_195, %c0_196, %c0_197] : memref<8x8x32xf32, #tpu.memory_space<vmem>>, vector<1x8x32xf32>
    %301 = vector.shape_cast %300 : vector<1x8x32xf32> to vector<8x32xf32>
    %cst_198 = arith.constant dense<0.000000e+00> : vector<16x32xf32>
    %302 = tpu.matmul %299, %301, %cst_198 {dimension_numbers = #tpu.dot_dimension_numbers<[1], [0], [0], [1], [0, 0, 1, 1], [], []>} : vector<16x8xf32>, vector<8x32xf32>, vector<16x32xf32> -> vector<16x32xf32>
    %303 = arith.addf %264, %302 : vector<16x32xf32>
    %c13 = arith.constant 13 : index
    %c0_199 = arith.constant 0 : index
    %c0_200 = arith.constant 0 : index
    %304 = vector.load %arg4[%c13, %c0_199, %c0_200] : memref<24x32x8xf32, #tpu.memory_space<vmem>>, vector<1x32x8xf32>
    %305 = vector.shape_cast %304 : vector<1x32x8xf32> to vector<32x8xf32>
    %cst_201 = arith.constant dense<0.000000e+00> : vector<16x8xf32>
    %306 = tpu.matmul %263, %305, %cst_201 {dimension_numbers = #tpu.dot_dimension_numbers<[1], [0], [0], [1], [0, 0, 1, 1], [], []>} : vector<16x32xf32>, vector<32x8xf32>, vector<16x8xf32> -> vector<16x8xf32>
    %c13_202 = arith.constant 13 : index
    %c0_203 = arith.constant 0 : index
    %c0_204 = arith.constant 0 : index
    %307 = vector.load %arg5[%c13_202, %c0_203, %c0_204] : memref<24x1x8xf32, #tpu.memory_space<vmem>>, vector<1x1x8xf32>
    %308 = vector.shape_cast %307 : vector<1x1x8xf32> to vector<1x8xf32>
    %309 = vector.broadcast %308 : vector<1x8xf32> to vector<16x8xf32>
    %310 = arith.addf %306, %309 : vector<16x8xf32>
    %c17 = arith.constant 17 : index
    %c0_205 = arith.constant 0 : index
    %c0_206 = arith.constant 0 : index
    %311 = vector.load %arg4[%c17, %c0_205, %c0_206] : memref<24x32x8xf32, #tpu.memory_space<vmem>>, vector<1x32x8xf32>
    %312 = vector.shape_cast %311 : vector<1x32x8xf32> to vector<32x8xf32>
    %cst_207 = arith.constant dense<0.000000e+00> : vector<16x8xf32>
    %313 = tpu.matmul %263, %312, %cst_207 {dimension_numbers = #tpu.dot_dimension_numbers<[1], [0], [0], [1], [0, 0, 1, 1], [], []>} : vector<16x32xf32>, vector<32x8xf32>, vector<16x8xf32> -> vector<16x8xf32>
    %c17_208 = arith.constant 17 : index
    %c0_209 = arith.constant 0 : index
    %c0_210 = arith.constant 0 : index
    %314 = vector.load %arg5[%c17_208, %c0_209, %c0_210] : memref<24x1x8xf32, #tpu.memory_space<vmem>>, vector<1x1x8xf32>
    %315 = vector.shape_cast %314 : vector<1x1x8xf32> to vector<1x8xf32>
    %316 = vector.broadcast %315 : vector<1x8xf32> to vector<16x8xf32>
    %317 = arith.addf %313, %316 : vector<16x8xf32>
    %c21 = arith.constant 21 : index
    %c0_211 = arith.constant 0 : index
    %c0_212 = arith.constant 0 : index
    %318 = vector.load %arg4[%c21, %c0_211, %c0_212] : memref<24x32x8xf32, #tpu.memory_space<vmem>>, vector<1x32x8xf32>
    %319 = vector.shape_cast %318 : vector<1x32x8xf32> to vector<32x8xf32>
    %cst_213 = arith.constant dense<0.000000e+00> : vector<16x8xf32>
    %320 = tpu.matmul %263, %319, %cst_213 {dimension_numbers = #tpu.dot_dimension_numbers<[1], [0], [0], [1], [0, 0, 1, 1], [], []>} : vector<16x32xf32>, vector<32x8xf32>, vector<16x8xf32> -> vector<16x8xf32>
    %c21_214 = arith.constant 21 : index
    %c0_215 = arith.constant 0 : index
    %c0_216 = arith.constant 0 : index
    %321 = vector.load %arg5[%c21_214, %c0_215, %c0_216] : memref<24x1x8xf32, #tpu.memory_space<vmem>>, vector<1x1x8xf32>
    %322 = vector.shape_cast %321 : vector<1x1x8xf32> to vector<1x8xf32>
    %323 = vector.broadcast %322 : vector<1x8xf32> to vector<16x8xf32>
    %324 = arith.addf %320, %323 : vector<16x8xf32>
    %325 = tpu.transpose %317, [1, 0] : vector<16x8xf32> -> vector<8x16xf32>
    %cst_217 = arith.constant dense<0.000000e+00> : vector<16x16xf32>
    %326 = tpu.matmul %310, %325, %cst_217 {dimension_numbers = #tpu.dot_dimension_numbers<[1], [0], [0], [1], [0, 0, 1, 1], [], []>} : vector<16x8xf32>, vector<8x16xf32>, vector<16x16xf32> -> vector<16x16xf32>
    %cst_218 = arith.constant -1.000000e+05 : f32
    %327 = vector.broadcast %cst_218 : f32 to vector<16x16xf32>
    %328 = arith.select %13, %326, %327 : vector<16x16xi1>, vector<16x16xf32>
    %cst_219 = arith.constant dense<0xFF800000> : vector<16xf32>
    %329 = vector.multi_reduction <maximumf>, %328, %cst_219 [1] : vector<16x16xf32> to vector<16xf32>
    %330 = vector.shape_cast %329 : vector<16xf32> to vector<16x1xf32>
    %331 = vector.broadcast %330 : vector<16x1xf32> to vector<16x16xf32>
    %332 = arith.subf %328, %331 : vector<16x16xf32>
    %333 = math.exp %332 : vector<16x16xf32>
    %cst_220 = arith.constant dense<0.000000e+00> : vector<16xf32>
    %334 = vector.multi_reduction <add>, %333, %cst_220 [1] : vector<16x16xf32> to vector<16xf32>
    %335 = vector.shape_cast %334 : vector<16xf32> to vector<16x1xf32>
    %336 = vector.broadcast %335 : vector<16x1xf32> to vector<16x16xf32>
    %337 = arith.divf %333, %336 : vector<16x16xf32>
    %cst_221 = arith.constant dense<0.000000e+00> : vector<16x8xf32>
    %338 = tpu.matmul %337, %324, %cst_221 {dimension_numbers = #tpu.dot_dimension_numbers<[1], [0], [0], [1], [0, 0, 1, 1], [], []>} : vector<16x16xf32>, vector<16x8xf32>, vector<16x8xf32> -> vector<16x8xf32>
    %c5_222 = arith.constant 5 : index
    %c0_223 = arith.constant 0 : index
    %c0_224 = arith.constant 0 : index
    %339 = vector.load %arg6[%c5_222, %c0_223, %c0_224] : memref<8x8x32xf32, #tpu.memory_space<vmem>>, vector<1x8x32xf32>
    %340 = vector.shape_cast %339 : vector<1x8x32xf32> to vector<8x32xf32>
    %cst_225 = arith.constant dense<0.000000e+00> : vector<16x32xf32>
    %341 = tpu.matmul %338, %340, %cst_225 {dimension_numbers = #tpu.dot_dimension_numbers<[1], [0], [0], [1], [0, 0, 1, 1], [], []>} : vector<16x8xf32>, vector<8x32xf32>, vector<16x32xf32> -> vector<16x32xf32>
    %342 = arith.addf %303, %341 : vector<16x32xf32>
    %c14 = arith.constant 14 : index
    %c0_226 = arith.constant 0 : index
    %c0_227 = arith.constant 0 : index
    %343 = vector.load %arg4[%c14, %c0_226, %c0_227] : memref<24x32x8xf32, #tpu.memory_space<vmem>>, vector<1x32x8xf32>
    %344 = vector.shape_cast %343 : vector<1x32x8xf32> to vector<32x8xf32>
    %cst_228 = arith.constant dense<0.000000e+00> : vector<16x8xf32>
    %345 = tpu.matmul %263, %344, %cst_228 {dimension_numbers = #tpu.dot_dimension_numbers<[1], [0], [0], [1], [0, 0, 1, 1], [], []>} : vector<16x32xf32>, vector<32x8xf32>, vector<16x8xf32> -> vector<16x8xf32>
    %c14_229 = arith.constant 14 : index
    %c0_230 = arith.constant 0 : index
    %c0_231 = arith.constant 0 : index
    %346 = vector.load %arg5[%c14_229, %c0_230, %c0_231] : memref<24x1x8xf32, #tpu.memory_space<vmem>>, vector<1x1x8xf32>
    %347 = vector.shape_cast %346 : vector<1x1x8xf32> to vector<1x8xf32>
    %348 = vector.broadcast %347 : vector<1x8xf32> to vector<16x8xf32>
    %349 = arith.addf %345, %348 : vector<16x8xf32>
    %c18 = arith.constant 18 : index
    %c0_232 = arith.constant 0 : index
    %c0_233 = arith.constant 0 : index
    %350 = vector.load %arg4[%c18, %c0_232, %c0_233] : memref<24x32x8xf32, #tpu.memory_space<vmem>>, vector<1x32x8xf32>
    %351 = vector.shape_cast %350 : vector<1x32x8xf32> to vector<32x8xf32>
    %cst_234 = arith.constant dense<0.000000e+00> : vector<16x8xf32>
    %352 = tpu.matmul %263, %351, %cst_234 {dimension_numbers = #tpu.dot_dimension_numbers<[1], [0], [0], [1], [0, 0, 1, 1], [], []>} : vector<16x32xf32>, vector<32x8xf32>, vector<16x8xf32> -> vector<16x8xf32>
    %c18_235 = arith.constant 18 : index
    %c0_236 = arith.constant 0 : index
    %c0_237 = arith.constant 0 : index
    %353 = vector.load %arg5[%c18_235, %c0_236, %c0_237] : memref<24x1x8xf32, #tpu.memory_space<vmem>>, vector<1x1x8xf32>
    %354 = vector.shape_cast %353 : vector<1x1x8xf32> to vector<1x8xf32>
    %355 = vector.broadcast %354 : vector<1x8xf32> to vector<16x8xf32>
    %356 = arith.addf %352, %355 : vector<16x8xf32>
    %c22 = arith.constant 22 : index
    %c0_238 = arith.constant 0 : index
    %c0_239 = arith.constant 0 : index
    %357 = vector.load %arg4[%c22, %c0_238, %c0_239] : memref<24x32x8xf32, #tpu.memory_space<vmem>>, vector<1x32x8xf32>
    %358 = vector.shape_cast %357 : vector<1x32x8xf32> to vector<32x8xf32>
    %cst_240 = arith.constant dense<0.000000e+00> : vector<16x8xf32>
    %359 = tpu.matmul %263, %358, %cst_240 {dimension_numbers = #tpu.dot_dimension_numbers<[1], [0], [0], [1], [0, 0, 1, 1], [], []>} : vector<16x32xf32>, vector<32x8xf32>, vector<16x8xf32> -> vector<16x8xf32>
    %c22_241 = arith.constant 22 : index
    %c0_242 = arith.constant 0 : index
    %c0_243 = arith.constant 0 : index
    %360 = vector.load %arg5[%c22_241, %c0_242, %c0_243] : memref<24x1x8xf32, #tpu.memory_space<vmem>>, vector<1x1x8xf32>
    %361 = vector.shape_cast %360 : vector<1x1x8xf32> to vector<1x8xf32>
    %362 = vector.broadcast %361 : vector<1x8xf32> to vector<16x8xf32>
    %363 = arith.addf %359, %362 : vector<16x8xf32>
    %364 = tpu.transpose %356, [1, 0] : vector<16x8xf32> -> vector<8x16xf32>
    %cst_244 = arith.constant dense<0.000000e+00> : vector<16x16xf32>
    %365 = tpu.matmul %349, %364, %cst_244 {dimension_numbers = #tpu.dot_dimension_numbers<[1], [0], [0], [1], [0, 0, 1, 1], [], []>} : vector<16x8xf32>, vector<8x16xf32>, vector<16x16xf32> -> vector<16x16xf32>
    %cst_245 = arith.constant -1.000000e+05 : f32
    %366 = vector.broadcast %cst_245 : f32 to vector<16x16xf32>
    %367 = arith.select %13, %365, %366 : vector<16x16xi1>, vector<16x16xf32>
    %cst_246 = arith.constant dense<0xFF800000> : vector<16xf32>
    %368 = vector.multi_reduction <maximumf>, %367, %cst_246 [1] : vector<16x16xf32> to vector<16xf32>
    %369 = vector.shape_cast %368 : vector<16xf32> to vector<16x1xf32>
    %370 = vector.broadcast %369 : vector<16x1xf32> to vector<16x16xf32>
    %371 = arith.subf %367, %370 : vector<16x16xf32>
    %372 = math.exp %371 : vector<16x16xf32>
    %cst_247 = arith.constant dense<0.000000e+00> : vector<16xf32>
    %373 = vector.multi_reduction <add>, %372, %cst_247 [1] : vector<16x16xf32> to vector<16xf32>
    %374 = vector.shape_cast %373 : vector<16xf32> to vector<16x1xf32>
    %375 = vector.broadcast %374 : vector<16x1xf32> to vector<16x16xf32>
    %376 = arith.divf %372, %375 : vector<16x16xf32>
    %cst_248 = arith.constant dense<0.000000e+00> : vector<16x8xf32>
    %377 = tpu.matmul %376, %363, %cst_248 {dimension_numbers = #tpu.dot_dimension_numbers<[1], [0], [0], [1], [0, 0, 1, 1], [], []>} : vector<16x16xf32>, vector<16x8xf32>, vector<16x8xf32> -> vector<16x8xf32>
    %c6_249 = arith.constant 6 : index
    %c0_250 = arith.constant 0 : index
    %c0_251 = arith.constant 0 : index
    %378 = vector.load %arg6[%c6_249, %c0_250, %c0_251] : memref<8x8x32xf32, #tpu.memory_space<vmem>>, vector<1x8x32xf32>
    %379 = vector.shape_cast %378 : vector<1x8x32xf32> to vector<8x32xf32>
    %cst_252 = arith.constant dense<0.000000e+00> : vector<16x32xf32>
    %380 = tpu.matmul %377, %379, %cst_252 {dimension_numbers = #tpu.dot_dimension_numbers<[1], [0], [0], [1], [0, 0, 1, 1], [], []>} : vector<16x8xf32>, vector<8x32xf32>, vector<16x32xf32> -> vector<16x32xf32>
    %381 = arith.addf %342, %380 : vector<16x32xf32>
    %c15 = arith.constant 15 : index
    %c0_253 = arith.constant 0 : index
    %c0_254 = arith.constant 0 : index
    %382 = vector.load %arg4[%c15, %c0_253, %c0_254] : memref<24x32x8xf32, #tpu.memory_space<vmem>>, vector<1x32x8xf32>
    %383 = vector.shape_cast %382 : vector<1x32x8xf32> to vector<32x8xf32>
    %cst_255 = arith.constant dense<0.000000e+00> : vector<16x8xf32>
    %384 = tpu.matmul %263, %383, %cst_255 {dimension_numbers = #tpu.dot_dimension_numbers<[1], [0], [0], [1], [0, 0, 1, 1], [], []>} : vector<16x32xf32>, vector<32x8xf32>, vector<16x8xf32> -> vector<16x8xf32>
    %c15_256 = arith.constant 15 : index
    %c0_257 = arith.constant 0 : index
    %c0_258 = arith.constant 0 : index
    %385 = vector.load %arg5[%c15_256, %c0_257, %c0_258] : memref<24x1x8xf32, #tpu.memory_space<vmem>>, vector<1x1x8xf32>
    %386 = vector.shape_cast %385 : vector<1x1x8xf32> to vector<1x8xf32>
    %387 = vector.broadcast %386 : vector<1x8xf32> to vector<16x8xf32>
    %388 = arith.addf %384, %387 : vector<16x8xf32>
    %c19 = arith.constant 19 : index
    %c0_259 = arith.constant 0 : index
    %c0_260 = arith.constant 0 : index
    %389 = vector.load %arg4[%c19, %c0_259, %c0_260] : memref<24x32x8xf32, #tpu.memory_space<vmem>>, vector<1x32x8xf32>
    %390 = vector.shape_cast %389 : vector<1x32x8xf32> to vector<32x8xf32>
    %cst_261 = arith.constant dense<0.000000e+00> : vector<16x8xf32>
    %391 = tpu.matmul %263, %390, %cst_261 {dimension_numbers = #tpu.dot_dimension_numbers<[1], [0], [0], [1], [0, 0, 1, 1], [], []>} : vector<16x32xf32>, vector<32x8xf32>, vector<16x8xf32> -> vector<16x8xf32>
    %c19_262 = arith.constant 19 : index
    %c0_263 = arith.constant 0 : index
    %c0_264 = arith.constant 0 : index
    %392 = vector.load %arg5[%c19_262, %c0_263, %c0_264] : memref<24x1x8xf32, #tpu.memory_space<vmem>>, vector<1x1x8xf32>
    %393 = vector.shape_cast %392 : vector<1x1x8xf32> to vector<1x8xf32>
    %394 = vector.broadcast %393 : vector<1x8xf32> to vector<16x8xf32>
    %395 = arith.addf %391, %394 : vector<16x8xf32>
    %c23 = arith.constant 23 : index
    %c0_265 = arith.constant 0 : index
    %c0_266 = arith.constant 0 : index
    %396 = vector.load %arg4[%c23, %c0_265, %c0_266] : memref<24x32x8xf32, #tpu.memory_space<vmem>>, vector<1x32x8xf32>
    %397 = vector.shape_cast %396 : vector<1x32x8xf32> to vector<32x8xf32>
    %cst_267 = arith.constant dense<0.000000e+00> : vector<16x8xf32>
    %398 = tpu.matmul %263, %397, %cst_267 {dimension_numbers = #tpu.dot_dimension_numbers<[1], [0], [0], [1], [0, 0, 1, 1], [], []>} : vector<16x32xf32>, vector<32x8xf32>, vector<16x8xf32> -> vector<16x8xf32>
    %c23_268 = arith.constant 23 : index
    %c0_269 = arith.constant 0 : index
    %c0_270 = arith.constant 0 : index
    %399 = vector.load %arg5[%c23_268, %c0_269, %c0_270] : memref<24x1x8xf32, #tpu.memory_space<vmem>>, vector<1x1x8xf32>
    %400 = vector.shape_cast %399 : vector<1x1x8xf32> to vector<1x8xf32>
    %401 = vector.broadcast %400 : vector<1x8xf32> to vector<16x8xf32>
    %402 = arith.addf %398, %401 : vector<16x8xf32>
    %403 = tpu.transpose %395, [1, 0] : vector<16x8xf32> -> vector<8x16xf32>
    %cst_271 = arith.constant dense<0.000000e+00> : vector<16x16xf32>
    %404 = tpu.matmul %388, %403, %cst_271 {dimension_numbers = #tpu.dot_dimension_numbers<[1], [0], [0], [1], [0, 0, 1, 1], [], []>} : vector<16x8xf32>, vector<8x16xf32>, vector<16x16xf32> -> vector<16x16xf32>
    %cst_272 = arith.constant -1.000000e+05 : f32
    %405 = vector.broadcast %cst_272 : f32 to vector<16x16xf32>
    %406 = arith.select %13, %404, %405 : vector<16x16xi1>, vector<16x16xf32>
    %cst_273 = arith.constant dense<0xFF800000> : vector<16xf32>
    %407 = vector.multi_reduction <maximumf>, %406, %cst_273 [1] : vector<16x16xf32> to vector<16xf32>
    %408 = vector.shape_cast %407 : vector<16xf32> to vector<16x1xf32>
    %409 = vector.broadcast %408 : vector<16x1xf32> to vector<16x16xf32>
    %410 = arith.subf %406, %409 : vector<16x16xf32>
    %411 = math.exp %410 : vector<16x16xf32>
    %cst_274 = arith.constant dense<0.000000e+00> : vector<16xf32>
    %412 = vector.multi_reduction <add>, %411, %cst_274 [1] : vector<16x16xf32> to vector<16xf32>
    %413 = vector.shape_cast %412 : vector<16xf32> to vector<16x1xf32>
    %414 = vector.broadcast %413 : vector<16x1xf32> to vector<16x16xf32>
    %415 = arith.divf %411, %414 : vector<16x16xf32>
    %cst_275 = arith.constant dense<0.000000e+00> : vector<16x8xf32>
    %416 = tpu.matmul %415, %402, %cst_275 {dimension_numbers = #tpu.dot_dimension_numbers<[1], [0], [0], [1], [0, 0, 1, 1], [], []>} : vector<16x16xf32>, vector<16x8xf32>, vector<16x8xf32> -> vector<16x8xf32>
    %c7_276 = arith.constant 7 : index
    %c0_277 = arith.constant 0 : index
    %c0_278 = arith.constant 0 : index
    %417 = vector.load %arg6[%c7_276, %c0_277, %c0_278] : memref<8x8x32xf32, #tpu.memory_space<vmem>>, vector<1x8x32xf32>
    %418 = vector.shape_cast %417 : vector<1x8x32xf32> to vector<8x32xf32>
    %cst_279 = arith.constant dense<0.000000e+00> : vector<16x32xf32>
    %419 = tpu.matmul %416, %418, %cst_279 {dimension_numbers = #tpu.dot_dimension_numbers<[1], [0], [0], [1], [0, 0, 1, 1], [], []>} : vector<16x8xf32>, vector<8x32xf32>, vector<16x32xf32> -> vector<16x32xf32>
    %420 = arith.addf %381, %419 : vector<16x32xf32>
    %c8_280 = arith.constant 8 : index
    %c0_281 = arith.constant 0 : index
    %c0_282 = arith.constant 0 : index
    %421 = vector.load %arg7[%c8_280, %c0_281, %c0_282] : memref<12x1x32xf32, #tpu.memory_space<vmem>>, vector<1x1x32xf32>
    %422 = vector.shape_cast %421 : vector<1x1x32xf32> to vector<1x32xf32>
    %423 = vector.broadcast %422 : vector<1x32xf32> to vector<16x32xf32>
    %424 = arith.addf %420, %423 : vector<16x32xf32>
    %c9_283 = arith.constant 9 : index
    %c0_284 = arith.constant 0 : index
    %c0_285 = arith.constant 0 : index
    %425 = vector.load %arg7[%c9_283, %c0_284, %c0_285] : memref<12x1x32xf32, #tpu.memory_space<vmem>>, vector<1x1x32xf32>
    %426 = vector.shape_cast %425 : vector<1x1x32xf32> to vector<1x32xf32>
    %c10_286 = arith.constant 10 : index
    %c0_287 = arith.constant 0 : index
    %c0_288 = arith.constant 0 : index
    %427 = vector.load %arg7[%c10_286, %c0_287, %c0_288] : memref<12x1x32xf32, #tpu.memory_space<vmem>>, vector<1x1x32xf32>
    %428 = vector.shape_cast %427 : vector<1x1x32xf32> to vector<1x32xf32>
    %cst_289 = arith.constant dense<0.000000e+00> : vector<16xf32>
    %429 = vector.multi_reduction <add>, %424, %cst_289 [1] : vector<16x32xf32> to vector<16xf32>
    %430 = vector.shape_cast %429 : vector<16xf32> to vector<16x1xf32>
    %cst_290 = arith.constant 3.200000e+01 : f32
    %431 = vector.broadcast %cst_290 : f32 to vector<16x1xf32>
    %432 = arith.divf %430, %431 : vector<16x1xf32>
    %433 = vector.broadcast %432 : vector<16x1xf32> to vector<16x32xf32>
    %434 = arith.subf %424, %433 : vector<16x32xf32>
    %435 = arith.mulf %434, %434 : vector<16x32xf32>
    %cst_291 = arith.constant dense<0.000000e+00> : vector<16xf32>
    %436 = vector.multi_reduction <add>, %435, %cst_291 [1] : vector<16x32xf32> to vector<16xf32>
    %437 = vector.shape_cast %436 : vector<16xf32> to vector<16x1xf32>
    %cst_292 = arith.constant 3.200000e+01 : f32
    %438 = vector.broadcast %cst_292 : f32 to vector<16x1xf32>
    %439 = arith.divf %437, %438 : vector<16x1xf32>
    %cst_293 = arith.constant 9.99999974E-6 : f32
    %440 = vector.broadcast %cst_293 : f32 to vector<16x1xf32>
    %441 = arith.addf %439, %440 : vector<16x1xf32>
    %442 = math.rsqrt %441 : vector<16x1xf32>
    %443 = vector.broadcast %442 : vector<16x1xf32> to vector<16x32xf32>
    %444 = arith.mulf %434, %443 : vector<16x32xf32>
    %445 = vector.broadcast %426 : vector<1x32xf32> to vector<16x32xf32>
    %446 = arith.mulf %444, %445 : vector<16x32xf32>
    %447 = vector.broadcast %428 : vector<1x32xf32> to vector<16x32xf32>
    %448 = arith.addf %446, %447 : vector<16x32xf32>
    %c1_294 = arith.constant 1 : index
    %c0_295 = arith.constant 0 : index
    %c0_296 = arith.constant 0 : index
    %449 = vector.load %arg8[%c1_294, %c0_295, %c0_296] : memref<2x32x64xf32, #tpu.memory_space<vmem>>, vector<1x32x64xf32>
    %450 = vector.shape_cast %449 : vector<1x32x64xf32> to vector<32x64xf32>
    %cst_297 = arith.constant dense<0.000000e+00> : vector<16x64xf32>
    %451 = tpu.matmul %448, %450, %cst_297 {dimension_numbers = #tpu.dot_dimension_numbers<[1], [0], [0], [1], [0, 0, 1, 1], [], []>} : vector<16x32xf32>, vector<32x64xf32>, vector<16x64xf32> -> vector<16x64xf32>
    %c1_298 = arith.constant 1 : index
    %c0_299 = arith.constant 0 : index
    %c0_300 = arith.constant 0 : index
    %452 = vector.load %arg9[%c1_298, %c0_299, %c0_300] : memref<3x1x64xf32, #tpu.memory_space<vmem>>, vector<1x1x64xf32>
    %453 = vector.shape_cast %452 : vector<1x1x64xf32> to vector<1x64xf32>
    %454 = vector.broadcast %453 : vector<1x64xf32> to vector<16x64xf32>
    %455 = arith.addf %451, %454 : vector<16x64xf32>
    %cst_301 = arith.constant 0.000000e+00 : f32
    %456 = vector.broadcast %cst_301 : f32 to vector<16x64xf32>
    %457 = arith.maximumf %455, %456 : vector<16x64xf32>
    %c1_302 = arith.constant 1 : index
    %c0_303 = arith.constant 0 : index
    %c0_304 = arith.constant 0 : index
    %458 = vector.load %arg10[%c1_302, %c0_303, %c0_304] : memref<2x64x32xf32, #tpu.memory_space<vmem>>, vector<1x64x32xf32>
    %459 = vector.shape_cast %458 : vector<1x64x32xf32> to vector<64x32xf32>
    %cst_305 = arith.constant dense<0.000000e+00> : vector<16x32xf32>
    %460 = tpu.matmul %457, %459, %cst_305 {dimension_numbers = #tpu.dot_dimension_numbers<[1], [0], [0], [1], [0, 0, 1, 1], [], []>} : vector<16x64xf32>, vector<64x32xf32>, vector<16x32xf32> -> vector<16x32xf32>
    %c11_306 = arith.constant 11 : index
    %c0_307 = arith.constant 0 : index
    %c0_308 = arith.constant 0 : index
    %461 = vector.load %arg7[%c11_306, %c0_307, %c0_308] : memref<12x1x32xf32, #tpu.memory_space<vmem>>, vector<1x1x32xf32>
    %462 = vector.shape_cast %461 : vector<1x1x32xf32> to vector<1x32xf32>
    %463 = vector.broadcast %462 : vector<1x32xf32> to vector<16x32xf32>
    %464 = arith.addf %460, %463 : vector<16x32xf32>
    %465 = arith.addf %239, %464 : vector<16x32xf32>
    %c0_309 = arith.constant 0 : index
    %c0_310 = arith.constant 0 : index
    %466 = vector.load %arg11[%c0_309, %c0_310] : memref<32x64xf32, #tpu.memory_space<vmem>>, vector<32x64xf32>
    %cst_311 = arith.constant dense<0.000000e+00> : vector<16x64xf32>
    %467 = tpu.matmul %465, %466, %cst_311 {dimension_numbers = #tpu.dot_dimension_numbers<[1], [0], [0], [1], [0, 0, 1, 1], [], []>} : vector<16x32xf32>, vector<32x64xf32>, vector<16x64xf32> -> vector<16x64xf32>
    %c2_312 = arith.constant 2 : index
    %c0_313 = arith.constant 0 : index
    %c0_314 = arith.constant 0 : index
    %468 = vector.load %arg9[%c2_312, %c0_313, %c0_314] : memref<3x1x64xf32, #tpu.memory_space<vmem>>, vector<1x1x64xf32>
    %469 = vector.shape_cast %468 : vector<1x1x64xf32> to vector<1x64xf32>
    %470 = vector.broadcast %469 : vector<1x64xf32> to vector<16x64xf32>
    %471 = arith.addf %467, %470 : vector<16x64xf32>
    %c0_315 = arith.constant 0 : index
    %c0_316 = arith.constant 0 : index
    %472 = vector.load %arg12[%c0_315, %c0_316] : memref<16x64xf32, #tpu.memory_space<vmem>>, vector<16x64xf32>
    tpu.vector_store %arg12[%c0_315, %c0_316], %471 {strides = array<i32>} : memref<16x64xf32, #tpu.memory_space<vmem>>, vector<16x64xf32>,
    return
  }
}

</mosaic_0001>

<llo_original>
// kernel: transformer_forward.1
$region0: #{transformer_forward.1}
  #allocation0 [shape = 'u32[]', space=smem, size = 0x4, offset = 0x4, fixed_abs, tag = 'smem constant byte address 0x4 - core index']
  #allocation1 [shape = 'u32[72,128]{1,0:T(1,128)}', space=vmem, size = 0x9000, scoped, tag = 'internal scratch']
  %s0 = inlined_call_operand.vmem [shape: s32[16,1], index: 0, kind: input, shape index: {}]
  %s1 = inlined_call_operand.vmem [shape: f32[16,16], index: 1, kind: input, shape index: {}]
  %s2 = inlined_call_operand.vmem [shape: f32[16,32], index: 2, kind: input, shape index: {}]
  %s3 = inlined_call_operand.vmem [shape: f32[64,32], index: 3, kind: input, shape index: {}]
  %s4 = inlined_call_operand.vmem [shape: f32[24,32,8], index: 4, kind: input, shape index: {}]
  %s5 = inlined_call_operand.vmem [shape: f32[24,1,8], index: 5, kind: input, shape index: {}]
  %s6 = inlined_call_operand.vmem [shape: f32[8,8,32], index: 6, kind: input, shape index: {}]
  %s7 = inlined_call_operand.vmem [shape: f32[12,1,32], index: 7, kind: input, shape index: {}]
  %s8 = inlined_call_operand.vmem [shape: f32[2,32,64], index: 8, kind: input, shape index: {}]
  %s9 = inlined_call_operand.vmem [shape: f32[3,1,64], index: 9, kind: input, shape index: {}]
  %s10 = inlined_call_operand.vmem [shape: f32[2,64,32], index: 10, kind: input, shape index: {}]
  %s11 = inlined_call_operand.vmem [shape: f32[32,64], index: 11, kind: input, shape index: {}]
  %s12 = inlined_call_operand.hbm [shape: f32[16,64], index: 12, kind: output, shape index: {}]
  %s13 = sld [smem:[#allocation0]]
  $region58: #{transformer_forward.1} parent=0
    _
  %s15 = ssub.s32 1, %s13
  %s16 = scalar_select 0, %s15, %s13
  $region1: #{transformer_forward.1} parent=0
    #allocation2 [shape = 'u8[8192]{0}', space=vmem, size = 0x2000, scoped, tag = 'output window, operand 0, single buffered']
    #allocation3 [shape = 's32[1]{0}', space=sflag, size = 0x4, scoped, tag = 'scoped memory for transformer_forward.1']
    %17 = vsyncpa [#allocation3], 0
    // Predicated region
    $region2: #{transformer_forward.1} parent=1 // pred_check
      _
    $region3: #{transformer_forward.1} parent=1 // pred_check_branch
      %19 = sbr.rel (0) target = $region5
    $region4: #{transformer_forward.1} parent=1 // pred_region
      _
    $region5: #{transformer_forward.1} parent=1 // pred_fallthru
      _
    // Predicated region
    $region6: #{transformer_forward.1} parent=1 // pred_check
      _
    $region7: #{transformer_forward.1} parent=1 // pred_check_branch
      %21 = sbr.rel (0) target = $region9
    $region8: #{transformer_forward.1} parent=1 // pred_region
      _
    $region9: #{transformer_forward.1} parent=1 // pred_fallthru
      _
    // Predicated region
    $region10: #{transformer_forward.1} parent=1 // pred_check
      _
    $region11: #{transformer_forward.1} parent=1 // pred_check_branch
      %23 = sbr.rel (0) target = $region13
    $region12: #{transformer_forward.1} parent=1 // pred_region
      _
    $region13: #{transformer_forward.1} parent=1 // pred_fallthru
      _
    // Predicated region
    $region14: #{transformer_forward.1} parent=1 // pred_check
      _
    $region15: #{transformer_forward.1} parent=1 // pred_check_branch
      %25 = sbr.rel (0) target = $region17
    $region16: #{transformer_forward.1} parent=1 // pred_region
      _
    $region17: #{transformer_forward.1} parent=1 // pred_fallthru
      _
    // Predicated region
    $region18: #{transformer_forward.1} parent=1 // pred_check
      _
    $region19: #{transformer_forward.1} parent=1 // pred_check_branch
      %27 = sbr.rel (0) target = $region21
    $region20: #{transformer_forward.1} parent=1 // pred_region
      _
    $region21: #{transformer_forward.1} parent=1 // pred_fallthru
      _
    // Predicated region
    $region22: #{transformer_forward.1} parent=1 // pred_check
      _
    $region23: #{transformer_forward.1} parent=1 // pred_check_branch
      %29 = sbr.rel (0) target = $region25
    $region24: #{transformer_forward.1} parent=1 // pred_region
      _
    $region25: #{transformer_forward.1} parent=1 // pred_fallthru
      _
    // Predicated region
    $region26: #{transformer_forward.1} parent=1 // pred_check
      _
    $region27: #{transformer_forward.1} parent=1 // pred_check_branch
      %31 = sbr.rel (0) target = $region29
    $region28: #{transformer_forward.1} parent=1 // pred_region
      _
    $region29: #{transformer_forward.1} parent=1 // pred_fallthru
      _
    // Predicated region
    $region30: #{transformer_forward.1} parent=1 // pred_check
      _
    $region31: #{transformer_forward.1} parent=1 // pred_check_branch
      %33 = sbr.rel (0) target = $region33
    $region32: #{transformer_forward.1} parent=1 // pred_region
      _
    $region33: #{transformer_forward.1} parent=1 // pred_fallthru
      _
    // Predicated region
    $region34: #{transformer_forward.1} parent=1 // pred_check
      _
    $region35: #{transformer_forward.1} parent=1 // pred_check_branch
      %35 = sbr.rel (0) target = $region37
    $region36: #{transformer_forward.1} parent=1 // pred_region
      _
    $region37: #{transformer_forward.1} parent=1 // pred_fallthru
      _
    // Predicated region
    $region38: #{transformer_forward.1} parent=1 // pred_check
      _
    $region39: #{transformer_forward.1} parent=1 // pred_check_branch
      %37 = sbr.rel (0) target = $region41
    $region40: #{transformer_forward.1} parent=1 // pred_region
      _
    $region41: #{transformer_forward.1} parent=1 // pred_fallthru
      _
    // Predicated region
    $region42: #{transformer_forward.1} parent=1 // pred_check
      _
    $region43: #{transformer_forward.1} parent=1 // pred_check_branch
      %39 = sbr.rel (0) target = $region45
    $region44: #{transformer_forward.1} parent=1 // pred_region
      _
    $region45: #{transformer_forward.1} parent=1 // pred_fallthru
      _
    // Predicated region
    $region46: #{transformer_forward.1} parent=1 // pred_check
      _
    $region47: #{transformer_forward.1} parent=1 // pred_check_branch
      %41 = sbr.rel (0) target = $region49
    $region48: #{transformer_forward.1} parent=1 // pred_region
      _
    $region49: #{transformer_forward.1} parent=1 // pred_fallthru
      _
    %v42 = vld [vmem:[%s0] sm:$0xff]
    %v43 = vld [vmem:[%s0 + $0x8] sm:$0xff]
    %v44 = vlaneseq
    %v45 = vand.u32 %v44, 127
    %46 = vset.pattern.permute.xlu0 0
    %47 = vperm.xlu0 %46, %v42
    %v48 = vpop.permute.xlu0 %47
    %49 = vset.pattern.permute.xlu0 0
    %50 = vperm.xlu0 %49, %v43
    %v51 = vpop.permute.xlu0 %50
    %vm52 = vcmp.eq.s32.totalorder %v45, %v48
    %vm53 = vcmp.eq.s32.totalorder %v45, %v51
    %v54 = vsel %vm52, 1.0, 0.0
    %v55 = vsel %vm53, 1.0, 0.0
    %v56 = vld [vmem:[%s3] sm:$0xff]
    %v57 = vld [vmem:[%s3 + $0x8] sm:$0xff]
    %v58 = vld [vmem:[%s3 + $0x10] sm:$0xff]
    %v59 = vld [vmem:[%s3 + $0x18] sm:$0xff]
    %v60 = vld [vmem:[%s3 + $0x20] sm:$0xff]
    %v61 = vld [vmem:[%s3 + $0x28] sm:$0xff]
    %v62 = vld [vmem:[%s3 + $0x30] sm:$0xff]
    %v63 = vld [vmem:[%s3 + $0x38] sm:$0xff]
    %v64 = vld [vmem:[%s2] sm:$0xff]
    %v65 = vld [vmem:[%s2 + $0x8] sm:$0xff]
    %vm66 = vcmask 523264
    %v68 = vsel %vm66, %v54, 0
    %v71 = vsel %vm66, %v55, 0
    %73 = vmatpush.msra.mxu0 0.0
    %74 = vmatpush.msra.mxu0 0.0
    %75 = vmatpush.msra.mxu0 0.0
    %76 = vmatpush.msra.mxu0 0.0
    %77 = vmatpush.msra.mxu0 0.0
    %78 = vmatpush.msra.mxu0 0.0
    %79 = vmatpush.msra.mxu0 0.0
    %80 = vmatpush.msra.mxu0 0.0
    %81 = vmatpush.msra.mxu0 %v63
    %82 = vmatpush.msra.mxu0 %v62
    %83 = vmatpush.msra.mxu0 %v61
    %84 = vmatpush.msra.mxu0 %v60
    %85 = vmatpush.msra.mxu0 %v59
    %86 = vmatpush.msra.mxu0 %v58
    %87 = vmatpush.msra.mxu0 %v57
    %88 = vmatpush.msra.mxu0 %v56
    %89 = vmatmul.f32.gmra.mxu0 %v68
    %v90 = vpop.f32.mrf.mxu0
    %v91 = vadd.f32 %v64, %v90
    %92 = vmatmul.f32.gmra.mxu0 %v71
    %v93 = vpop.f32.mrf.mxu0
    %v94 = vadd.f32 %v65, %v93
    %95 = vdwg.mxu0
    %v96 = vld [vmem:[%s1] sm:$0xff]
    %v97 = vld [vmem:[%s1 + $0x8] sm:$0xff]
    %vm98 = vcmp.gt.f32.partialorder %v96, 0.5
    %vm99 = vcmp.gt.f32.partialorder %v97, 0.5
    %v100 = vld [vmem:[%s7] sm:$0x1]
    %s101 = scalar_lea.vmem %s7, 1
    %v102 = vld [vmem:[%s101] sm:$0x1]
    %vm103 = vcmask 261120
    %v104 = vsel %vm103, %v91, 0.0
    %105 = vadd.xlane.f32.xlu0 %v104
    %v106 = vpop.xlane.xlu0 %105
    %v107 = vsel %vm103, %v94, 0.0
    %108 = vadd.xlane.f32.xlu0 %v107
    %v109 = vpop.xlane.xlu0 %108
    %v110 = vrcp.pop 32.0
    %v111 = vmul.f32 32.0, %v110
    %v112 = vsub.f32 1.0, %v111
    %v113 = vmul.f32 %v110, %v112
    %v114 = vadd.f32 %v110, %v113
    %vm115 = vweird.f32 %v110
    %v116 = vsel %vm115, %v110, %v114
    %v117 = vmul.f32 %v106, %v116
    %v118 = vmul.f32 %v109, %v116
    %v119 = vsub.f32 %v91, %v117
    %v120 = vsub.f32 %v94, %v118
    %v121 = vmul.f32 %v119, %v119
    %v122 = vmul.f32 %v120, %v120
    %v123 = vsel %vm103, %v121, 0.0
    %124 = vadd.xlane.f32.xlu0 %v123
    %v125 = vpop.xlane.xlu0 %124
    %v126 = vsel %vm103, %v122, 0.0
    %127 = vadd.xlane.f32.xlu0 %v126
    %v128 = vpop.xlane.xlu0 %127
    %v129 = vmul.f32 %v125, %v116
    %v130 = vmul.f32 %v128, %v116
    %v131 = vadd.f32 %v129, 1e-05
    %v132 = vadd.f32 %v130, 1e-05
    %v133 = vrsqrt.pop %v131
    %v134 = vmul.f32 %v133, %v131
    %v135 = vmul.f32 %v134, %v133
    %v136 = vmul.f32 0.5, %v135
    %v137 = vsub.f32 1.5, %v136
    %v138 = vmul.f32 %v133, %v137
    %vm139 = vweird.f32 %v131
    %vm140 = vweird.f32 %v133
    %vm141 = vmor %vm139, %vm140
    %v142 = vsel %vm141, %v133, %v138
    %v143 = vrsqrt.pop %v132
    %v144 = vmul.f32 %v143, %v132
    %v145 = vmul.f32 %v144, %v143
    %v146 = vmul.f32 0.5, %v145
    %v147 = vsub.f32 1.5, %v146
    %v148 = vmul.f32 %v143, %v147
    %vm149 = vweird.f32 %v132
    %vm150 = vweird.f32 %v143
    %vm151 = vmor %vm149, %vm150
    %v152 = vsel %vm151, %v143, %v148
    %v153 = vmul.f32 %v119, %v142
    %v154 = vmul.f32 %v120, %v152
    %v156 = vperm.slane %v100, 0
    %v158 = vmul.f32 %v153, %v156
    %v159 = vmul.f32 %v154, %v156
    %v161 = vperm.slane %v102, 0
    %v163 = vadd.f32 %v158, %v161
    %v164 = vadd.f32 %v159, %v161
    %v165 = vld [vmem:[%s4] sm:$0xff]
    %v166 = vld [vmem:[%s4 + $0x8] sm:$0xff]
    %v167 = vld [vmem:[%s4 + $0x10] sm:$0xff]
    %v168 = vld [vmem:[%s4 + $0x18] sm:$0xff]
    %v169 = vld [vmem:[%s5] sm:$0x1]
    %v171 = vperm.slane %v169, 0
    %v174 = vsel %vm103, %v163, 0
    %v177 = vsel %vm103, %v164, 0
    %179 = vmatpush.msra.mxu0 0.0
    %180 = vmatpush.msra.mxu0 0.0
    %181 = vmatpush.msra.mxu0 0.0
    %182 = vmatpush.msra.mxu0 0.0
    %183 = vmatpush.msra.mxu0 0.0
    %184 = vmatpush.msra.mxu0 0.0
    %185 = vmatpush.msra.mxu0 0.0
    %186 = vmatpush.msra.mxu0 0.0
    %187 = vmatpush.msra.mxu0 0.0
    %188 = vmatpush.msra.mxu0 0.0
    %189 = vmatpush.msra.mxu0 0.0
    %190 = vmatpush.msra.mxu0 0.0
    %191 = vmatpush.msra.mxu0 %v168
    %192 = vmatpush.msra.mxu0 %v167
    %193 = vmatpush.msra.mxu0 %v166
    %194 = vmatpush.msra.mxu0 %v165
    %195 = vmatmul.f32.gmra.mxu0 %v174
    %v196 = vpop.f32.mrf.mxu0
    %v197 = vadd.f32 %v171, %v196
    %198 = vmatmul.f32.gmra.mxu0 %v177
    %v199 = vpop.f32.mrf.mxu0
    %v200 = vadd.f32 %v171, %v199
    %201 = vdwg.mxu0
    %s202 = scalar_lea.vmem %s4, 128
    %v203 = vld [vmem:[%s202] sm:$0xff]
    %v204 = vld [vmem:[%s202 + $0x8] sm:$0xff]
    %v205 = vld [vmem:[%s202 + $0x10] sm:$0xff]
    %v206 = vld [vmem:[%s202 + $0x18] sm:$0xff]
    %s207 = scalar_lea.vmem %s5, 4
    %v208 = vld [vmem:[%s207] sm:$0x1]
    %v210 = vperm.slane %v208, 0
    %212 = vmatpush.msra.mxu0 0.0
    %213 = vmatpush.msra.mxu0 0.0
    %214 = vmatpush.msra.mxu0 0.0
    %215 = vmatpush.msra.mxu0 0.0
    %216 = vmatpush.msra.mxu0 0.0
    %217 = vmatpush.msra.mxu0 0.0
    %218 = vmatpush.msra.mxu0 0.0
    %219 = vmatpush.msra.mxu0 0.0
    %220 = vmatpush.msra.mxu0 0.0
    %221 = vmatpush.msra.mxu0 0.0
    %222 = vmatpush.msra.mxu0 0.0
    %223 = vmatpush.msra.mxu0 0.0
    %224 = vmatpush.msra.mxu0 %v206
    %225 = vmatpush.msra.mxu0 %v205
    %226 = vmatpush.msra.mxu0 %v204
    %227 = vmatpush.msra.mxu0 %v203
    %228 = vmatmul.f32.gmra.mxu0 %v174
    %v229 = vpop.f32.mrf.mxu0
    %v230 = vadd.f32 %v210, %v229
    %231 = vmatmul.f32.gmra.mxu0 %v177
    %v232 = vpop.f32.mrf.mxu0
    %v233 = vadd.f32 %v210, %v232
    %234 = vdwg.mxu0
    %s235 = scalar_lea.vmem %s4, 256
    %v236 = vld [vmem:[%s235] sm:$0xff]
    %v237 = vld [vmem:[%s235 + $0x8] sm:$0xff]
    %v238 = vld [vmem:[%s235 + $0x10] sm:$0xff]
    %v239 = vld [vmem:[%s235 + $0x18] sm:$0xff]
    %s240 = scalar_lea.vmem %s5, 8
    %v241 = vld [vmem:[%s240] sm:$0x1]
    %v243 = vperm.slane %v241, 0
    %245 = vmatpush.msra.mxu0 0.0
    %246 = vmatpush.msra.mxu0 0.0
    %247 = vmatpush.msra.mxu0 0.0
    %248 = vmatpush.msra.mxu0 0.0
    %249 = vmatpush.msra.mxu0 0.0
    %250 = vmatpush.msra.mxu0 0.0
    %251 = vmatpush.msra.mxu0 0.0
    %252 = vmatpush.msra.mxu0 0.0
    %253 = vmatpush.msra.mxu0 0.0
    %254 = vmatpush.msra.mxu0 0.0
    %255 = vmatpush.msra.mxu0 0.0
    %256 = vmatpush.msra.mxu0 0.0
    %257 = vmatpush.msra.mxu0 %v239
    %258 = vmatpush.msra.mxu0 %v238
    %259 = vmatpush.msra.mxu0 %v237
    %260 = vmatpush.msra.mxu0 %v236
    %261 = vmatmul.f32.gmra.mxu0 %v174
    %v262 = vpop.f32.mrf.mxu0
    %v263 = vadd.f32 %v243, %v262
    %264 = vmatmul.f32.gmra.mxu0 %v177
    %v265 = vpop.f32.mrf.mxu0
    %v266 = vadd.f32 %v243, %v265
    %267 = vdwg.mxu0
    %vm268 = vcmask 64512
    %v270 = vsel %vm268, %v197, 0
    %v273 = vsel %vm268, %v200, 0
    %v276 = vsel %vm268, %v230, 0
    %v279 = vsel %vm268, %v233, 0
    %281 = vmatpush.xpose.msra.mxu0 0.0
    %282 = vmatpush.xpose.msra.mxu0 0.0
    %283 = vmatpush.xpose.msra.mxu0 0.0
    %284 = vmatpush.xpose.msra.mxu0 0.0
    %285 = vmatpush.xpose.msra.mxu0 0.0
    %286 = vmatpush.xpose.msra.mxu0 0.0
    %287 = vmatpush.xpose.msra.mxu0 0.0
    %288 = vmatpush.xpose.msra.mxu0 0.0
    %289 = vmatpush.xpose.msra.mxu0 0.0
    %290 = vmatpush.xpose.msra.mxu0 0.0
    %291 = vmatpush.xpose.msra.mxu0 0.0
    %292 = vmatpush.xpose.msra.mxu0 0.0
    %293 = vmatpush.xpose.msra.mxu0 0.0
    %294 = vmatpush.xpose.msra.mxu0 0.0
    %295 = vmatpush.xpose.msra.mxu0 %v279
    %296 = vmatpush.xpose.msra.mxu0 %v276
    %297 = vmatmul.f32.gmra.mxu0 %v270
    %v298 = vpop.f32.mrf.mxu0
    %v299 = vadd.f32 0.0, %v298
    %300 = vmatmul.f32.gmra.mxu0 %v273
    %v301 = vpop.f32.mrf.mxu0
    %v302 = vadd.f32 0.0, %v301
    %303 = vdwg.mxu0
    %v304 = vsel %vm98, %v299, -100000.0
    %v305 = vsel %vm99, %v302, -100000.0
    %vm306 = vcmask 130048
    %v307 = vsel %vm306, %v304, -inf
    %308 = vmax.xlane.f32.xlu0 %v307
    %v309 = vpop.xlane.xlu0 %308
    %v310 = vsel %vm306, %v305, -inf
    %311 = vmax.xlane.f32.xlu0 %v310
    %v312 = vpop.xlane.xlu0 %311
    %v313 = vsub.f32 %v304, %v309
    %v314 = vsub.f32 %v305, %v312
    %v315 = vmul.f32 %v313, 1.442695
    %v316 = vpow.pop %v315
    %v317 = vmul.f32 %v314, 1.442695
    %v318 = vpow.pop %v317
    %v319 = vsel %vm306, %v316, 0.0
    %320 = vadd.xlane.f32.xlu0 %v319
    %v321 = vpop.xlane.xlu0 %320
    %v322 = vsel %vm306, %v318, 0.0
    %323 = vadd.xlane.f32.xlu0 %v322
    %v324 = vpop.xlane.xlu0 %323
    %v325 = vrcp.pop %v321
    %v326 = vmul.f32 %v321, %v325
    %v327 = vsub.f32 1.0, %v326
    %v328 = vmul.f32 %v325, %v327
    %v329 = vadd.f32 %v325, %v328
    %vm330 = vweird.f32 %v321
    %vm331 = vweird.f32 %v325
    %vm332 = vmor %vm330, %vm331
    %v333 = vsel %vm332, %v325, %v329
    %v334 = vand.u32 2147483647, %v321
    %vm335 = vcmp.eq.f32.partialorder %v334, 8.507059e+37
    %v336 = vand.u32 %v321, 2147483648
    %v337 = vor.u32 1.1754944e-38, %v336
    %v338 = vsel %vm335, %v337, %v333
    %v339 = vmul.f32 %v316, %v338
    %v340 = vrcp.pop %v324
    %v341 = vmul.f32 %v324, %v340
    %v342 = vsub.f32 1.0, %v341
    %v343 = vmul.f32 %v340, %v342
    %v344 = vadd.f32 %v340, %v343
    %vm345 = vweird.f32 %v324
    %vm346 = vweird.f32 %v340
    %vm347 = vmor %vm345, %vm346
    %v348 = vsel %vm347, %v340, %v344
    %v349 = vand.u32 2147483647, %v324
    %vm350 = vcmp.eq.f32.partialorder %v349, 8.507059e+37
    %v351 = vand.u32 %v324, 2147483648
    %v352 = vor.u32 1.1754944e-38, %v351
    %v353 = vsel %vm350, %v352, %v348
    %v354 = vmul.f32 %v318, %v353
    %v356 = vsel %vm306, %v339, 0
    %v359 = vsel %vm306, %v354, 0
    %361 = vmatpush.msra.mxu0 0.0
    %362 = vmatpush.msra.mxu0 0.0
    %363 = vmatpush.msra.mxu0 0.0
    %364 = vmatpush.msra.mxu0 0.0
    %365 = vmatpush.msra.mxu0 0.0
    %366 = vmatpush.msra.mxu0 0.0
    %367 = vmatpush.msra.mxu0 0.0
    %368 = vmatpush.msra.mxu0 0.0
    %369 = vmatpush.msra.mxu0 0.0
    %370 = vmatpush.msra.mxu0 0.0
    %371 = vmatpush.msra.mxu0 0.0
    %372 = vmatpush.msra.mxu0 0.0
    %373 = vmatpush.msra.mxu0 0.0
    %374 = vmatpush.msra.mxu0 0.0
    %375 = vmatpush.msra.mxu0 %v266
    %376 = vmatpush.msra.mxu0 %v263
    %377 = vmatmul.f32.gmra.mxu0 %v356
    %v378 = vpop.f32.mrf.mxu0
    %v379 = vadd.f32 0.0, %v378
    %380 = vmatmul.f32.gmra.mxu0 %v359
    %v381 = vpop.f32.mrf.mxu0
    %v382 = vadd.f32 0.0, %v381
    %383 = vdwg.mxu0
    %v384 = vld [vmem:[%s6] sm:$0xff]
    %s385 = scalar_lea.vmem %s4, 32
    %v386 = vld [vmem:[%s385] sm:$0xff]
    %v387 = vld [vmem:[%s385 + $0x8] sm:$0xff]
    %v388 = vld [vmem:[%s385 + $0x10] sm:$0xff]
    %v389 = vld [vmem:[%s385 + $0x18] sm:$0xff]
    %s390 = scalar_lea.vmem %s5, 1
    %v391 = vld [vmem:[%s390] sm:$0x1]
    %v393 = vperm.slane %v391, 0
    %395 = vmatpush.msra.mxu0 0.0
    %396 = vmatpush.msra.mxu0 0.0
    %397 = vmatpush.msra.mxu0 0.0
    %398 = vmatpush.msra.mxu0 0.0
    %399 = vmatpush.msra.mxu0 0.0
    %400 = vmatpush.msra.mxu0 0.0
    %401 = vmatpush.msra.mxu0 0.0
    %402 = vmatpush.msra.mxu0 0.0
    %403 = vmatpush.msra.mxu0 0.0
    %404 = vmatpush.msra.mxu0 0.0
    %405 = vmatpush.msra.mxu0 0.0
    %406 = vmatpush.msra.mxu0 0.0
    %407 = vmatpush.msra.mxu0 %v389
    %408 = vmatpush.msra.mxu0 %v388
    %409 = vmatpush.msra.mxu0 %v387
    %410 = vmatpush.msra.mxu0 %v386
    %411 = vmatmul.f32.gmra.mxu0 %v174
    %v412 = vpop.f32.mrf.mxu0
    %v413 = vadd.f32 %v393, %v412
    %414 = vmatmul.f32.gmra.mxu0 %v177
    %v415 = vpop.f32.mrf.mxu0
    %v416 = vadd.f32 %v393, %v415
    %417 = vdwg.mxu0
    %s418 = scalar_lea.vmem %s4, 160
    %v419 = vld [vmem:[%s418] sm:$0xff]
    %v420 = vld [vmem:[%s418 + $0x8] sm:$0xff]
    %v421 = vld [vmem:[%s418 + $0x10] sm:$0xff]
    %v422 = vld [vmem:[%s418 + $0x18] sm:$0xff]
    %s423 = scalar_lea.vmem %s5, 5
    %v424 = vld [vmem:[%s423] sm:$0x1]
    %v426 = vperm.slane %v424, 0
    %428 = vmatpush.msra.mxu0 0.0
    %429 = vmatpush.msra.mxu0 0.0
    %430 = vmatpush.msra.mxu0 0.0
    %431 = vmatpush.msra.mxu0 0.0
    %432 = vmatpush.msra.mxu0 0.0
    %433 = vmatpush.msra.mxu0 0.0
    %434 = vmatpush.msra.mxu0 0.0
    %435 = vmatpush.msra.mxu0 0.0
    %436 = vmatpush.msra.mxu0 0.0
    %437 = vmatpush.msra.mxu0 0.0
    %438 = vmatpush.msra.mxu0 0.0
    %439 = vmatpush.msra.mxu0 0.0
    %440 = vmatpush.msra.mxu0 %v422
    %441 = vmatpush.msra.mxu0 %v421
    %442 = vmatpush.msra.mxu0 %v420
    %443 = vmatpush.msra.mxu0 %v419
    %444 = vmatmul.f32.gmra.mxu0 %v174
    %v445 = vpop.f32.mrf.mxu0
    %v446 = vadd.f32 %v426, %v445
    %447 = vmatmul.f32.gmra.mxu0 %v177
    %v448 = vpop.f32.mrf.mxu0
    %v449 = vadd.f32 %v426, %v448
    %450 = vdwg.mxu0
    %s451 = scalar_lea.vmem %s4, 288
    %v452 = vld [vmem:[%s451] sm:$0xff]
    %v453 = vld [vmem:[%s451 + $0x8] sm:$0xff]
    %v454 = vld [vmem:[%s451 + $0x10] sm:$0xff]
    %v455 = vld [vmem:[%s451 + $0x18] sm:$0xff]
    %s456 = scalar_lea.vmem %s5, 9
    %v457 = vld [vmem:[%s456] sm:$0x1]
    %v459 = vperm.slane %v457, 0
    %461 = vmatpush.msra.mxu0 0.0
    %462 = vmatpush.msra.mxu0 0.0
    %463 = vmatpush.msra.mxu0 0.0
    %464 = vmatpush.msra.mxu0 0.0
    %465 = vmatpush.msra.mxu0 0.0
    %466 = vmatpush.msra.mxu0 0.0
    %467 = vmatpush.msra.mxu0 0.0
    %468 = vmatpush.msra.mxu0 0.0
    %469 = vmatpush.msra.mxu0 0.0
    %470 = vmatpush.msra.mxu0 0.0
    %471 = vmatpush.msra.mxu0 0.0
    %472 = vmatpush.msra.mxu0 0.0
    %473 = vmatpush.msra.mxu0 %v455
    %474 = vmatpush.msra.mxu0 %v454
    %475 = vmatpush.msra.mxu0 %v453
    %476 = vmatpush.msra.mxu0 %v452
    %477 = vmatmul.f32.gmra.mxu0 %v174
    %v478 = vpop.f32.mrf.mxu0
    %v479 = vadd.f32 %v459, %v478
    %480 = vmatmul.f32.gmra.mxu0 %v177
    %v481 = vpop.f32.mrf.mxu0
    %v482 = vadd.f32 %v459, %v481
    %483 = vdwg.mxu0
    %v485 = vsel %vm268, %v413, 0
    %v488 = vsel %vm268, %v416, 0
    %v491 = vsel %vm268, %v446, 0
    %v494 = vsel %vm268, %v449, 0
    %496 = vmatpush.xpose.msra.mxu0 0.0
    %497 = vmatpush.xpose.msra.mxu0 0.0
    %498 = vmatpush.xpose.msra.mxu0 0.0
    %499 = vmatpush.xpose.msra.mxu0 0.0
    %500 = vmatpush.xpose.msra.mxu0 0.0
    %501 = vmatpush.xpose.msra.mxu0 0.0
    %502 = vmatpush.xpose.msra.mxu0 0.0
    %503 = vmatpush.xpose.msra.mxu0 0.0
    %504 = vmatpush.xpose.msra.mxu0 0.0
    %505 = vmatpush.xpose.msra.mxu0 0.0
    %506 = vmatpush.xpose.msra.mxu0 0.0
    %507 = vmatpush.xpose.msra.mxu0 0.0
    %508 = vmatpush.xpose.msra.mxu0 0.0
    %509 = vmatpush.xpose.msra.mxu0 0.0
    %510 = vmatpush.xpose.msra.mxu0 %v494
    %511 = vmatpush.xpose.msra.mxu0 %v491
    %512 = vmatmul.f32.gmra.mxu0 %v485
    %v513 = vpop.f32.mrf.mxu0
    %v514 = vadd.f32 0.0, %v513
    %515 = vmatmul.f32.gmra.mxu0 %v488
    %v516 = vpop.f32.mrf.mxu0
    %v517 = vadd.f32 0.0, %v516
    %518 = vdwg.mxu0
    %v519 = vsel %vm98, %v514, -100000.0
    %v520 = vsel %vm99, %v517, -100000.0
    %v521 = vsel %vm306, %v519, -inf
    %522 = vmax.xlane.f32.xlu0 %v521
    %v523 = vpop.xlane.xlu0 %522
    %v524 = vsel %vm306, %v520, -inf
    %525 = vmax.xlane.f32.xlu0 %v524
    %v526 = vpop.xlane.xlu0 %525
    %v527 = vsub.f32 %v519, %v523
    %v528 = vsub.f32 %v520, %v526
    %v529 = vmul.f32 %v527, 1.442695
    %v530 = vpow.pop %v529
    %v531 = vmul.f32 %v528, 1.442695
    %v532 = vpow.pop %v531
    %v533 = vsel %vm306, %v530, 0.0
    %534 = vadd.xlane.f32.xlu0 %v533
    %v535 = vpop.xlane.xlu0 %534
    %v536 = vsel %vm306, %v532, 0.0
    %537 = vadd.xlane.f32.xlu0 %v536
    %v538 = vpop.xlane.xlu0 %537
    %v539 = vrcp.pop %v535
    %v540 = vmul.f32 %v535, %v539
    %v541 = vsub.f32 1.0, %v540
    %v542 = vmul.f32 %v539, %v541
    %v543 = vadd.f32 %v539, %v542
    %vm544 = vweird.f32 %v535
    %vm545 = vweird.f32 %v539
    %vm546 = vmor %vm544, %vm545
    %v547 = vsel %vm546, %v539, %v543
    %v548 = vand.u32 2147483647, %v535
    %vm549 = vcmp.eq.f32.partialorder %v548, 8.507059e+37
    %v550 = vand.u32 %v535, 2147483648
    %v551 = vor.u32 1.1754944e-38, %v550
    %v552 = vsel %vm549, %v551, %v547
    %v553 = vmul.f32 %v530, %v552
    %v554 = vrcp.pop %v538
    %v555 = vmul.f32 %v538, %v554
    %v556 = vsub.f32 1.0, %v555
    %v557 = vmul.f32 %v554, %v556
    %v558 = vadd.f32 %v554, %v557
    %vm559 = vweird.f32 %v538
    %vm560 = vweird.f32 %v554
    %vm561 = vmor %vm559, %vm560
    %v562 = vsel %vm561, %v554, %v558
    %v563 = vand.u32 2147483647, %v538
    %vm564 = vcmp.eq.f32.partialorder %v563, 8.507059e+37
    %v565 = vand.u32 %v538, 2147483648
    %v566 = vor.u32 1.1754944e-38, %v565
    %v567 = vsel %vm564, %v566, %v562
    %v568 = vmul.f32 %v532, %v567
    %v570 = vsel %vm306, %v553, 0
    %v573 = vsel %vm306, %v568, 0
    %575 = vmatpush.msra.mxu0 0.0
    %576 = vmatpush.msra.mxu0 0.0
    %577 = vmatpush.msra.mxu0 0.0
    %578 = vmatpush.msra.mxu0 0.0
    %579 = vmatpush.msra.mxu0 0.0
    %580 = vmatpush.msra.mxu0 0.0
    %581 = vmatpush.msra.mxu0 0.0
    %582 = vmatpush.msra.mxu0 0.0
    %583 = vmatpush.msra.mxu0 0.0
    %584 = vmatpush.msra.mxu0 0.0
    %585 = vmatpush.msra.mxu0 0.0
    %586 = vmatpush.msra.mxu0 0.0
    %587 = vmatpush.msra.mxu0 0.0
    %588 = vmatpush.msra.mxu0 0.0
    %589 = vmatpush.msra.mxu0 %v482
    %590 = vmatpush.msra.mxu0 %v479
    %591 = vmatmul.f32.gmra.mxu0 %v570
    %v592 = vpop.f32.mrf.mxu0
    %v593 = vadd.f32 0.0, %v592
    %594 = vmatmul.f32.gmra.mxu0 %v573
    %v595 = vpop.f32.mrf.mxu0
    %v596 = vadd.f32 0.0, %v595
    %597 = vdwg.mxu0
    %s598 = scalar_lea.vmem %s6, 8
    %v599 = vld [vmem:[%s598] sm:$0xff]
    %v601 = vsel %vm268, %v593, 0
    %v604 = vsel %vm268, %v596, 0
    %606 = vmatpush.msra.mxu0 0.0
    %607 = vmatpush.msra.mxu0 0.0
    %608 = vmatpush.msra.mxu0 0.0
    %609 = vmatpush.msra.mxu0 0.0
    %610 = vmatpush.msra.mxu0 0.0
    %611 = vmatpush.msra.mxu0 0.0
    %612 = vmatpush.msra.mxu0 0.0
    %613 = vmatpush.msra.mxu0 0.0
    %614 = vmatpush.msra.mxu0 0.0
    %615 = vmatpush.msra.mxu0 0.0
    %616 = vmatpush.msra.mxu0 0.0
    %617 = vmatpush.msra.mxu0 0.0
    %618 = vmatpush.msra.mxu0 0.0
    %619 = vmatpush.msra.mxu0 0.0
    %620 = vmatpush.msra.mxu0 0.0
    %621 = vmatpush.msra.mxu0 %v599
    %622 = vmatmul.f32.gmra.mxu0 %v601
    %v623 = vpop.f32.mrf.mxu0
    %v624 = vadd.f32 0.0, %v623
    %625 = vmatmul.f32.gmra.mxu0 %v604
    %v626 = vpop.f32.mrf.mxu0
    %v627 = vadd.f32 0.0, %v626
    %628 = vdwg.mxu0
    %v630 = vsel %vm268, %v379, 0
    %v633 = vsel %vm268, %v382, 0
    %635 = vmatpush.msra.mxu0 0.0
    %636 = vmatpush.msra.mxu0 0.0
    %637 = vmatpush.msra.mxu0 0.0
    %638 = vmatpush.msra.mxu0 0.0
    %639 = vmatpush.msra.mxu0 0.0
    %640 = vmatpush.msra.mxu0 0.0
    %641 = vmatpush.msra.mxu0 0.0
    %642 = vmatpush.msra.mxu0 0.0
    %643 = vmatpush.msra.mxu0 0.0
    %644 = vmatpush.msra.mxu0 0.0
    %645 = vmatpush.msra.mxu0 0.0
    %646 = vmatpush.msra.mxu0 0.0
    %647 = vmatpush.msra.mxu0 0.0
    %648 = vmatpush.msra.mxu0 0.0
    %649 = vmatpush.msra.mxu0 0.0
    %650 = vmatpush.msra.mxu0 %v384
    %651 = vmatmul.f32.gmra.mxu0 %v630
    %v652 = vpop.f32.mrf.mxu0
    %v653 = vadd.f32 %v624, %v652
    %654 = vmatmul.f32.gmra.mxu0 %v633
    %v655 = vpop.f32.mrf.mxu0
    %v656 = vadd.f32 %v627, %v655
    %657 = vdwg.mxu0
    %s658 = scalar_lea.vmem %s4, 64
    %v659 = vld [vmem:[%s658] sm:$0xff]
    %v660 = vld [vmem:[%s658 + $0x8] sm:$0xff]
    %v661 = vld [vmem:[%s658 + $0x10] sm:$0xff]
    %v662 = vld [vmem:[%s658 + $0x18] sm:$0xff]
    %s663 = scalar_lea.vmem %s5, 2
    %v664 = vld [vmem:[%s663] sm:$0x1]
    %v666 = vperm.slane %v664, 0
    %668 = vmatpush.msra.mxu0 0.0
    %669 = vmatpush.msra.mxu0 0.0
    %670 = vmatpush.msra.mxu0 0.0
    %671 = vmatpush.msra.mxu0 0.0
    %672 = vmatpush.msra.mxu0 0.0
    %673 = vmatpush.msra.mxu0 0.0
    %674 = vmatpush.msra.mxu0 0.0
    %675 = vmatpush.msra.mxu0 0.0
    %676 = vmatpush.msra.mxu0 0.0
    %677 = vmatpush.msra.mxu0 0.0
    %678 = vmatpush.msra.mxu0 0.0
    %679 = vmatpush.msra.mxu0 0.0
    %680 = vmatpush.msra.mxu0 %v662
    %681 = vmatpush.msra.mxu0 %v661
    %682 = vmatpush.msra.mxu0 %v660
    %683 = vmatpush.msra.mxu0 %v659
    %684 = vmatmul.f32.gmra.mxu0 %v174
    %v685 = vpop.f32.mrf.mxu0
    %v686 = vadd.f32 %v666, %v685
    %687 = vmatmul.f32.gmra.mxu0 %v177
    %v688 = vpop.f32.mrf.mxu0
    %v689 = vadd.f32 %v666, %v688
    %690 = vdwg.mxu0
    %s691 = scalar_lea.vmem %s4, 192
    %v692 = vld [vmem:[%s691] sm:$0xff]
    %v693 = vld [vmem:[%s691 + $0x8] sm:$0xff]
    %v694 = vld [vmem:[%s691 + $0x10] sm:$0xff]
    %v695 = vld [vmem:[%s691 + $0x18] sm:$0xff]
    %s696 = scalar_lea.vmem %s5, 6
    %v697 = vld [vmem:[%s696] sm:$0x1]
    %v699 = vperm.slane %v697, 0
    %701 = vmatpush.msra.mxu0 0.0
    %702 = vmatpush.msra.mxu0 0.0
    %703 = vmatpush.msra.mxu0 0.0
    %704 = vmatpush.msra.mxu0 0.0
    %705 = vmatpush.msra.mxu0 0.0
    %706 = vmatpush.msra.mxu0 0.0
    %707 = vmatpush.msra.mxu0 0.0
    %708 = vmatpush.msra.mxu0 0.0
    %709 = vmatpush.msra.mxu0 0.0
    %710 = vmatpush.msra.mxu0 0.0
    %711 = vmatpush.msra.mxu0 0.0
    %712 = vmatpush.msra.mxu0 0.0
    %713 = vmatpush.msra.mxu0 %v695
    %714 = vmatpush.msra.mxu0 %v694
    %715 = vmatpush.msra.mxu0 %v693
    %716 = vmatpush.msra.mxu0 %v692
    %717 = vmatmul.f32.gmra.mxu0 %v174
    %v718 = vpop.f32.mrf.mxu0
    %v719 = vadd.f32 %v699, %v718
    %720 = vmatmul.f32.gmra.mxu0 %v177
    %v721 = vpop.f32.mrf.mxu0
    %v722 = vadd.f32 %v699, %v721
    %723 = vdwg.mxu0
    %s724 = scalar_lea.vmem %s4, 320
    %v725 = vld [vmem:[%s724] sm:$0xff]
    %v726 = vld [vmem:[%s724 + $0x8] sm:$0xff]
    %v727 = vld [vmem:[%s724 + $0x10] sm:$0xff]
    %v728 = vld [vmem:[%s724 + $0x18] sm:$0xff]
    %s729 = scalar_lea.vmem %s5, 10
    %v730 = vld [vmem:[%s729] sm:$0x1]
    %v732 = vperm.slane %v730, 0
    %734 = vmatpush.msra.mxu0 0.0
    %735 = vmatpush.msra.mxu0 0.0
    %736 = vmatpush.msra.mxu0 0.0
    %737 = vmatpush.msra.mxu0 0.0
    %738 = vmatpush.msra.mxu0 0.0
    %739 = vmatpush.msra.mxu0 0.0
    %740 = vmatpush.msra.mxu0 0.0
    %741 = vmatpush.msra.mxu0 0.0
    %742 = vmatpush.msra.mxu0 0.0
    %743 = vmatpush.msra.mxu0 0.0
    %744 = vmatpush.msra.mxu0 0.0
    %745 = vmatpush.msra.mxu0 0.0
    %746 = vmatpush.msra.mxu0 %v728
    %747 = vmatpush.msra.mxu0 %v727
    %748 = vmatpush.msra.mxu0 %v726
    %749 = vmatpush.msra.mxu0 %v725
    %750 = vmatmul.f32.gmra.mxu0 %v174
    %v751 = vpop.f32.mrf.mxu0
    %v752 = vadd.f32 %v732, %v751
    %753 = vmatmul.f32.gmra.mxu0 %v177
    %v754 = vpop.f32.mrf.mxu0
    %v755 = vadd.f32 %v732, %v754
    %756 = vdwg.mxu0
    %v758 = vsel %vm268, %v686, 0
    %v761 = vsel %vm268, %v689, 0
    %v764 = vsel %vm268, %v719, 0
    %v767 = vsel %vm268, %v722, 0
    %769 = vmatpush.xpose.msra.mxu0 0.0
    %770 = vmatpush.xpose.msra.mxu0 0.0
    %771 = vmatpush.xpose.msra.mxu0 0.0
    %772 = vmatpush.xpose.msra.mxu0 0.0
    %773 = vmatpush.xpose.msra.mxu0 0.0
    %774 = vmatpush.xpose.msra.mxu0 0.0
    %775 = vmatpush.xpose.msra.mxu0 0.0
    %776 = vmatpush.xpose.msra.mxu0 0.0
    %777 = vmatpush.xpose.msra.mxu0 0.0
    %778 = vmatpush.xpose.msra.mxu0 0.0
    %779 = vmatpush.xpose.msra.mxu0 0.0
    %780 = vmatpush.xpose.msra.mxu0 0.0
    %781 = vmatpush.xpose.msra.mxu0 0.0
    %782 = vmatpush.xpose.msra.mxu0 0.0
    %783 = vmatpush.xpose.msra.mxu0 %v767
    %784 = vmatpush.xpose.msra.mxu0 %v764
    %785 = vmatmul.f32.gmra.mxu0 %v758
    %v786 = vpop.f32.mrf.mxu0
    %v787 = vadd.f32 0.0, %v786
    %788 = vmatmul.f32.gmra.mxu0 %v761
    %v789 = vpop.f32.mrf.mxu0
    %v790 = vadd.f32 0.0, %v789
    %791 = vdwg.mxu0
    %v792 = vsel %vm98, %v787, -100000.0
    %v793 = vsel %vm99, %v790, -100000.0
    %v794 = vsel %vm306, %v792, -inf
    %795 = vmax.xlane.f32.xlu0 %v794
    %v796 = vpop.xlane.xlu0 %795
    %v797 = vsel %vm306, %v793, -inf
    %798 = vmax.xlane.f32.xlu0 %v797
    %v799 = vpop.xlane.xlu0 %798
    %v800 = vsub.f32 %v792, %v796
    %v801 = vsub.f32 %v793, %v799
    %v802 = vmul.f32 %v800, 1.442695
    %v803 = vpow.pop %v802
    %v804 = vmul.f32 %v801, 1.442695
    %v805 = vpow.pop %v804
    %v806 = vsel %vm306, %v803, 0.0
    %807 = vadd.xlane.f32.xlu0 %v806
    %v808 = vpop.xlane.xlu0 %807
    %v809 = vsel %vm306, %v805, 0.0
    %810 = vadd.xlane.f32.xlu0 %v809
    %v811 = vpop.xlane.xlu0 %810
    %v812 = vrcp.pop %v808
    %v813 = vmul.f32 %v808, %v812
    %v814 = vsub.f32 1.0, %v813
    %v815 = vmul.f32 %v812, %v814
    %v816 = vadd.f32 %v812, %v815
    %vm817 = vweird.f32 %v808
    %vm818 = vweird.f32 %v812
    %vm819 = vmor %vm817, %vm818
    %v820 = vsel %vm819, %v812, %v816
    %v821 = vand.u32 2147483647, %v808
    %vm822 = vcmp.eq.f32.partialorder %v821, 8.507059e+37
    %v823 = vand.u32 %v808, 2147483648
    %v824 = vor.u32 1.1754944e-38, %v823
    %v825 = vsel %vm822, %v824, %v820
    %v826 = vmul.f32 %v803, %v825
    %v827 = vrcp.pop %v811
    %v828 = vmul.f32 %v811, %v827
    %v829 = vsub.f32 1.0, %v828
    %v830 = vmul.f32 %v827, %v829
    %v831 = vadd.f32 %v827, %v830
    %vm832 = vweird.f32 %v811
    %vm833 = vweird.f32 %v827
    %vm834 = vmor %vm832, %vm833
    %v835 = vsel %vm834, %v827, %v831
    %v836 = vand.u32 2147483647, %v811
    %vm837 = vcmp.eq.f32.partialorder %v836, 8.507059e+37
    %v838 = vand.u32 %v811, 2147483648
    %v839 = vor.u32 1.1754944e-38, %v838
    %v840 = vsel %vm837, %v839, %v835
    %v841 = vmul.f32 %v805, %v840
    %v843 = vsel %vm306, %v826, 0
    %v846 = vsel %vm306, %v841, 0
    %848 = vmatpush.msra.mxu0 0.0
    %849 = vmatpush.msra.mxu0 0.0
    %850 = vmatpush.msra.mxu0 0.0
    %851 = vmatpush.msra.mxu0 0.0
    %852 = vmatpush.msra.mxu0 0.0
    %853 = vmatpush.msra.mxu0 0.0
    %854 = vmatpush.msra.mxu0 0.0
    %855 = vmatpush.msra.mxu0 0.0
    %856 = vmatpush.msra.mxu0 0.0
    %857 = vmatpush.msra.mxu0 0.0
    %858 = vmatpush.msra.mxu0 0.0
    %859 = vmatpush.msra.mxu0 0.0
    %860 = vmatpush.msra.mxu0 0.0
    %861 = vmatpush.msra.mxu0 0.0
    %862 = vmatpush.msra.mxu0 %v755
    %863 = vmatpush.msra.mxu0 %v752
    %864 = vmatmul.f32.gmra.mxu0 %v843
    %v865 = vpop.f32.mrf.mxu0
    %v866 = vadd.f32 0.0, %v865
    %867 = vmatmul.f32.gmra.mxu0 %v846
    %v868 = vpop.f32.mrf.mxu0
    %v869 = vadd.f32 0.0, %v868
    %870 = vdwg.mxu0
    %s871 = scalar_lea.vmem %s6, 16
    %v872 = vld [vmem:[%s871] sm:$0xff]
    %v874 = vsel %vm268, %v866, 0
    %v877 = vsel %vm268, %v869, 0
    %879 = vmatpush.msra.mxu0 0.0
    %880 = vmatpush.msra.mxu0 0.0
    %881 = vmatpush.msra.mxu0 0.0
    %882 = vmatpush.msra.mxu0 0.0
    %883 = vmatpush.msra.mxu0 0.0
    %884 = vmatpush.msra.mxu0 0.0
    %885 = vmatpush.msra.mxu0 0.0
    %886 = vmatpush.msra.mxu0 0.0
    %887 = vmatpush.msra.mxu0 0.0
    %888 = vmatpush.msra.mxu0 0.0
    %889 = vmatpush.msra.mxu0 0.0
    %890 = vmatpush.msra.mxu0 0.0
    %891 = vmatpush.msra.mxu0 0.0
    %892 = vmatpush.msra.mxu0 0.0
    %893 = vmatpush.msra.mxu0 0.0
    %894 = vmatpush.msra.mxu0 %v872
    %895 = vmatmul.f32.gmra.mxu0 %v874
    %v896 = vpop.f32.mrf.mxu0
    %v897 = vadd.f32 0.0, %v896
    %898 = vmatmul.f32.gmra.mxu0 %v877
    %v899 = vpop.f32.mrf.mxu0
    %v900 = vadd.f32 0.0, %v899
    %901 = vdwg.mxu0
    %v902 = vadd.f32 %v653, %v897
    %v903 = vadd.f32 %v656, %v900
    %s904 = scalar_lea.vmem %s4, 96
    %v905 = vld [vmem:[%s904] sm:$0xff]
    %v906 = vld [vmem:[%s904 + $0x8] sm:$0xff]
    %v907 = vld [vmem:[%s904 + $0x10] sm:$0xff]
    %v908 = vld [vmem:[%s904 + $0x18] sm:$0xff]
    %s909 = scalar_lea.vmem %s5, 3
    %v910 = vld [vmem:[%s909] sm:$0x1]
    %v912 = vperm.slane %v910, 0
    %914 = vmatpush.msra.mxu0 0.0
    %915 = vmatpush.msra.mxu0 0.0
    %916 = vmatpush.msra.mxu0 0.0
    %917 = vmatpush.msra.mxu0 0.0
    %918 = vmatpush.msra.mxu0 0.0
    %919 = vmatpush.msra.mxu0 0.0
    %920 = vmatpush.msra.mxu0 0.0
    %921 = vmatpush.msra.mxu0 0.0
    %922 = vmatpush.msra.mxu0 0.0
    %923 = vmatpush.msra.mxu0 0.0
    %924 = vmatpush.msra.mxu0 0.0
    %925 = vmatpush.msra.mxu0 0.0
    %926 = vmatpush.msra.mxu0 %v908
    %927 = vmatpush.msra.mxu0 %v907
    %928 = vmatpush.msra.mxu0 %v906
    %929 = vmatpush.msra.mxu0 %v905
    %930 = vmatmul.f32.gmra.mxu0 %v174
    %v931 = vpop.f32.mrf.mxu0
    %v932 = vadd.f32 %v912, %v931
    %933 = vmatmul.f32.gmra.mxu0 %v177
    %v934 = vpop.f32.mrf.mxu0
    %v935 = vadd.f32 %v912, %v934
    %936 = vdwg.mxu0
    %s937 = scalar_lea.vmem %s4, 224
    %v938 = vld [vmem:[%s937] sm:$0xff]
    %v939 = vld [vmem:[%s937 + $0x8] sm:$0xff]
    %v940 = vld [vmem:[%s937 + $0x10] sm:$0xff]
    %v941 = vld [vmem:[%s937 + $0x18] sm:$0xff]
    %s942 = scalar_lea.vmem %s5, 7
    %v943 = vld [vmem:[%s942] sm:$0x1]
    %v945 = vperm.slane %v943, 0
    %947 = vmatpush.msra.mxu0 0.0
    %948 = vmatpush.msra.mxu0 0.0
    %949 = vmatpush.msra.mxu0 0.0
    %950 = vmatpush.msra.mxu0 0.0
    %951 = vmatpush.msra.mxu0 0.0
    %952 = vmatpush.msra.mxu0 0.0
    %953 = vmatpush.msra.mxu0 0.0
    %954 = vmatpush.msra.mxu0 0.0
    %955 = vmatpush.msra.mxu0 0.0
    %956 = vmatpush.msra.mxu0 0.0
    %957 = vmatpush.msra.mxu0 0.0
    %958 = vmatpush.msra.mxu0 0.0
    %959 = vmatpush.msra.mxu0 %v941
    %960 = vmatpush.msra.mxu0 %v940
    %961 = vmatpush.msra.mxu0 %v939
    %962 = vmatpush.msra.mxu0 %v938
    %963 = vmatmul.f32.gmra.mxu0 %v174
    %v964 = vpop.f32.mrf.mxu0
    %v965 = vadd.f32 %v945, %v964
    %966 = vmatmul.f32.gmra.mxu0 %v177
    %v967 = vpop.f32.mrf.mxu0
    %v968 = vadd.f32 %v945, %v967
    %969 = vdwg.mxu0
    %s970 = scalar_lea.vmem %s4, 352
    %v971 = vld [vmem:[%s970] sm:$0xff]
    %v972 = vld [vmem:[%s970 + $0x8] sm:$0xff]
    %v973 = vld [vmem:[%s970 + $0x10] sm:$0xff]
    %v974 = vld [vmem:[%s970 + $0x18] sm:$0xff]
    %s975 = scalar_lea.vmem %s5, 11
    %v976 = vld [vmem:[%s975] sm:$0x1]
    %v978 = vperm.slane %v976, 0
    %980 = vmatpush.msra.mxu0 0.0
    %981 = vmatpush.msra.mxu0 0.0
    %982 = vmatpush.msra.mxu0 0.0
    %983 = vmatpush.msra.mxu0 0.0
    %984 = vmatpush.msra.mxu0 0.0
    %985 = vmatpush.msra.mxu0 0.0
    %986 = vmatpush.msra.mxu0 0.0
    %987 = vmatpush.msra.mxu0 0.0
    %988 = vmatpush.msra.mxu0 0.0
    %989 = vmatpush.msra.mxu0 0.0
    %990 = vmatpush.msra.mxu0 0.0
    %991 = vmatpush.msra.mxu0 0.0
    %992 = vmatpush.msra.mxu0 %v974
    %993 = vmatpush.msra.mxu0 %v973
    %994 = vmatpush.msra.mxu0 %v972
    %995 = vmatpush.msra.mxu0 %v971
    %996 = vmatmul.f32.gmra.mxu0 %v174
    %v997 = vpop.f32.mrf.mxu0
    %v998 = vadd.f32 %v978, %v997
    %999 = vmatmul.f32.gmra.mxu0 %v177
    %v1000 = vpop.f32.mrf.mxu0
    %v1001 = vadd.f32 %v978, %v1000
    %1002 = vdwg.mxu0
    %v1004 = vsel %vm268, %v932, 0
    %v1007 = vsel %vm268, %v935, 0
    %v1010 = vsel %vm268, %v965, 0
    %v1013 = vsel %vm268, %v968, 0
    %1015 = vmatpush.xpose.msra.mxu0 0.0
    %1016 = vmatpush.xpose.msra.mxu0 0.0
    %1017 = vmatpush.xpose.msra.mxu0 0.0
    %1018 = vmatpush.xpose.msra.mxu0 0.0
    %1019 = vmatpush.xpose.msra.mxu0 0.0
    %1020 = vmatpush.xpose.msra.mxu0 0.0
    %1021 = vmatpush.xpose.msra.mxu0 0.0
    %1022 = vmatpush.xpose.msra.mxu0 0.0
    %1023 = vmatpush.xpose.msra.mxu0 0.0
    %1024 = vmatpush.xpose.msra.mxu0 0.0
    %1025 = vmatpush.xpose.msra.mxu0 0.0
    %1026 = vmatpush.xpose.msra.mxu0 0.0
    %1027 = vmatpush.xpose.msra.mxu0 0.0
    %1028 = vmatpush.xpose.msra.mxu0 0.0
    %1029 = vmatpush.xpose.msra.mxu0 %v1013
    %1030 = vmatpush.xpose.msra.mxu0 %v1010
    %1031 = vmatmul.f32.gmra.mxu0 %v1004
    %v1032 = vpop.f32.mrf.mxu0
    %v1033 = vadd.f32 0.0, %v1032
    %1034 = vmatmul.f32.gmra.mxu0 %v1007
    %v1035 = vpop.f32.mrf.mxu0
    %v1036 = vadd.f32 0.0, %v1035
    %1037 = vdwg.mxu0
    %v1038 = vsel %vm98, %v1033, -100000.0
    %v1039 = vsel %vm99, %v1036, -100000.0
    %v1040 = vsel %vm306, %v1038, -inf
    %1041 = vmax.xlane.f32.xlu0 %v1040
    %v1042 = vpop.xlane.xlu0 %1041
    %v1043 = vsel %vm306, %v1039, -inf
    %1044 = vmax.xlane.f32.xlu0 %v1043
    %v1045 = vpop.xlane.xlu0 %1044
    %v1046 = vsub.f32 %v1038, %v1042
    %v1047 = vsub.f32 %v1039, %v1045
    %v1048 = vmul.f32 %v1046, 1.442695
    %v1049 = vpow.pop %v1048
    %v1050 = vmul.f32 %v1047, 1.442695
    %v1051 = vpow.pop %v1050
    %v1052 = vsel %vm306, %v1049, 0.0
    %1053 = vadd.xlane.f32.xlu0 %v1052
    %v1054 = vpop.xlane.xlu0 %1053
    %v1055 = vsel %vm306, %v1051, 0.0
    %1056 = vadd.xlane.f32.xlu0 %v1055
    %v1057 = vpop.xlane.xlu0 %1056
    %v1058 = vrcp.pop %v1054
    %v1059 = vmul.f32 %v1054, %v1058
    %v1060 = vsub.f32 1.0, %v1059
    %v1061 = vmul.f32 %v1058, %v1060
    %v1062 = vadd.f32 %v1058, %v1061
    %vm1063 = vweird.f32 %v1054
    %vm1064 = vweird.f32 %v1058
    %vm1065 = vmor %vm1063, %vm1064
    %v1066 = vsel %vm1065, %v1058, %v1062
    %v1067 = vand.u32 2147483647, %v1054
    %vm1068 = vcmp.eq.f32.partialorder %v1067, 8.507059e+37
    %v1069 = vand.u32 %v1054, 2147483648
    %v1070 = vor.u32 1.1754944e-38, %v1069
    %v1071 = vsel %vm1068, %v1070, %v1066
    %v1072 = vmul.f32 %v1049, %v1071
    %v1073 = vrcp.pop %v1057
    %v1074 = vmul.f32 %v1057, %v1073
    %v1075 = vsub.f32 1.0, %v1074
    %v1076 = vmul.f32 %v1073, %v1075
    %v1077 = vadd.f32 %v1073, %v1076
    %vm1078 = vweird.f32 %v1057
    %vm1079 = vweird.f32 %v1073
    %vm1080 = vmor %vm1078, %vm1079
    %v1081 = vsel %vm1080, %v1073, %v1077
    %v1082 = vand.u32 2147483647, %v1057
    %vm1083 = vcmp.eq.f32.partialorder %v1082, 8.507059e+37
    %v1084 = vand.u32 %v1057, 2147483648
    %v1085 = vor.u32 1.1754944e-38, %v1084
    %v1086 = vsel %vm1083, %v1085, %v1081
    %v1087 = vmul.f32 %v1051, %v1086
    %v1089 = vsel %vm306, %v1072, 0
    %v1092 = vsel %vm306, %v1087, 0
    %1094 = vmatpush.msra.mxu0 0.0
    %1095 = vmatpush.msra.mxu0 0.0
    %1096 = vmatpush.msra.mxu0 0.0
    %1097 = vmatpush.msra.mxu0 0.0
    %1098 = vmatpush.msra.mxu0 0.0
    %1099 = vmatpush.msra.mxu0 0.0
    %1100 = vmatpush.msra.mxu0 0.0
    %1101 = vmatpush.msra.mxu0 0.0
    %1102 = vmatpush.msra.mxu0 0.0
    %1103 = vmatpush.msra.mxu0 0.0
    %1104 = vmatpush.msra.mxu0 0.0
    %1105 = vmatpush.msra.mxu0 0.0
    %1106 = vmatpush.msra.mxu0 0.0
    %1107 = vmatpush.msra.mxu0 0.0
    %1108 = vmatpush.msra.mxu0 %v1001
    %1109 = vmatpush.msra.mxu0 %v998
    %1110 = vmatmul.f32.gmra.mxu0 %v1089
    %v1111 = vpop.f32.mrf.mxu0
    %v1112 = vadd.f32 0.0, %v1111
    %1113 = vmatmul.f32.gmra.mxu0 %v1092
    %v1114 = vpop.f32.mrf.mxu0
    %v1115 = vadd.f32 0.0, %v1114
    %1116 = vdwg.mxu0
    %s1117 = scalar_lea.vmem %s6, 24
    %v1118 = vld [vmem:[%s1117] sm:$0xff]
    %v1120 = vsel %vm268, %v1112, 0
    %v1123 = vsel %vm268, %v1115, 0
    %1125 = vmatpush.msra.mxu0 0.0
    %1126 = vmatpush.msra.mxu0 0.0
    %1127 = vmatpush.msra.mxu0 0.0
    %1128 = vmatpush.msra.mxu0 0.0
    %1129 = vmatpush.msra.mxu0 0.0
    %1130 = vmatpush.msra.mxu0 0.0
    %1131 = vmatpush.msra.mxu0 0.0
    %1132 = vmatpush.msra.mxu0 0.0
    %1133 = vmatpush.msra.mxu0 0.0
    %1134 = vmatpush.msra.mxu0 0.0
    %1135 = vmatpush.msra.mxu0 0.0
    %1136 = vmatpush.msra.mxu0 0.0
    %1137 = vmatpush.msra.mxu0 0.0
    %1138 = vmatpush.msra.mxu0 0.0
    %1139 = vmatpush.msra.mxu0 0.0
    %1140 = vmatpush.msra.mxu0 %v1118
    %1141 = vmatmul.f32.gmra.mxu0 %v1120
    %v1142 = vpop.f32.mrf.mxu0
    %v1143 = vadd.f32 0.0, %v1142
    %1144 = vmatmul.f32.gmra.mxu0 %v1123
    %v1145 = vpop.f32.mrf.mxu0
    %v1146 = vadd.f32 0.0, %v1145
    %1147 = vdwg.mxu0
    %v1148 = vadd.f32 %v902, %v1143
    %v1149 = vadd.f32 %v903, %v1146
    %s1150 = scalar_lea.vmem %s7, 2
    %v1151 = vld [vmem:[%s1150] sm:$0x1]
    %v1153 = vperm.slane %v1151, 0
    %v1155 = vadd.f32 %v1148, %v1153
    %v1156 = vadd.f32 %v1149, %v1153
    %s1157 = scalar_lea.vmem %s7, 3
    %v1158 = vld [vmem:[%s1157] sm:$0x1]
    %s1159 = scalar_lea.vmem %s7, 4
    %v1160 = vld [vmem:[%s1159] sm:$0x1]
    %v1161 = vsel %vm103, %v1155, 0.0
    %1162 = vadd.xlane.f32.xlu0 %v1161
    %v1163 = vpop.xlane.xlu0 %1162
    %v1164 = vsel %vm103, %v1156, 0.0
    %1165 = vadd.xlane.f32.xlu0 %v1164
    %v1166 = vpop.xlane.xlu0 %1165
    %v1167 = vmul.f32 %v1163, %v116
    %v1168 = vmul.f32 %v1166, %v116
    %v1169 = vsub.f32 %v1155, %v1167
    %v1170 = vsub.f32 %v1156, %v1168
    %v1171 = vmul.f32 %v1169, %v1169
    %v1172 = vmul.f32 %v1170, %v1170
    %v1173 = vsel %vm103, %v1171, 0.0
    %1174 = vadd.xlane.f32.xlu0 %v1173
    %v1175 = vpop.xlane.xlu0 %1174
    %v1176 = vsel %vm103, %v1172, 0.0
    %1177 = vadd.xlane.f32.xlu0 %v1176
    %v1178 = vpop.xlane.xlu0 %1177
    %v1179 = vmul.f32 %v1175, %v116
    %v1180 = vmul.f32 %v1178, %v116
    %v1181 = vadd.f32 %v1179, 1e-05
    %v1182 = vadd.f32 %v1180, 1e-05
    %v1183 = vrsqrt.pop %v1181
    %v1184 = vmul.f32 %v1183, %v1181
    %v1185 = vmul.f32 %v1184, %v1183
    %v1186 = vmul.f32 0.5, %v1185
    %v1187 = vsub.f32 1.5, %v1186
    %v1188 = vmul.f32 %v1183, %v1187
    %vm1189 = vweird.f32 %v1181
    %vm1190 = vweird.f32 %v1183
    %vm1191 = vmor %vm1189, %vm1190
    %v1192 = vsel %vm1191, %v1183, %v1188
    %v1193 = vrsqrt.pop %v1182
    %v1194 = vmul.f32 %v1193, %v1182
    %v1195 = vmul.f32 %v1194, %v1193
    %v1196 = vmul.f32 0.5, %v1195
    %v1197 = vsub.f32 1.5, %v1196
    %v1198 = vmul.f32 %v1193, %v1197
    %vm1199 = vweird.f32 %v1182
    %vm1200 = vweird.f32 %v1193
    %vm1201 = vmor %vm1199, %vm1200
    %v1202 = vsel %vm1201, %v1193, %v1198
    %v1203 = vmul.f32 %v1169, %v1192
    %v1204 = vmul.f32 %v1170, %v1202
    %v1206 = vperm.slane %v1158, 0
    %v1208 = vmul.f32 %v1203, %v1206
    %v1209 = vmul.f32 %v1204, %v1206
    %v1211 = vperm.slane %v1160, 0
    %v1213 = vadd.f32 %v1208, %v1211
    %v1214 = vadd.f32 %v1209, %v1211
    %v1215 = vld [vmem:[%s8] sm:$0xff]
    %v1216 = vld [vmem:[%s8 + $0x8] sm:$0xff]
    %v1217 = vld [vmem:[%s8 + $0x10] sm:$0xff]
    %v1218 = vld [vmem:[%s8 + $0x18] sm:$0xff]
    %v1219 = vld [vmem:[%s9] sm:$0x1]
    %v1221 = vperm.slane %v1219, 0
    %v1224 = vsel %vm103, %v1213, 0
    %v1227 = vsel %vm103, %v1214, 0
    %1229 = vmatpush.msra.mxu0 0.0
    %1230 = vmatpush.msra.mxu0 0.0
    %1231 = vmatpush.msra.mxu0 0.0
    %1232 = vmatpush.msra.mxu0 0.0
    %1233 = vmatpush.msra.mxu0 0.0
    %1234 = vmatpush.msra.mxu0 0.0
    %1235 = vmatpush.msra.mxu0 0.0
    %1236 = vmatpush.msra.mxu0 0.0
    %1237 = vmatpush.msra.mxu0 0.0
    %1238 = vmatpush.msra.mxu0 0.0
    %1239 = vmatpush.msra.mxu0 0.0
    %1240 = vmatpush.msra.mxu0 0.0
    %1241 = vmatpush.msra.mxu0 %v1218
    %1242 = vmatpush.msra.mxu0 %v1217
    %1243 = vmatpush.msra.mxu0 %v1216
    %1244 = vmatpush.msra.mxu0 %v1215
    %1245 = vmatmul.f32.gmra.mxu0 %v1224
    %v1246 = vpop.f32.mrf.mxu0
    %v1247 = vadd.f32 %v1221, %v1246
    %1248 = vmatmul.f32.gmra.mxu0 %v1227
    %v1249 = vpop.f32.mrf.mxu0
    %v1250 = vadd.f32 %v1221, %v1249
    %1251 = vdwg.mxu0
    %v1252 = vmax.f32 %v1247, 0.0
    %v1253 = vmax.f32 %v1250, 0.0
    %v1254 = vld [vmem:[%s10] sm:$0xff]
    %v1255 = vld [vmem:[%s10 + $0x8] sm:$0xff]
    %v1256 = vld [vmem:[%s10 + $0x10] sm:$0xff]
    %v1257 = vld [vmem:[%s10 + $0x18] sm:$0xff]
    %v1258 = vld [vmem:[%s10 + $0x20] sm:$0xff]
    %v1259 = vld [vmem:[%s10 + $0x28] sm:$0xff]
    %v1260 = vld [vmem:[%s10 + $0x30] sm:$0xff]
    %v1261 = vld [vmem:[%s10 + $0x38] sm:$0xff]
    %s1262 = scalar_lea.vmem %s7, 5
    %v1263 = vld [vmem:[%s1262] sm:$0x1]
    %v1265 = vperm.slane %v1263, 0
    %v1268 = vsel %vm66, %v1252, 0
    %v1271 = vsel %vm66, %v1253, 0
    %1273 = vmatpush.msra.mxu0 0.0
    %1274 = vmatpush.msra.mxu0 0.0
    %1275 = vmatpush.msra.mxu0 0.0
    %1276 = vmatpush.msra.mxu0 0.0
    %1277 = vmatpush.msra.mxu0 0.0
    %1278 = vmatpush.msra.mxu0 0.0
    %1279 = vmatpush.msra.mxu0 0.0
    %1280 = vmatpush.msra.mxu0 0.0
    %1281 = vmatpush.msra.mxu0 %v1261
    %1282 = vmatpush.msra.mxu0 %v1260
    %1283 = vmatpush.msra.mxu0 %v1259
    %1284 = vmatpush.msra.mxu0 %v1258
    %1285 = vmatpush.msra.mxu0 %v1257
    %1286 = vmatpush.msra.mxu0 %v1256
    %1287 = vmatpush.msra.mxu0 %v1255
    %1288 = vmatpush.msra.mxu0 %v1254
    %1289 = vmatmul.f32.gmra.mxu0 %v1268
    %v1290 = vpop.f32.mrf.mxu0
    %v1291 = vadd.f32 %v1265, %v1290
    %1292 = vmatmul.f32.gmra.mxu0 %v1271
    %v1293 = vpop.f32.mrf.mxu0
    %v1294 = vadd.f32 %v1265, %v1293
    %1295 = vdwg.mxu0
    %v1296 = vadd.f32 %v91, %v1291
    %v1297 = vadd.f32 %v94, %v1294
    %s1298 = scalar_lea.vmem %s7, 6
    %v1299 = vld [vmem:[%s1298] sm:$0x1]
    %s1300 = scalar_lea.vmem %s7, 7
    %v1301 = vld [vmem:[%s1300] sm:$0x1]
    %v1302 = vsel %vm103, %v1296, 0.0
    %1303 = vadd.xlane.f32.xlu0 %v1302
    %v1304 = vpop.xlane.xlu0 %1303
    %v1305 = vsel %vm103, %v1297, 0.0
    %1306 = vadd.xlane.f32.xlu0 %v1305
    %v1307 = vpop.xlane.xlu0 %1306
    %v1308 = vmul.f32 %v1304, %v116
    %v1309 = vmul.f32 %v1307, %v116
    %v1310 = vsub.f32 %v1296, %v1308
    %v1311 = vsub.f32 %v1297, %v1309
    %v1312 = vmul.f32 %v1310, %v1310
    %v1313 = vmul.f32 %v1311, %v1311
    %v1314 = vsel %vm103, %v1312, 0.0
    %1315 = vadd.xlane.f32.xlu0 %v1314
    %v1316 = vpop.xlane.xlu0 %1315
    %v1317 = vsel %vm103, %v1313, 0.0
    %1318 = vadd.xlane.f32.xlu0 %v1317
    %v1319 = vpop.xlane.xlu0 %1318
    %v1320 = vmul.f32 %v1316, %v116
    %v1321 = vmul.f32 %v1319, %v116
    %v1322 = vadd.f32 %v1320, 1e-05
    %v1323 = vadd.f32 %v1321, 1e-05
    %v1324 = vrsqrt.pop %v1322
    %v1325 = vmul.f32 %v1324, %v1322
    %v1326 = vmul.f32 %v1325, %v1324
    %v1327 = vmul.f32 0.5, %v1326
    %v1328 = vsub.f32 1.5, %v1327
    %v1329 = vmul.f32 %v1324, %v1328
    %vm1330 = vweird.f32 %v1322
    %vm1331 = vweird.f32 %v1324
    %vm1332 = vmor %vm1330, %vm1331
    %v1333 = vsel %vm1332, %v1324, %v1329
    %v1334 = vrsqrt.pop %v1323
    %v1335 = vmul.f32 %v1334, %v1323
    %v1336 = vmul.f32 %v1335, %v1334
    %v1337 = vmul.f32 0.5, %v1336
    %v1338 = vsub.f32 1.5, %v1337
    %v1339 = vmul.f32 %v1334, %v1338
    %vm1340 = vweird.f32 %v1323
    %vm1341 = vweird.f32 %v1334
    %vm1342 = vmor %vm1340, %vm1341
    %v1343 = vsel %vm1342, %v1334, %v1339
    %v1344 = vmul.f32 %v1310, %v1333
    %v1345 = vmul.f32 %v1311, %v1343
    %v1347 = vperm.slane %v1299, 0
    %v1349 = vmul.f32 %v1344, %v1347
    %v1350 = vmul.f32 %v1345, %v1347
    %v1352 = vperm.slane %v1301, 0
    %v1354 = vadd.f32 %v1349, %v1352
    %v1355 = vadd.f32 %v1350, %v1352
    %s1356 = scalar_lea.vmem %s4, 384
    %v1357 = vld [vmem:[%s1356] sm:$0xff]
    %v1358 = vld [vmem:[%s1356 + $0x8] sm:$0xff]
    %v1359 = vld [vmem:[%s1356 + $0x10] sm:$0xff]
    %v1360 = vld [vmem:[%s1356 + $0x18] sm:$0xff]
    %s1361 = scalar_lea.vmem %s5, 12
    %v1362 = vld [vmem:[%s1361] sm:$0x1]
    %v1364 = vperm.slane %v1362, 0
    %v1367 = vsel %vm103, %v1354, 0
    %v1370 = vsel %vm103, %v1355, 0
    %1372 = vmatpush.msra.mxu0 0.0
    %1373 = vmatpush.msra.mxu0 0.0
    %1374 = vmatpush.msra.mxu0 0.0
    %1375 = vmatpush.msra.mxu0 0.0
    %1376 = vmatpush.msra.mxu0 0.0
    %1377 = vmatpush.msra.mxu0 0.0
    %1378 = vmatpush.msra.mxu0 0.0
    %1379 = vmatpush.msra.mxu0 0.0
    %1380 = vmatpush.msra.mxu0 0.0
    %1381 = vmatpush.msra.mxu0 0.0
    %1382 = vmatpush.msra.mxu0 0.0
    %1383 = vmatpush.msra.mxu0 0.0
    %1384 = vmatpush.msra.mxu0 %v1360
    %1385 = vmatpush.msra.mxu0 %v1359
    %1386 = vmatpush.msra.mxu0 %v1358
    %1387 = vmatpush.msra.mxu0 %v1357
    %1388 = vmatmul.f32.gmra.mxu0 %v1367
    %v1389 = vpop.f32.mrf.mxu0
    %v1390 = vadd.f32 %v1364, %v1389
    %1391 = vmatmul.f32.gmra.mxu0 %v1370
    %v1392 = vpop.f32.mrf.mxu0
    %v1393 = vadd.f32 %v1364, %v1392
    %1394 = vdwg.mxu0
    %s1395 = scalar_lea.vmem %s4, 512
    %v1396 = vld [vmem:[%s1395] sm:$0xff]
    %v1397 = vld [vmem:[%s1395 + $0x8] sm:$0xff]
    %v1398 = vld [vmem:[%s1395 + $0x10] sm:$0xff]
    %v1399 = vld [vmem:[%s1395 + $0x18] sm:$0xff]
    %s1400 = scalar_lea.vmem %s5, 16
    %v1401 = vld [vmem:[%s1400] sm:$0x1]
    %v1403 = vperm.slane %v1401, 0
    %1405 = vmatpush.msra.mxu0 0.0
    %1406 = vmatpush.msra.mxu0 0.0
    %1407 = vmatpush.msra.mxu0 0.0
    %1408 = vmatpush.msra.mxu0 0.0
    %1409 = vmatpush.msra.mxu0 0.0
    %1410 = vmatpush.msra.mxu0 0.0
    %1411 = vmatpush.msra.mxu0 0.0
    %1412 = vmatpush.msra.mxu0 0.0
    %1413 = vmatpush.msra.mxu0 0.0
    %1414 = vmatpush.msra.mxu0 0.0
    %1415 = vmatpush.msra.mxu0 0.0
    %1416 = vmatpush.msra.mxu0 0.0
    %1417 = vmatpush.msra.mxu0 %v1399
    %1418 = vmatpush.msra.mxu0 %v1398
    %1419 = vmatpush.msra.mxu0 %v1397
    %1420 = vmatpush.msra.mxu0 %v1396
    %1421 = vmatmul.f32.gmra.mxu0 %v1367
    %v1422 = vpop.f32.mrf.mxu0
    %v1423 = vadd.f32 %v1403, %v1422
    %1424 = vmatmul.f32.gmra.mxu0 %v1370
    %v1425 = vpop.f32.mrf.mxu0
    %v1426 = vadd.f32 %v1403, %v1425
    %1427 = vdwg.mxu0
    %s1428 = scalar_lea.vmem %s4, 640
    %v1429 = vld [vmem:[%s1428] sm:$0xff]
    %v1430 = vld [vmem:[%s1428 + $0x8] sm:$0xff]
    %v1431 = vld [vmem:[%s1428 + $0x10] sm:$0xff]
    %v1432 = vld [vmem:[%s1428 + $0x18] sm:$0xff]
    %s1433 = scalar_lea.vmem %s5, 20
    %v1434 = vld [vmem:[%s1433] sm:$0x1]
    %v1436 = vperm.slane %v1434, 0
    %1438 = vmatpush.msra.mxu0 0.0
    %1439 = vmatpush.msra.mxu0 0.0
    %1440 = vmatpush.msra.mxu0 0.0
    %1441 = vmatpush.msra.mxu0 0.0
    %1442 = vmatpush.msra.mxu0 0.0
    %1443 = vmatpush.msra.mxu0 0.0
    %1444 = vmatpush.msra.mxu0 0.0
    %1445 = vmatpush.msra.mxu0 0.0
    %1446 = vmatpush.msra.mxu0 0.0
    %1447 = vmatpush.msra.mxu0 0.0
    %1448 = vmatpush.msra.mxu0 0.0
    %1449 = vmatpush.msra.mxu0 0.0
    %1450 = vmatpush.msra.mxu0 %v1432
    %1451 = vmatpush.msra.mxu0 %v1431
    %1452 = vmatpush.msra.mxu0 %v1430
    %1453 = vmatpush.msra.mxu0 %v1429
    %1454 = vmatmul.f32.gmra.mxu0 %v1367
    %v1455 = vpop.f32.mrf.mxu0
    %v1456 = vadd.f32 %v1436, %v1455
    %1457 = vmatmul.f32.gmra.mxu0 %v1370
    %v1458 = vpop.f32.mrf.mxu0
    %v1459 = vadd.f32 %v1436, %v1458
    %1460 = vdwg.mxu0
    %v1462 = vsel %vm268, %v1390, 0
    %v1465 = vsel %vm268, %v1393, 0
    %v1468 = vsel %vm268, %v1423, 0
    %v1471 = vsel %vm268, %v1426, 0
    %1473 = vmatpush.xpose.msra.mxu0 0.0
    %1474 = vmatpush.xpose.msra.mxu0 0.0
    %1475 = vmatpush.xpose.msra.mxu0 0.0
    %1476 = vmatpush.xpose.msra.mxu0 0.0
    %1477 = vmatpush.xpose.msra.mxu0 0.0
    %1478 = vmatpush.xpose.msra.mxu0 0.0
    %1479 = vmatpush.xpose.msra.mxu0 0.0
    %1480 = vmatpush.xpose.msra.mxu0 0.0
    %1481 = vmatpush.xpose.msra.mxu0 0.0
    %1482 = vmatpush.xpose.msra.mxu0 0.0
    %1483 = vmatpush.xpose.msra.mxu0 0.0
    %1484 = vmatpush.xpose.msra.mxu0 0.0
    %1485 = vmatpush.xpose.msra.mxu0 0.0
    %1486 = vmatpush.xpose.msra.mxu0 0.0
    %1487 = vmatpush.xpose.msra.mxu0 %v1471
    %1488 = vmatpush.xpose.msra.mxu0 %v1468
    %1489 = vmatmul.f32.gmra.mxu0 %v1462
    %v1490 = vpop.f32.mrf.mxu0
    %v1491 = vadd.f32 0.0, %v1490
    %1492 = vmatmul.f32.gmra.mxu0 %v1465
    %v1493 = vpop.f32.mrf.mxu0
    %v1494 = vadd.f32 0.0, %v1493
    %1495 = vdwg.mxu0
    %v1496 = vsel %vm98, %v1491, -100000.0
    %v1497 = vsel %vm99, %v1494, -100000.0
    %v1498 = vsel %vm306, %v1496, -inf
    %1499 = vmax.xlane.f32.xlu0 %v1498
    %v1500 = vpop.xlane.xlu0 %1499
    %v1501 = vsel %vm306, %v1497, -inf
    %1502 = vmax.xlane.f32.xlu0 %v1501
    %v1503 = vpop.xlane.xlu0 %1502
    %v1504 = vsub.f32 %v1496, %v1500
    %v1505 = vsub.f32 %v1497, %v1503
    %v1506 = vmul.f32 %v1504, 1.442695
    %v1507 = vpow.pop %v1506
    %v1508 = vmul.f32 %v1505, 1.442695
    %v1509 = vpow.pop %v1508
    %v1510 = vsel %vm306, %v1507, 0.0
    %1511 = vadd.xlane.f32.xlu0 %v1510
    %v1512 = vpop.xlane.xlu0 %1511
    %v1513 = vsel %vm306, %v1509, 0.0
    %1514 = vadd.xlane.f32.xlu0 %v1513
    %v1515 = vpop.xlane.xlu0 %1514
    %v1516 = vrcp.pop %v1512
    %v1517 = vmul.f32 %v1512, %v1516
    %v1518 = vsub.f32 1.0, %v1517
    %v1519 = vmul.f32 %v1516, %v1518
    %v1520 = vadd.f32 %v1516, %v1519
    %vm1521 = vweird.f32 %v1512
    %vm1522 = vweird.f32 %v1516
    %vm1523 = vmor %vm1521, %vm1522
    %v1524 = vsel %vm1523, %v1516, %v1520
    %v1525 = vand.u32 2147483647, %v1512
    %vm1526 = vcmp.eq.f32.partialorder %v1525, 8.507059e+37
    %v1527 = vand.u32 %v1512, 2147483648
    %v1528 = vor.u32 1.1754944e-38, %v1527
    %v1529 = vsel %vm1526, %v1528, %v1524
    %v1530 = vmul.f32 %v1507, %v1529
    %v1531 = vrcp.pop %v1515
    %v1532 = vmul.f32 %v1515, %v1531
    %v1533 = vsub.f32 1.0, %v1532
    %v1534 = vmul.f32 %v1531, %v1533
    %v1535 = vadd.f32 %v1531, %v1534
    %vm1536 = vweird.f32 %v1515
    %vm1537 = vweird.f32 %v1531
    %vm1538 = vmor %vm1536, %vm1537
    %v1539 = vsel %vm1538, %v1531, %v1535
    %v1540 = vand.u32 2147483647, %v1515
    %vm1541 = vcmp.eq.f32.partialorder %v1540, 8.507059e+37
    %v1542 = vand.u32 %v1515, 2147483648
    %v1543 = vor.u32 1.1754944e-38, %v1542
    %v1544 = vsel %vm1541, %v1543, %v1539
    %v1545 = vmul.f32 %v1509, %v1544
    %v1547 = vsel %vm306, %v1530, 0
    %v1550 = vsel %vm306, %v1545, 0
    %1552 = vmatpush.msra.mxu0 0.0
    %1553 = vmatpush.msra.mxu0 0.0
    %1554 = vmatpush.msra.mxu0 0.0
    %1555 = vmatpush.msra.mxu0 0.0
    %1556 = vmatpush.msra.mxu0 0.0
    %1557 = vmatpush.msra.mxu0 0.0
    %1558 = vmatpush.msra.mxu0 0.0
    %1559 = vmatpush.msra.mxu0 0.0
    %1560 = vmatpush.msra.mxu0 0.0
    %1561 = vmatpush.msra.mxu0 0.0
    %1562 = vmatpush.msra.mxu0 0.0
    %1563 = vmatpush.msra.mxu0 0.0
    %1564 = vmatpush.msra.mxu0 0.0
    %1565 = vmatpush.msra.mxu0 0.0
    %1566 = vmatpush.msra.mxu0 %v1459
    %1567 = vmatpush.msra.mxu0 %v1456
    %1568 = vmatmul.f32.gmra.mxu0 %v1547
    %v1569 = vpop.f32.mrf.mxu0
    %v1570 = vadd.f32 0.0, %v1569
    %1571 = vmatmul.f32.gmra.mxu0 %v1550
    %v1572 = vpop.f32.mrf.mxu0
    %v1573 = vadd.f32 0.0, %v1572
    %1574 = vdwg.mxu0
    %s1575 = scalar_lea.vmem %s6, 32
    %v1576 = vld [vmem:[%s1575] sm:$0xff]
    %s1577 = scalar_lea.vmem %s4, 416
    %v1578 = vld [vmem:[%s1577] sm:$0xff]
    %v1579 = vld [vmem:[%s1577 + $0x8] sm:$0xff]
    %v1580 = vld [vmem:[%s1577 + $0x10] sm:$0xff]
    %v1581 = vld [vmem:[%s1577 + $0x18] sm:$0xff]
    %s1582 = scalar_lea.vmem %s5, 13
    %v1583 = vld [vmem:[%s1582] sm:$0x1]
    %v1585 = vperm.slane %v1583, 0
    %1587 = vmatpush.msra.mxu0 0.0
    %1588 = vmatpush.msra.mxu0 0.0
    %1589 = vmatpush.msra.mxu0 0.0
    %1590 = vmatpush.msra.mxu0 0.0
    %1591 = vmatpush.msra.mxu0 0.0
    %1592 = vmatpush.msra.mxu0 0.0
    %1593 = vmatpush.msra.mxu0 0.0
    %1594 = vmatpush.msra.mxu0 0.0
    %1595 = vmatpush.msra.mxu0 0.0
    %1596 = vmatpush.msra.mxu0 0.0
    %1597 = vmatpush.msra.mxu0 0.0
    %1598 = vmatpush.msra.mxu0 0.0
    %1599 = vmatpush.msra.mxu0 %v1581
    %1600 = vmatpush.msra.mxu0 %v1580
    %1601 = vmatpush.msra.mxu0 %v1579
    %1602 = vmatpush.msra.mxu0 %v1578
    %1603 = vmatmul.f32.gmra.mxu0 %v1367
    %v1604 = vpop.f32.mrf.mxu0
    %v1605 = vadd.f32 %v1585, %v1604
    %1606 = vmatmul.f32.gmra.mxu0 %v1370
    %v1607 = vpop.f32.mrf.mxu0
    %v1608 = vadd.f32 %v1585, %v1607
    %1609 = vdwg.mxu0
    %s1610 = scalar_lea.vmem %s4, 544
    %v1611 = vld [vmem:[%s1610] sm:$0xff]
    %v1612 = vld [vmem:[%s1610 + $0x8] sm:$0xff]
    %v1613 = vld [vmem:[%s1610 + $0x10] sm:$0xff]
    %v1614 = vld [vmem:[%s1610 + $0x18] sm:$0xff]
    %s1615 = scalar_lea.vmem %s5, 17
    %v1616 = vld [vmem:[%s1615] sm:$0x1]
    %v1618 = vperm.slane %v1616, 0
    %1620 = vmatpush.msra.mxu0 0.0
    %1621 = vmatpush.msra.mxu0 0.0
    %1622 = vmatpush.msra.mxu0 0.0
    %1623 = vmatpush.msra.mxu0 0.0
    %1624 = vmatpush.msra.mxu0 0.0
    %1625 = vmatpush.msra.mxu0 0.0
    %1626 = vmatpush.msra.mxu0 0.0
    %1627 = vmatpush.msra.mxu0 0.0
    %1628 = vmatpush.msra.mxu0 0.0
    %1629 = vmatpush.msra.mxu0 0.0
    %1630 = vmatpush.msra.mxu0 0.0
    %1631 = vmatpush.msra.mxu0 0.0
    %1632 = vmatpush.msra.mxu0 %v1614
    %1633 = vmatpush.msra.mxu0 %v1613
    %1634 = vmatpush.msra.mxu0 %v1612
    %1635 = vmatpush.msra.mxu0 %v1611
    %1636 = vmatmul.f32.gmra.mxu0 %v1367
    %v1637 = vpop.f32.mrf.mxu0
    %v1638 = vadd.f32 %v1618, %v1637
    %1639 = vmatmul.f32.gmra.mxu0 %v1370
    %v1640 = vpop.f32.mrf.mxu0
    %v1641 = vadd.f32 %v1618, %v1640
    %1642 = vdwg.mxu0
    %s1643 = scalar_lea.vmem %s4, 672
    %v1644 = vld [vmem:[%s1643] sm:$0xff]
    %v1645 = vld [vmem:[%s1643 + $0x8] sm:$0xff]
    %v1646 = vld [vmem:[%s1643 + $0x10] sm:$0xff]
    %v1647 = vld [vmem:[%s1643 + $0x18] sm:$0xff]
    %s1648 = scalar_lea.vmem %s5, 21
    %v1649 = vld [vmem:[%s1648] sm:$0x1]
    %v1651 = vperm.slane %v1649, 0
    %1653 = vmatpush.msra.mxu0 0.0
    %1654 = vmatpush.msra.mxu0 0.0
    %1655 = vmatpush.msra.mxu0 0.0
    %1656 = vmatpush.msra.mxu0 0.0
    %1657 = vmatpush.msra.mxu0 0.0
    %1658 = vmatpush.msra.mxu0 0.0
    %1659 = vmatpush.msra.mxu0 0.0
    %1660 = vmatpush.msra.mxu0 0.0
    %1661 = vmatpush.msra.mxu0 0.0
    %1662 = vmatpush.msra.mxu0 0.0
    %1663 = vmatpush.msra.mxu0 0.0
    %1664 = vmatpush.msra.mxu0 0.0
    %1665 = vmatpush.msra.mxu0 %v1647
    %1666 = vmatpush.msra.mxu0 %v1646
    %1667 = vmatpush.msra.mxu0 %v1645
    %1668 = vmatpush.msra.mxu0 %v1644
    %1669 = vmatmul.f32.gmra.mxu0 %v1367
    %v1670 = vpop.f32.mrf.mxu0
    %v1671 = vadd.f32 %v1651, %v1670
    %1672 = vmatmul.f32.gmra.mxu0 %v1370
    %v1673 = vpop.f32.mrf.mxu0
    %v1674 = vadd.f32 %v1651, %v1673
    %1675 = vdwg.mxu0
    %v1677 = vsel %vm268, %v1605, 0
    %v1680 = vsel %vm268, %v1608, 0
    %v1683 = vsel %vm268, %v1638, 0
    %v1686 = vsel %vm268, %v1641, 0
    %1688 = vmatpush.xpose.msra.mxu0 0.0
    %1689 = vmatpush.xpose.msra.mxu0 0.0
    %1690 = vmatpush.xpose.msra.mxu0 0.0
    %1691 = vmatpush.xpose.msra.mxu0 0.0
    %1692 = vmatpush.xpose.msra.mxu0 0.0
    %1693 = vmatpush.xpose.msra.mxu0 0.0
    %1694 = vmatpush.xpose.msra.mxu0 0.0
    %1695 = vmatpush.xpose.msra.mxu0 0.0
    %1696 = vmatpush.xpose.msra.mxu0 0.0
    %1697 = vmatpush.xpose.msra.mxu0 0.0
    %1698 = vmatpush.xpose.msra.mxu0 0.0
    %1699 = vmatpush.xpose.msra.mxu0 0.0
    %1700 = vmatpush.xpose.msra.mxu0 0.0
    %1701 = vmatpush.xpose.msra.mxu0 0.0
    %1702 = vmatpush.xpose.msra.mxu0 %v1686
    %1703 = vmatpush.xpose.msra.mxu0 %v1683
    %1704 = vmatmul.f32.gmra.mxu0 %v1677
    %v1705 = vpop.f32.mrf.mxu0
    %v1706 = vadd.f32 0.0, %v1705
    %1707 = vmatmul.f32.gmra.mxu0 %v1680
    %v1708 = vpop.f32.mrf.mxu0
    %v1709 = vadd.f32 0.0, %v1708
    %1710 = vdwg.mxu0
    %v1711 = vsel %vm98, %v1706, -100000.0
    %v1712 = vsel %vm99, %v1709, -100000.0
    %v1713 = vsel %vm306, %v1711, -inf
    %1714 = vmax.xlane.f32.xlu0 %v1713
    %v1715 = vpop.xlane.xlu0 %1714
    %v1716 = vsel %vm306, %v1712, -inf
    %1717 = vmax.xlane.f32.xlu0 %v1716
    %v1718 = vpop.xlane.xlu0 %1717
    %v1719 = vsub.f32 %v1711, %v1715
    %v1720 = vsub.f32 %v1712, %v1718
    %v1721 = vmul.f32 %v1719, 1.442695
    %v1722 = vpow.pop %v1721
    %v1723 = vmul.f32 %v1720, 1.442695
    %v1724 = vpow.pop %v1723
    %v1725 = vsel %vm306, %v1722, 0.0
    %1726 = vadd.xlane.f32.xlu0 %v1725
    %v1727 = vpop.xlane.xlu0 %1726
    %v1728 = vsel %vm306, %v1724, 0.0
    %1729 = vadd.xlane.f32.xlu0 %v1728
    %v1730 = vpop.xlane.xlu0 %1729
    %v1731 = vrcp.pop %v1727
    %v1732 = vmul.f32 %v1727, %v1731
    %v1733 = vsub.f32 1.0, %v1732
    %v1734 = vmul.f32 %v1731, %v1733
    %v1735 = vadd.f32 %v1731, %v1734
    %vm1736 = vweird.f32 %v1727
    %vm1737 = vweird.f32 %v1731
    %vm1738 = vmor %vm1736, %vm1737
    %v1739 = vsel %vm1738, %v1731, %v1735
    %v1740 = vand.u32 2147483647, %v1727
    %vm1741 = vcmp.eq.f32.partialorder %v1740, 8.507059e+37
    %v1742 = vand.u32 %v1727, 2147483648
    %v1743 = vor.u32 1.1754944e-38, %v1742
    %v1744 = vsel %vm1741, %v1743, %v1739
    %v1745 = vmul.f32 %v1722, %v1744
    %v1746 = vrcp.pop %v1730
    %v1747 = vmul.f32 %v1730, %v1746
    %v1748 = vsub.f32 1.0, %v1747
    %v1749 = vmul.f32 %v1746, %v1748
    %v1750 = vadd.f32 %v1746, %v1749
    %vm1751 = vweird.f32 %v1730
    %vm1752 = vweird.f32 %v1746
    %vm1753 = vmor %vm1751, %vm1752
    %v1754 = vsel %vm1753, %v1746, %v1750
    %v1755 = vand.u32 2147483647, %v1730
    %vm1756 = vcmp.eq.f32.partialorder %v1755, 8.507059e+37
    %v1757 = vand.u32 %v1730, 2147483648
    %v1758 = vor.u32 1.1754944e-38, %v1757
    %v1759 = vsel %vm1756, %v1758, %v1754
    %v1760 = vmul.f32 %v1724, %v1759
    %v1762 = vsel %vm306, %v1745, 0
    %v1765 = vsel %vm306, %v1760, 0
    %1767 = vmatpush.msra.mxu0 0.0
    %1768 = vmatpush.msra.mxu0 0.0
    %1769 = vmatpush.msra.mxu0 0.0
    %1770 = vmatpush.msra.mxu0 0.0
    %1771 = vmatpush.msra.mxu0 0.0
    %1772 = vmatpush.msra.mxu0 0.0
    %1773 = vmatpush.msra.mxu0 0.0
    %1774 = vmatpush.msra.mxu0 0.0
    %1775 = vmatpush.msra.mxu0 0.0
    %1776 = vmatpush.msra.mxu0 0.0
    %1777 = vmatpush.msra.mxu0 0.0
    %1778 = vmatpush.msra.mxu0 0.0
    %1779 = vmatpush.msra.mxu0 0.0
    %1780 = vmatpush.msra.mxu0 0.0
    %1781 = vmatpush.msra.mxu0 %v1674
    %1782 = vmatpush.msra.mxu0 %v1671
    %1783 = vmatmul.f32.gmra.mxu0 %v1762
    %v1784 = vpop.f32.mrf.mxu0
    %v1785 = vadd.f32 0.0, %v1784
    %1786 = vmatmul.f32.gmra.mxu0 %v1765
    %v1787 = vpop.f32.mrf.mxu0
    %v1788 = vadd.f32 0.0, %v1787
    %1789 = vdwg.mxu0
    %s1790 = scalar_lea.vmem %s6, 40
    %v1791 = vld [vmem:[%s1790] sm:$0xff]
    %v1793 = vsel %vm268, %v1785, 0
    %v1796 = vsel %vm268, %v1788, 0
    %1798 = vmatpush.msra.mxu0 0.0
    %1799 = vmatpush.msra.mxu0 0.0
    %1800 = vmatpush.msra.mxu0 0.0
    %1801 = vmatpush.msra.mxu0 0.0
    %1802 = vmatpush.msra.mxu0 0.0
    %1803 = vmatpush.msra.mxu0 0.0
    %1804 = vmatpush.msra.mxu0 0.0
    %1805 = vmatpush.msra.mxu0 0.0
    %1806 = vmatpush.msra.mxu0 0.0
    %1807 = vmatpush.msra.mxu0 0.0
    %1808 = vmatpush.msra.mxu0 0.0
    %1809 = vmatpush.msra.mxu0 0.0
    %1810 = vmatpush.msra.mxu0 0.0
    %1811 = vmatpush.msra.mxu0 0.0
    %1812 = vmatpush.msra.mxu0 0.0
    %1813 = vmatpush.msra.mxu0 %v1791
    %1814 = vmatmul.f32.gmra.mxu0 %v1793
    %v1815 = vpop.f32.mrf.mxu0
    %v1816 = vadd.f32 0.0, %v1815
    %1817 = vmatmul.f32.gmra.mxu0 %v1796
    %v1818 = vpop.f32.mrf.mxu0
    %v1819 = vadd.f32 0.0, %v1818
    %1820 = vdwg.mxu0
    %v1822 = vsel %vm268, %v1570, 0
    %v1825 = vsel %vm268, %v1573, 0
    %1827 = vmatpush.msra.mxu0 0.0
    %1828 = vmatpush.msra.mxu0 0.0
    %1829 = vmatpush.msra.mxu0 0.0
    %1830 = vmatpush.msra.mxu0 0.0
    %1831 = vmatpush.msra.mxu0 0.0
    %1832 = vmatpush.msra.mxu0 0.0
    %1833 = vmatpush.msra.mxu0 0.0
    %1834 = vmatpush.msra.mxu0 0.0
    %1835 = vmatpush.msra.mxu0 0.0
    %1836 = vmatpush.msra.mxu0 0.0
    %1837 = vmatpush.msra.mxu0 0.0
    %1838 = vmatpush.msra.mxu0 0.0
    %1839 = vmatpush.msra.mxu0 0.0
    %1840 = vmatpush.msra.mxu0 0.0
    %1841 = vmatpush.msra.mxu0 0.0
    %1842 = vmatpush.msra.mxu0 %v1576
    %1843 = vmatmul.f32.gmra.mxu0 %v1822
    %v1844 = vpop.f32.mrf.mxu0
    %v1845 = vadd.f32 %v1816, %v1844
    %1846 = vmatmul.f32.gmra.mxu0 %v1825
    %v1847 = vpop.f32.mrf.mxu0
    %v1848 = vadd.f32 %v1819, %v1847
    %1849 = vdwg.mxu0
    %s1850 = scalar_lea.vmem %s4, 448
    %v1851 = vld [vmem:[%s1850] sm:$0xff]
    %v1852 = vld [vmem:[%s1850 + $0x8] sm:$0xff]
    %v1853 = vld [vmem:[%s1850 + $0x10] sm:$0xff]
    %v1854 = vld [vmem:[%s1850 + $0x18] sm:$0xff]
    %s1855 = scalar_lea.vmem %s5, 14
    %v1856 = vld [vmem:[%s1855] sm:$0x1]
    %v1858 = vperm.slane %v1856, 0
    %1860 = vmatpush.msra.mxu0 0.0
    %1861 = vmatpush.msra.mxu0 0.0
    %1862 = vmatpush.msra.mxu0 0.0
    %1863 = vmatpush.msra.mxu0 0.0
    %1864 = vmatpush.msra.mxu0 0.0
    %1865 = vmatpush.msra.mxu0 0.0
    %1866 = vmatpush.msra.mxu0 0.0
    %1867 = vmatpush.msra.mxu0 0.0
    %1868 = vmatpush.msra.mxu0 0.0
    %1869 = vmatpush.msra.mxu0 0.0
    %1870 = vmatpush.msra.mxu0 0.0
    %1871 = vmatpush.msra.mxu0 0.0
    %1872 = vmatpush.msra.mxu0 %v1854
    %1873 = vmatpush.msra.mxu0 %v1853
    %1874 = vmatpush.msra.mxu0 %v1852
    %1875 = vmatpush.msra.mxu0 %v1851
    %1876 = vmatmul.f32.gmra.mxu0 %v1367
    %v1877 = vpop.f32.mrf.mxu0
    %v1878 = vadd.f32 %v1858, %v1877
    %1879 = vmatmul.f32.gmra.mxu0 %v1370
    %v1880 = vpop.f32.mrf.mxu0
    %v1881 = vadd.f32 %v1858, %v1880
    %1882 = vdwg.mxu0
    %s1883 = scalar_lea.vmem %s4, 576
    %v1884 = vld [vmem:[%s1883] sm:$0xff]
    %v1885 = vld [vmem:[%s1883 + $0x8] sm:$0xff]
    %v1886 = vld [vmem:[%s1883 + $0x10] sm:$0xff]
    %v1887 = vld [vmem:[%s1883 + $0x18] sm:$0xff]
    %s1888 = scalar_lea.vmem %s5, 18
    %v1889 = vld [vmem:[%s1888] sm:$0x1]
    %v1891 = vperm.slane %v1889, 0
    %1893 = vmatpush.msra.mxu0 0.0
    %1894 = vmatpush.msra.mxu0 0.0
    %1895 = vmatpush.msra.mxu0 0.0
    %1896 = vmatpush.msra.mxu0 0.0
    %1897 = vmatpush.msra.mxu0 0.0
    %1898 = vmatpush.msra.mxu0 0.0
    %1899 = vmatpush.msra.mxu0 0.0
    %1900 = vmatpush.msra.mxu0 0.0
    %1901 = vmatpush.msra.mxu0 0.0
    %1902 = vmatpush.msra.mxu0 0.0
    %1903 = vmatpush.msra.mxu0 0.0
    %1904 = vmatpush.msra.mxu0 0.0
    %1905 = vmatpush.msra.mxu0 %v1887
    %1906 = vmatpush.msra.mxu0 %v1886
    %1907 = vmatpush.msra.mxu0 %v1885
    %1908 = vmatpush.msra.mxu0 %v1884
    %1909 = vmatmul.f32.gmra.mxu0 %v1367
    %v1910 = vpop.f32.mrf.mxu0
    %v1911 = vadd.f32 %v1891, %v1910
    %1912 = vmatmul.f32.gmra.mxu0 %v1370
    %v1913 = vpop.f32.mrf.mxu0
    %v1914 = vadd.f32 %v1891, %v1913
    %1915 = vdwg.mxu0
    %s1916 = scalar_lea.vmem %s4, 704
    %v1917 = vld [vmem:[%s1916] sm:$0xff]
    %v1918 = vld [vmem:[%s1916 + $0x8] sm:$0xff]
    %v1919 = vld [vmem:[%s1916 + $0x10] sm:$0xff]
    %v1920 = vld [vmem:[%s1916 + $0x18] sm:$0xff]
    %s1921 = scalar_lea.vmem %s5, 22
    %v1922 = vld [vmem:[%s1921] sm:$0x1]
    %v1924 = vperm.slane %v1922, 0
    %1926 = vmatpush.msra.mxu0 0.0
    %1927 = vmatpush.msra.mxu0 0.0
    %1928 = vmatpush.msra.mxu0 0.0
    %1929 = vmatpush.msra.mxu0 0.0
    %1930 = vmatpush.msra.mxu0 0.0
    %1931 = vmatpush.msra.mxu0 0.0
    %1932 = vmatpush.msra.mxu0 0.0
    %1933 = vmatpush.msra.mxu0 0.0
    %1934 = vmatpush.msra.mxu0 0.0
    %1935 = vmatpush.msra.mxu0 0.0
    %1936 = vmatpush.msra.mxu0 0.0
    %1937 = vmatpush.msra.mxu0 0.0
    %1938 = vmatpush.msra.mxu0 %v1920
    %1939 = vmatpush.msra.mxu0 %v1919
    %1940 = vmatpush.msra.mxu0 %v1918
    %1941 = vmatpush.msra.mxu0 %v1917
    %1942 = vmatmul.f32.gmra.mxu0 %v1367
    %v1943 = vpop.f32.mrf.mxu0
    %v1944 = vadd.f32 %v1924, %v1943
    %1945 = vmatmul.f32.gmra.mxu0 %v1370
    %v1946 = vpop.f32.mrf.mxu0
    %v1947 = vadd.f32 %v1924, %v1946
    %1948 = vdwg.mxu0
    %v1950 = vsel %vm268, %v1878, 0
    %v1953 = vsel %vm268, %v1881, 0
    %v1956 = vsel %vm268, %v1911, 0
    %v1959 = vsel %vm268, %v1914, 0
    %1961 = vmatpush.xpose.msra.mxu0 0.0
    %1962 = vmatpush.xpose.msra.mxu0 0.0
    %1963 = vmatpush.xpose.msra.mxu0 0.0
    %1964 = vmatpush.xpose.msra.mxu0 0.0
    %1965 = vmatpush.xpose.msra.mxu0 0.0
    %1966 = vmatpush.xpose.msra.mxu0 0.0
    %1967 = vmatpush.xpose.msra.mxu0 0.0
    %1968 = vmatpush.xpose.msra.mxu0 0.0
    %1969 = vmatpush.xpose.msra.mxu0 0.0
    %1970 = vmatpush.xpose.msra.mxu0 0.0
    %1971 = vmatpush.xpose.msra.mxu0 0.0
    %1972 = vmatpush.xpose.msra.mxu0 0.0
    %1973 = vmatpush.xpose.msra.mxu0 0.0
    %1974 = vmatpush.xpose.msra.mxu0 0.0
    %1975 = vmatpush.xpose.msra.mxu0 %v1959
    %1976 = vmatpush.xpose.msra.mxu0 %v1956
    %1977 = vmatmul.f32.gmra.mxu0 %v1950
    %v1978 = vpop.f32.mrf.mxu0
    %v1979 = vadd.f32 0.0, %v1978
    %1980 = vmatmul.f32.gmra.mxu0 %v1953
    %v1981 = vpop.f32.mrf.mxu0
    %v1982 = vadd.f32 0.0, %v1981
    %1983 = vdwg.mxu0
    %v1984 = vsel %vm98, %v1979, -100000.0
    %v1985 = vsel %vm99, %v1982, -100000.0
    %v1986 = vsel %vm306, %v1984, -inf
    %1987 = vmax.xlane.f32.xlu0 %v1986
    %v1988 = vpop.xlane.xlu0 %1987
    %v1989 = vsel %vm306, %v1985, -inf
    %1990 = vmax.xlane.f32.xlu0 %v1989
    %v1991 = vpop.xlane.xlu0 %1990
    %v1992 = vsub.f32 %v1984, %v1988
    %v1993 = vsub.f32 %v1985, %v1991
    %v1994 = vmul.f32 %v1992, 1.442695
    %v1995 = vpow.pop %v1994
    %v1996 = vmul.f32 %v1993, 1.442695
    %v1997 = vpow.pop %v1996
    %v1998 = vsel %vm306, %v1995, 0.0
    %1999 = vadd.xlane.f32.xlu0 %v1998
    %v2000 = vpop.xlane.xlu0 %1999
    %v2001 = vsel %vm306, %v1997, 0.0
    %2002 = vadd.xlane.f32.xlu0 %v2001
    %v2003 = vpop.xlane.xlu0 %2002
    %v2004 = vrcp.pop %v2000
    %v2005 = vmul.f32 %v2000, %v2004
    %v2006 = vsub.f32 1.0, %v2005
    %v2007 = vmul.f32 %v2004, %v2006
    %v2008 = vadd.f32 %v2004, %v2007
    %vm2009 = vweird.f32 %v2000
    %vm2010 = vweird.f32 %v2004
    %vm2011 = vmor %vm2009, %vm2010
    %v2012 = vsel %vm2011, %v2004, %v2008
    %v2013 = vand.u32 2147483647, %v2000
    %vm2014 = vcmp.eq.f32.partialorder %v2013, 8.507059e+37
    %v2015 = vand.u32 %v2000, 2147483648
    %v2016 = vor.u32 1.1754944e-38, %v2015
    %v2017 = vsel %vm2014, %v2016, %v2012
    %v2018 = vmul.f32 %v1995, %v2017
    %v2019 = vrcp.pop %v2003
    %v2020 = vmul.f32 %v2003, %v2019
    %v2021 = vsub.f32 1.0, %v2020
    %v2022 = vmul.f32 %v2019, %v2021
    %v2023 = vadd.f32 %v2019, %v2022
    %vm2024 = vweird.f32 %v2003
    %vm2025 = vweird.f32 %v2019
    %vm2026 = vmor %vm2024, %vm2025
    %v2027 = vsel %vm2026, %v2019, %v2023
    %v2028 = vand.u32 2147483647, %v2003
    %vm2029 = vcmp.eq.f32.partialorder %v2028, 8.507059e+37
    %v2030 = vand.u32 %v2003, 2147483648
    %v2031 = vor.u32 1.1754944e-38, %v2030
    %v2032 = vsel %vm2029, %v2031, %v2027
    %v2033 = vmul.f32 %v1997, %v2032
    %v2035 = vsel %vm306, %v2018, 0
    %v2038 = vsel %vm306, %v2033, 0
    %2040 = vmatpush.msra.mxu0 0.0
    %2041 = vmatpush.msra.mxu0 0.0
    %2042 = vmatpush.msra.mxu0 0.0
    %2043 = vmatpush.msra.mxu0 0.0
    %2044 = vmatpush.msra.mxu0 0.0
    %2045 = vmatpush.msra.mxu0 0.0
    %2046 = vmatpush.msra.mxu0 0.0
    %2047 = vmatpush.msra.mxu0 0.0
    %2048 = vmatpush.msra.mxu0 0.0
    %2049 = vmatpush.msra.mxu0 0.0
    %2050 = vmatpush.msra.mxu0 0.0
    %2051 = vmatpush.msra.mxu0 0.0
    %2052 = vmatpush.msra.mxu0 0.0
    %2053 = vmatpush.msra.mxu0 0.0
    %2054 = vmatpush.msra.mxu0 %v1947
    %2055 = vmatpush.msra.mxu0 %v1944
    %2056 = vmatmul.f32.gmra.mxu0 %v2035
    %v2057 = vpop.f32.mrf.mxu0
    %v2058 = vadd.f32 0.0, %v2057
    %2059 = vmatmul.f32.gmra.mxu0 %v2038
    %v2060 = vpop.f32.mrf.mxu0
    %v2061 = vadd.f32 0.0, %v2060
    %2062 = vdwg.mxu0
    %s2063 = scalar_lea.vmem %s6, 48
    %v2064 = vld [vmem:[%s2063] sm:$0xff]
    %v2066 = vsel %vm268, %v2058, 0
    %v2069 = vsel %vm268, %v2061, 0
    %2071 = vmatpush.msra.mxu0 0.0
    %2072 = vmatpush.msra.mxu0 0.0
    %2073 = vmatpush.msra.mxu0 0.0
    %2074 = vmatpush.msra.mxu0 0.0
    %2075 = vmatpush.msra.mxu0 0.0
    %2076 = vmatpush.msra.mxu0 0.0
    %2077 = vmatpush.msra.mxu0 0.0
    %2078 = vmatpush.msra.mxu0 0.0
    %2079 = vmatpush.msra.mxu0 0.0
    %2080 = vmatpush.msra.mxu0 0.0
    %2081 = vmatpush.msra.mxu0 0.0
    %2082 = vmatpush.msra.mxu0 0.0
    %2083 = vmatpush.msra.mxu0 0.0
    %2084 = vmatpush.msra.mxu0 0.0
    %2085 = vmatpush.msra.mxu0 0.0
    %2086 = vmatpush.msra.mxu0 %v2064
    %2087 = vmatmul.f32.gmra.mxu0 %v2066
    %v2088 = vpop.f32.mrf.mxu0
    %v2089 = vadd.f32 0.0, %v2088
    %2090 = vmatmul.f32.gmra.mxu0 %v2069
    %v2091 = vpop.f32.mrf.mxu0
    %v2092 = vadd.f32 0.0, %v2091
    %2093 = vdwg.mxu0
    %v2094 = vadd.f32 %v1845, %v2089
    %v2095 = vadd.f32 %v1848, %v2092
    %s2096 = scalar_lea.vmem %s4, 480
    %v2097 = vld [vmem:[%s2096] sm:$0xff]
    %v2098 = vld [vmem:[%s2096 + $0x8] sm:$0xff]
    %v2099 = vld [vmem:[%s2096 + $0x10] sm:$0xff]
    %v2100 = vld [vmem:[%s2096 + $0x18] sm:$0xff]
    %s2101 = scalar_lea.vmem %s5, 15
    %v2102 = vld [vmem:[%s2101] sm:$0x1]
    %v2104 = vperm.slane %v2102, 0
    %2106 = vmatpush.msra.mxu0 0.0
    %2107 = vmatpush.msra.mxu0 0.0
    %2108 = vmatpush.msra.mxu0 0.0
    %2109 = vmatpush.msra.mxu0 0.0
    %2110 = vmatpush.msra.mxu0 0.0
    %2111 = vmatpush.msra.mxu0 0.0
    %2112 = vmatpush.msra.mxu0 0.0
    %2113 = vmatpush.msra.mxu0 0.0
    %2114 = vmatpush.msra.mxu0 0.0
    %2115 = vmatpush.msra.mxu0 0.0
    %2116 = vmatpush.msra.mxu0 0.0
    %2117 = vmatpush.msra.mxu0 0.0
    %2118 = vmatpush.msra.mxu0 %v2100
    %2119 = vmatpush.msra.mxu0 %v2099
    %2120 = vmatpush.msra.mxu0 %v2098
    %2121 = vmatpush.msra.mxu0 %v2097
    %2122 = vmatmul.f32.gmra.mxu0 %v1367
    %v2123 = vpop.f32.mrf.mxu0
    %v2124 = vadd.f32 %v2104, %v2123
    %2125 = vmatmul.f32.gmra.mxu0 %v1370
    %v2126 = vpop.f32.mrf.mxu0
    %v2127 = vadd.f32 %v2104, %v2126
    %2128 = vdwg.mxu0
    %s2129 = scalar_lea.vmem %s4, 608
    %v2130 = vld [vmem:[%s2129] sm:$0xff]
    %v2131 = vld [vmem:[%s2129 + $0x8] sm:$0xff]
    %v2132 = vld [vmem:[%s2129 + $0x10] sm:$0xff]
    %v2133 = vld [vmem:[%s2129 + $0x18] sm:$0xff]
    %s2134 = scalar_lea.vmem %s5, 19
    %v2135 = vld [vmem:[%s2134] sm:$0x1]
    %v2137 = vperm.slane %v2135, 0
    %2139 = vmatpush.msra.mxu0 0.0
    %2140 = vmatpush.msra.mxu0 0.0
    %2141 = vmatpush.msra.mxu0 0.0
    %2142 = vmatpush.msra.mxu0 0.0
    %2143 = vmatpush.msra.mxu0 0.0
    %2144 = vmatpush.msra.mxu0 0.0
    %2145 = vmatpush.msra.mxu0 0.0
    %2146 = vmatpush.msra.mxu0 0.0
    %2147 = vmatpush.msra.mxu0 0.0
    %2148 = vmatpush.msra.mxu0 0.0
    %2149 = vmatpush.msra.mxu0 0.0
    %2150 = vmatpush.msra.mxu0 0.0
    %2151 = vmatpush.msra.mxu0 %v2133
    %2152 = vmatpush.msra.mxu0 %v2132
    %2153 = vmatpush.msra.mxu0 %v2131
    %2154 = vmatpush.msra.mxu0 %v2130
    %2155 = vmatmul.f32.gmra.mxu0 %v1367
    %v2156 = vpop.f32.mrf.mxu0
    %v2157 = vadd.f32 %v2137, %v2156
    %2158 = vmatmul.f32.gmra.mxu0 %v1370
    %v2159 = vpop.f32.mrf.mxu0
    %v2160 = vadd.f32 %v2137, %v2159
    %2161 = vdwg.mxu0
    %s2162 = scalar_lea.vmem %s4, 736
    %v2163 = vld [vmem:[%s2162] sm:$0xff]
    %v2164 = vld [vmem:[%s2162 + $0x8] sm:$0xff]
    %v2165 = vld [vmem:[%s2162 + $0x10] sm:$0xff]
    %v2166 = vld [vmem:[%s2162 + $0x18] sm:$0xff]
    %s2167 = scalar_lea.vmem %s5, 23
    %v2168 = vld [vmem:[%s2167] sm:$0x1]
    %v2170 = vperm.slane %v2168, 0
    %2172 = vmatpush.msra.mxu0 0.0
    %2173 = vmatpush.msra.mxu0 0.0
    %2174 = vmatpush.msra.mxu0 0.0
    %2175 = vmatpush.msra.mxu0 0.0
    %2176 = vmatpush.msra.mxu0 0.0
    %2177 = vmatpush.msra.mxu0 0.0
    %2178 = vmatpush.msra.mxu0 0.0
    %2179 = vmatpush.msra.mxu0 0.0
    %2180 = vmatpush.msra.mxu0 0.0
    %2181 = vmatpush.msra.mxu0 0.0
    %2182 = vmatpush.msra.mxu0 0.0
    %2183 = vmatpush.msra.mxu0 0.0
    %2184 = vmatpush.msra.mxu0 %v2166
    %2185 = vmatpush.msra.mxu0 %v2165
    %2186 = vmatpush.msra.mxu0 %v2164
    %2187 = vmatpush.msra.mxu0 %v2163
    %2188 = vmatmul.f32.gmra.mxu0 %v1367
    %v2189 = vpop.f32.mrf.mxu0
    %v2190 = vadd.f32 %v2170, %v2189
    %2191 = vmatmul.f32.gmra.mxu0 %v1370
    %v2192 = vpop.f32.mrf.mxu0
    %v2193 = vadd.f32 %v2170, %v2192
    %2194 = vdwg.mxu0
    %v2196 = vsel %vm268, %v2124, 0
    %v2199 = vsel %vm268, %v2127, 0
    %v2202 = vsel %vm268, %v2157, 0
    %v2205 = vsel %vm268, %v2160, 0
    %2207 = vmatpush.xpose.msra.mxu0 0.0
    %2208 = vmatpush.xpose.msra.mxu0 0.0
    %2209 = vmatpush.xpose.msra.mxu0 0.0
    %2210 = vmatpush.xpose.msra.mxu0 0.0
    %2211 = vmatpush.xpose.msra.mxu0 0.0
    %2212 = vmatpush.xpose.msra.mxu0 0.0
    %2213 = vmatpush.xpose.msra.mxu0 0.0
    %2214 = vmatpush.xpose.msra.mxu0 0.0
    %2215 = vmatpush.xpose.msra.mxu0 0.0
    %2216 = vmatpush.xpose.msra.mxu0 0.0
    %2217 = vmatpush.xpose.msra.mxu0 0.0
    %2218 = vmatpush.xpose.msra.mxu0 0.0
    %2219 = vmatpush.xpose.msra.mxu0 0.0
    %2220 = vmatpush.xpose.msra.mxu0 0.0
    %2221 = vmatpush.xpose.msra.mxu0 %v2205
    %2222 = vmatpush.xpose.msra.mxu0 %v2202
    %2223 = vmatmul.f32.gmra.mxu0 %v2196
    %v2224 = vpop.f32.mrf.mxu0
    %v2225 = vadd.f32 0.0, %v2224
    %2226 = vmatmul.f32.gmra.mxu0 %v2199
    %v2227 = vpop.f32.mrf.mxu0
    %v2228 = vadd.f32 0.0, %v2227
    %2229 = vdwg.mxu0
    %v2230 = vsel %vm98, %v2225, -100000.0
    %v2231 = vsel %vm99, %v2228, -100000.0
    %v2232 = vsel %vm306, %v2230, -inf
    %2233 = vmax.xlane.f32.xlu0 %v2232
    %v2234 = vpop.xlane.xlu0 %2233
    %v2235 = vsel %vm306, %v2231, -inf
    %2236 = vmax.xlane.f32.xlu0 %v2235
    %v2237 = vpop.xlane.xlu0 %2236
    %v2238 = vsub.f32 %v2230, %v2234
    %v2239 = vsub.f32 %v2231, %v2237
    %v2240 = vmul.f32 %v2238, 1.442695
    %v2241 = vpow.pop %v2240
    %v2242 = vmul.f32 %v2239, 1.442695
    %v2243 = vpow.pop %v2242
    %v2244 = vsel %vm306, %v2241, 0.0
    %2245 = vadd.xlane.f32.xlu0 %v2244
    %v2246 = vpop.xlane.xlu0 %2245
    %v2247 = vsel %vm306, %v2243, 0.0
    %2248 = vadd.xlane.f32.xlu0 %v2247
    %v2249 = vpop.xlane.xlu0 %2248
    %v2250 = vrcp.pop %v2246
    %v2251 = vmul.f32 %v2246, %v2250
    %v2252 = vsub.f32 1.0, %v2251
    %v2253 = vmul.f32 %v2250, %v2252
    %v2254 = vadd.f32 %v2250, %v2253
    %vm2255 = vweird.f32 %v2246
    %vm2256 = vweird.f32 %v2250
    %vm2257 = vmor %vm2255, %vm2256
    %v2258 = vsel %vm2257, %v2250, %v2254
    %v2259 = vand.u32 2147483647, %v2246
    %vm2260 = vcmp.eq.f32.partialorder %v2259, 8.507059e+37
    %v2261 = vand.u32 %v2246, 2147483648
    %v2262 = vor.u32 1.1754944e-38, %v2261
    %v2263 = vsel %vm2260, %v2262, %v2258
    %v2264 = vmul.f32 %v2241, %v2263
    %v2265 = vrcp.pop %v2249
    %v2266 = vmul.f32 %v2249, %v2265
    %v2267 = vsub.f32 1.0, %v2266
    %v2268 = vmul.f32 %v2265, %v2267
    %v2269 = vadd.f32 %v2265, %v2268
    %vm2270 = vweird.f32 %v2249
    %vm2271 = vweird.f32 %v2265
    %vm2272 = vmor %vm2270, %vm2271
    %v2273 = vsel %vm2272, %v2265, %v2269
    %v2274 = vand.u32 2147483647, %v2249
    %vm2275 = vcmp.eq.f32.partialorder %v2274, 8.507059e+37
    %v2276 = vand.u32 %v2249, 2147483648
    %v2277 = vor.u32 1.1754944e-38, %v2276
    %v2278 = vsel %vm2275, %v2277, %v2273
    %v2279 = vmul.f32 %v2243, %v2278
    %v2281 = vsel %vm306, %v2264, 0
    %v2284 = vsel %vm306, %v2279, 0
    %2286 = vmatpush.msra.mxu0 0.0
    %2287 = vmatpush.msra.mxu0 0.0
    %2288 = vmatpush.msra.mxu0 0.0
    %2289 = vmatpush.msra.mxu0 0.0
    %2290 = vmatpush.msra.mxu0 0.0
    %2291 = vmatpush.msra.mxu0 0.0
    %2292 = vmatpush.msra.mxu0 0.0
    %2293 = vmatpush.msra.mxu0 0.0
    %2294 = vmatpush.msra.mxu0 0.0
    %2295 = vmatpush.msra.mxu0 0.0
    %2296 = vmatpush.msra.mxu0 0.0
    %2297 = vmatpush.msra.mxu0 0.0
    %2298 = vmatpush.msra.mxu0 0.0
    %2299 = vmatpush.msra.mxu0 0.0
    %2300 = vmatpush.msra.mxu0 %v2193
    %2301 = vmatpush.msra.mxu0 %v2190
    %2302 = vmatmul.f32.gmra.mxu0 %v2281
    %v2303 = vpop.f32.mrf.mxu0
    %v2304 = vadd.f32 0.0, %v2303
    %2305 = vmatmul.f32.gmra.mxu0 %v2284
    %v2306 = vpop.f32.mrf.mxu0
    %v2307 = vadd.f32 0.0, %v2306
    %2308 = vdwg.mxu0
    %s2309 = scalar_lea.vmem %s6, 56
    %v2310 = vld [vmem:[%s2309] sm:$0xff]
    %v2312 = vsel %vm268, %v2304, 0
    %v2315 = vsel %vm268, %v2307, 0
    %2317 = vmatpush.msra.mxu0 0.0
    %2318 = vmatpush.msra.mxu0 0.0
    %2319 = vmatpush.msra.mxu0 0.0
    %2320 = vmatpush.msra.mxu0 0.0
    %2321 = vmatpush.msra.mxu0 0.0
    %2322 = vmatpush.msra.mxu0 0.0
    %2323 = vmatpush.msra.mxu0 0.0
    %2324 = vmatpush.msra.mxu0 0.0
    %2325 = vmatpush.msra.mxu0 0.0
    %2326 = vmatpush.msra.mxu0 0.0
    %2327 = vmatpush.msra.mxu0 0.0
    %2328 = vmatpush.msra.mxu0 0.0
    %2329 = vmatpush.msra.mxu0 0.0
    %2330 = vmatpush.msra.mxu0 0.0
    %2331 = vmatpush.msra.mxu0 0.0
    %2332 = vmatpush.msra.mxu0 %v2310
    %2333 = vmatmul.f32.gmra.mxu0 %v2312
    %v2334 = vpop.f32.mrf.mxu0
    %v2335 = vadd.f32 0.0, %v2334
    %2336 = vmatmul.f32.gmra.mxu0 %v2315
    %v2337 = vpop.f32.mrf.mxu0
    %v2338 = vadd.f32 0.0, %v2337
    %2339 = vdwg.mxu0
    %v2340 = vadd.f32 %v2094, %v2335
    %v2341 = vadd.f32 %v2095, %v2338
    %s2342 = scalar_lea.vmem %s7, 8
    %v2343 = vld [vmem:[%s2342] sm:$0x1]
    %v2345 = vperm.slane %v2343, 0
    %v2347 = vadd.f32 %v2340, %v2345
    %v2348 = vadd.f32 %v2341, %v2345
    %s2349 = scalar_lea.vmem %s7, 9
    %v2350 = vld [vmem:[%s2349] sm:$0x1]
    %s2351 = scalar_lea.vmem %s7, 10
    %v2352 = vld [vmem:[%s2351] sm:$0x1]
    %v2353 = vsel %vm103, %v2347, 0.0
    %2354 = vadd.xlane.f32.xlu0 %v2353
    %v2355 = vpop.xlane.xlu0 %2354
    %v2356 = vsel %vm103, %v2348, 0.0
    %2357 = vadd.xlane.f32.xlu0 %v2356
    %v2358 = vpop.xlane.xlu0 %2357
    %v2359 = vmul.f32 %v2355, %v116
    %v2360 = vmul.f32 %v2358, %v116
    %v2361 = vsub.f32 %v2347, %v2359
    %v2362 = vsub.f32 %v2348, %v2360
    %v2363 = vmul.f32 %v2361, %v2361
    %v2364 = vmul.f32 %v2362, %v2362
    %v2365 = vsel %vm103, %v2363, 0.0
    %2366 = vadd.xlane.f32.xlu0 %v2365
    %v2367 = vpop.xlane.xlu0 %2366
    %v2368 = vsel %vm103, %v2364, 0.0
    %2369 = vadd.xlane.f32.xlu0 %v2368
    %v2370 = vpop.xlane.xlu0 %2369
    %v2371 = vmul.f32 %v2367, %v116
    %v2372 = vmul.f32 %v2370, %v116
    %v2373 = vadd.f32 %v2371, 1e-05
    %v2374 = vadd.f32 %v2372, 1e-05
    %v2375 = vrsqrt.pop %v2373
    %v2376 = vmul.f32 %v2375, %v2373
    %v2377 = vmul.f32 %v2376, %v2375
    %v2378 = vmul.f32 0.5, %v2377
    %v2379 = vsub.f32 1.5, %v2378
    %v2380 = vmul.f32 %v2375, %v2379
    %vm2381 = vweird.f32 %v2373
    %vm2382 = vweird.f32 %v2375
    %vm2383 = vmor %vm2381, %vm2382
    %v2384 = vsel %vm2383, %v2375, %v2380
    %v2385 = vrsqrt.pop %v2374
    %v2386 = vmul.f32 %v2385, %v2374
    %v2387 = vmul.f32 %v2386, %v2385
    %v2388 = vmul.f32 0.5, %v2387
    %v2389 = vsub.f32 1.5, %v2388
    %v2390 = vmul.f32 %v2385, %v2389
    %vm2391 = vweird.f32 %v2374
    %vm2392 = vweird.f32 %v2385
    %vm2393 = vmor %vm2391, %vm2392
    %v2394 = vsel %vm2393, %v2385, %v2390
    %v2395 = vmul.f32 %v2361, %v2384
    %v2396 = vmul.f32 %v2362, %v2394
    %v2398 = vperm.slane %v2350, 0
    %v2400 = vmul.f32 %v2395, %v2398
    %v2401 = vmul.f32 %v2396, %v2398
    %v2403 = vperm.slane %v2352, 0
    %v2405 = vadd.f32 %v2400, %v2403
    %v2406 = vadd.f32 %v2401, %v2403
    %s2407 = scalar_lea.vmem %s8, 32
    %v2408 = vld [vmem:[%s2407] sm:$0xff]
    %v2409 = vld [vmem:[%s2407 + $0x8] sm:$0xff]
    %v2410 = vld [vmem:[%s2407 + $0x10] sm:$0xff]
    %v2411 = vld [vmem:[%s2407 + $0x18] sm:$0xff]
    %s2412 = scalar_lea.vmem %s9, 1
    %v2413 = vld [vmem:[%s2412] sm:$0x1]
    %v2415 = vperm.slane %v2413, 0
    %v2418 = vsel %vm103, %v2405, 0
    %v2421 = vsel %vm103, %v2406, 0
    %2423 = vmatpush.msra.mxu0 0.0
    %2424 = vmatpush.msra.mxu0 0.0
    %2425 = vmatpush.msra.mxu0 0.0
    %2426 = vmatpush.msra.mxu0 0.0
    %2427 = vmatpush.msra.mxu0 0.0
    %2428 = vmatpush.msra.mxu0 0.0
    %2429 = vmatpush.msra.mxu0 0.0
    %2430 = vmatpush.msra.mxu0 0.0
    %2431 = vmatpush.msra.mxu0 0.0
    %2432 = vmatpush.msra.mxu0 0.0
    %2433 = vmatpush.msra.mxu0 0.0
    %2434 = vmatpush.msra.mxu0 0.0
    %2435 = vmatpush.msra.mxu0 %v2411
    %2436 = vmatpush.msra.mxu0 %v2410
    %2437 = vmatpush.msra.mxu0 %v2409
    %2438 = vmatpush.msra.mxu0 %v2408
    %2439 = vmatmul.f32.gmra.mxu0 %v2418
    %v2440 = vpop.f32.mrf.mxu0
    %v2441 = vadd.f32 %v2415, %v2440
    %2442 = vmatmul.f32.gmra.mxu0 %v2421
    %v2443 = vpop.f32.mrf.mxu0
    %v2444 = vadd.f32 %v2415, %v2443
    %2445 = vdwg.mxu0
    %v2446 = vmax.f32 %v2441, 0.0
    %v2447 = vmax.f32 %v2444, 0.0
    %s2448 = scalar_lea.vmem %s10, 64
    %v2449 = vld [vmem:[%s2448] sm:$0xff]
    %v2450 = vld [vmem:[%s2448 + $0x8] sm:$0xff]
    %v2451 = vld [vmem:[%s2448 + $0x10] sm:$0xff]
    %v2452 = vld [vmem:[%s2448 + $0x18] sm:$0xff]
    %v2453 = vld [vmem:[%s2448 + $0x20] sm:$0xff]
    %v2454 = vld [vmem:[%s2448 + $0x28] sm:$0xff]
    %v2455 = vld [vmem:[%s2448 + $0x30] sm:$0xff]
    %v2456 = vld [vmem:[%s2448 + $0x38] sm:$0xff]
    %s2457 = scalar_lea.vmem %s7, 11
    %v2458 = vld [vmem:[%s2457] sm:$0x1]
    %v2460 = vperm.slane %v2458, 0
    %v2463 = vsel %vm66, %v2446, 0
    %v2466 = vsel %vm66, %v2447, 0
    %2468 = vmatpush.msra.mxu0 0.0
    %2469 = vmatpush.msra.mxu0 0.0
    %2470 = vmatpush.msra.mxu0 0.0
    %2471 = vmatpush.msra.mxu0 0.0
    %2472 = vmatpush.msra.mxu0 0.0
    %2473 = vmatpush.msra.mxu0 0.0
    %2474 = vmatpush.msra.mxu0 0.0
    %2475 = vmatpush.msra.mxu0 0.0
    %2476 = vmatpush.msra.mxu0 %v2456
    %2477 = vmatpush.msra.mxu0 %v2455
    %2478 = vmatpush.msra.mxu0 %v2454
    %2479 = vmatpush.msra.mxu0 %v2453
    %2480 = vmatpush.msra.mxu0 %v2452
    %2481 = vmatpush.msra.mxu0 %v2451
    %2482 = vmatpush.msra.mxu0 %v2450
    %2483 = vmatpush.msra.mxu0 %v2449
    %2484 = vmatmul.f32.gmra.mxu0 %v2463
    %v2485 = vpop.f32.mrf.mxu0
    %v2486 = vadd.f32 %v2460, %v2485
    %2487 = vmatmul.f32.gmra.mxu0 %v2466
    %v2488 = vpop.f32.mrf.mxu0
    %v2489 = vadd.f32 %v2460, %v2488
    %2490 = vdwg.mxu0
    %v2491 = vadd.f32 %v1296, %v2486
    %v2492 = vadd.f32 %v1297, %v2489
    %v2493 = vld [vmem:[%s11] sm:$0xff]
    %v2494 = vld [vmem:[%s11 + $0x8] sm:$0xff]
    %v2495 = vld [vmem:[%s11 + $0x10] sm:$0xff]
    %v2496 = vld [vmem:[%s11 + $0x18] sm:$0xff]
    %s2497 = scalar_lea.vmem %s9, 2
    %v2498 = vld [vmem:[%s2497] sm:$0x1]
    %v2500 = vperm.slane %v2498, 0
    %v2503 = vsel %vm103, %v2491, 0
    %v2506 = vsel %vm103, %v2492, 0
    %2508 = vmatpush.msra.mxu0 0.0
    %2509 = vmatpush.msra.mxu0 0.0
    %2510 = vmatpush.msra.mxu0 0.0
    %2511 = vmatpush.msra.mxu0 0.0
    %2512 = vmatpush.msra.mxu0 0.0
    %2513 = vmatpush.msra.mxu0 0.0
    %2514 = vmatpush.msra.mxu0 0.0
    %2515 = vmatpush.msra.mxu0 0.0
    %2516 = vmatpush.msra.mxu0 0.0
    %2517 = vmatpush.msra.mxu0 0.0
    %2518 = vmatpush.msra.mxu0 0.0
    %2519 = vmatpush.msra.mxu0 0.0
    %2520 = vmatpush.msra.mxu0 %v2496
    %2521 = vmatpush.msra.mxu0 %v2495
    %2522 = vmatpush.msra.mxu0 %v2494
    %2523 = vmatpush.msra.mxu0 %v2493
    %2524 = vmatmul.f32.gmra.mxu0 %v2503
    %v2525 = vpop.f32.mrf.mxu0
    %v2526 = vadd.f32 %v2500, %v2525
    %2527 = vmatmul.f32.gmra.mxu0 %v2506
    %v2528 = vpop.f32.mrf.mxu0
    %v2529 = vadd.f32 %v2500, %v2528
    %2530 = vdwg.mxu0
    %2531 = vst.msk [vmem:[#allocation2] sm:$0xff] %vm66, %v2526
    %2532 = vst.msk [vmem:[#allocation2 + $0x8] sm:$0xff] %vm66, %v2529
    // Predicated region
    $region50: #{transformer_forward.1} parent=1 // pred_check
      _
    $region51: #{transformer_forward.1} parent=1 // pred_check_branch
      %2534 = sbr.rel (0) target = $region53
    $region52: #{transformer_forward.1} parent=1 // pred_region
      %2536 = vsyncadd [#allocation3], 0
      %s2537 = sshll.u32 [#allocation2], 4
      %s2538 = int_to_ptr.vmem [resolvable:$true] %s2537
      %s2539 = sshll.u32 %s12, 4
      %s2540 = int_to_ptr.hbm [resolvable:$true] %s2539
      %2545 = dma.vmem_to_hbm [thread:$0]  %s2538, 256, %s2540, [#allocation3], 128, 128, 8
    $region53: #{transformer_forward.1} parent=1 // pred_fallthru
      _
    // Predicated region
    $region54: #{transformer_forward.1} parent=1 // pred_check
      _
    $region55: #{transformer_forward.1} parent=1 // pred_check_branch
      %2547 = sbr.rel (0) target = $region57
    $region56: #{transformer_forward.1} parent=1 // pred_region
      %2549 = dma.done [#allocation3], 256
    $region57: #{transformer_forward.1} parent=1 // pred_fallthru
      _
    %2550 = vsyncpa [#allocation3], 1

</llo_original>
